<compile_context>
chip_gen: v7x
topology: tpu7x:2x2x1
jax: 0.10.0
libtpu: 0.0.40
codegen_flags: <defaults>
</compile_context>

<pallas_src>
import functools

import jax
import jax.numpy as jnp
from jax.experimental import pallas as pl
from jax.experimental.pallas import tpu as pltpu


def _round_up(x, m):
    return (x + m - 1) // m * m


# ----------------------------------------------------------------------------
# Pallas kernels
# ----------------------------------------------------------------------------
def _stem_matmul_kernel(a_ref, w_ref, b_ref, o_ref):
    """Single-K-block matmul + bias + ReLU (stem 7x7 conv on im2col patches)."""
    acc = jnp.dot(a_ref[...], w_ref[...], preferred_element_type=jnp.float32)
    o_ref[...] = jnp.maximum(acc + b_ref[...], 0.0).astype(o_ref.dtype)


def _basic_block_kernel(x2_ref, w1_ref, b1_ref, w2_ref, b2_ref, o_ref,
                        hflat_ref, *, wp2, rows1, r2, tr, oh, ow, num_tiles):
    """Fused ResNet BasicBlock tile: conv3x3+BN+ReLU, conv3x3+BN, +id, ReLU.

    x2_ref : (rows_in, C) bf16 -- one row tile (tr spatial rows + halo) of the
             zero-padded (by 2) feature map, flattened row-major at padded
             width wp2 = OW + 4, so conv tap (di, dj) is the contiguous row
             range starting at di*wp2 + dj.
    w1/w2  : (576, C) bf16 -- BN-folded conv weights, K-stacked tap-major.
    b1/b2  : (1, C) f32    -- BN-folded conv biases.
    o_ref  : (r2, C) bf16  -- tile output in the padded-width flat layout
             (columns >= OW of each spatial row are garbage, cropped outside).
    hflat_ref : VMEM scratch for the padded conv1 output (never hits HBM).
    """
    t = pl.program_id(1)
    c = o_ref.shape[-1]
    hdtype = hflat_ref.dtype

    # Only the small tail past rows1 is read-without-write (by the garbage
    # columns of the last conv2 rows); zero just that, not the whole scratch.
    hflat_ref[rows1:, :] = jnp.zeros((hflat_ref.shape[0] - rows1, c), hdtype)

    # ---- conv1 + BN + ReLU on conv2's padded-input grid (rows1 flat rows) ----
    # K-stack the 9 taps along the contraction dim: one (rows1,576)x(576,64)
    # MXU matmul instead of nine K=64 matmuls.
    slab1 = jnp.concatenate(
        [x2_ref[di * wp2 + dj: di * wp2 + dj + rows1, :]
         for di in range(3) for dj in range(3)], axis=1)            # (rows1, 9C)
    h = jnp.dot(slab1, w1_ref[...], preferred_element_type=jnp.float32)
    h = jnp.maximum(h + b1_ref[...], 0.0)
    hflat_ref[0:rows1, :] = h.astype(hdtype)

    # ---- restore conv2's zero-padding ring inside hflat (no mask input) ------
    # Per spatial row i the flat positions [i*wp2+ow+1, i*wp2+ow+5) hold
    # {right pad col, 2 garbage cols, next row's left pad col}: one contiguous
    # 4-row zero store per row.  Row 0's left pad col handled separately.
    zrow = jnp.zeros((1, c), hdtype)
    zrow4 = jnp.zeros((4, c), hdtype)
    hflat_ref[0:1, :] = zrow
    for i in range(tr + 2):
        off = i * wp2 + ow + 1
        hflat_ref[off:off + 4, :] = zrow4

    @pl.when(t == 0)                       # top padding row (first tile only)
    def _():
        hflat_ref[0:wp2, :] = jnp.zeros((wp2, c), hdtype)

    bot = oh + 1 - (num_tiles - 1) * tr    # bottom padding row (last tile only)
    @pl.when(t == num_tiles - 1)
    def _():
        hflat_ref[bot * wp2:(bot + 1) * wp2, :] = jnp.zeros((wp2, c), hdtype)

    # ---- conv2 + BN + residual + ReLU (intermediate read from VMEM) ----------
    slab2 = jnp.concatenate(
        [hflat_ref[di * wp2 + dj: di * wp2 + dj + r2, :]
         for di in range(3) for dj in range(3)], axis=1)            # (r2, 9C)
    acc2 = jnp.dot(slab2, w2_ref[...], preferred_element_type=jnp.float32)
    identity = x2_ref[2 * wp2 + 2: 2 * wp2 + 2 + r2, :].astype(jnp.float32)
    out = jnp.maximum(acc2 + b2_ref[...] + identity, 0.0)
    # bf16 output halves HBM writeback.
    # TODO(synk): pack two flat rows per 128-lane output row for dense stores.
    o_ref[...] = out.astype(o_ref.dtype)


# ----------------------------------------------------------------------------
# Pallas wrappers
# ----------------------------------------------------------------------------
def pallas_stem_conv(patches_bf16, w_bf16, bias_f32, tm=512):
    """act( patches @ w + bias ), single K block, bf16 MXU, bf16 out.

    tm=512 default (per tile-sweep data ~85% of HBM roofline vs ~29% at 128);
    per-block VMEM at tm=512 is well under 1 MiB.
    """
    m, k = patches_bf16.shape
    cout = w_bf16.shape[1]
    tm = min(tm, _round_up(m, 8))
    mp = _round_up(m, tm)
    if mp != m:
        patches_bf16 = jnp.pad(patches_bf16, ((0, mp - m), (0, 0)))

    out = pl.pallas_call(
        _stem_matmul_kernel,
        out_shape=jax.ShapeDtypeStruct((mp, cout), jnp.bfloat16),
        grid_spec=pltpu.PrefetchScalarGridSpec(
            num_scalar_prefetch=0,
            grid=(mp // tm,),
            in_specs=[
                pl.BlockSpec((tm, k), lambda i: (i, 0)),
                pl.BlockSpec((k, cout), lambda i: (0, 0)),
                pl.BlockSpec((1, cout), lambda i: (0, 0)),
            ],
            out_specs=pl.BlockSpec((tm, cout), lambda i: (i, 0)),
        ),
        compiler_params=pltpu.CompilerParams(
            dimension_semantics=("parallel",),
            vmem_limit_bytes=48 * 1024 * 1024),
    )(patches_bf16, w_bf16, bias_f32)
    return out[:m]


def pallas_basic_block(pooled_nhwc_bf16, conv1_params, conv2_params,
                       row_tile=32):
    """Fused BasicBlock(64->64) on an NHWC bf16 map, row-tiled spatially.

    row_tile is the per-generation tile knob: 32 keeps per-step VMEM ~15 MiB
    at 128x128 maps (fits v7x's 64 MiB / 32 MiB scoped default with headroom);
    v5e/v6e (128 MiB VMEM) can use 64.
    """
    n, oh, ow, c = pooled_nhwc_bf16.shape
    tr = max(1, min(row_tile, oh))
    num_tiles = pl.cdiv(oh, tr)
    oh_pad = num_tiles * tr
    wp2 = ow + 4                          # padded row width of the flat layout
    rows1 = (tr + 2) * wp2                # conv1 rows (conv2's padded grid)
    r2 = tr * wp2                         # conv2 rows (cols >= OW are garbage)
    rows_in = _round_up((tr + 4) * wp2 + 2, 8)   # +2: last-tap garbage reads

    # Zero-pad (+2 conv ring, bottom rows up to the tile grid), build the
    # overlapping row tiles (4-row halo) and flatten row-major at width wp2 so
    # every conv tap is a contiguous row shift inside the kernel.
    x2 = jnp.pad(pooled_nhwc_bf16,
                 ((0, 0), (2, 2 + (oh_pad - oh)), (2, 2), (0, 0)))
    x2t = jnp.stack([x2[:, t * tr: t * tr + tr + 4] for t in range(num_tiles)],
                    axis=1)                                # (n, T, tr+4, wp2, c)
    x2t = x2t.reshape(n, num_tiles, (tr + 4) * wp2, c)
    x2t = jnp.pad(x2t, ((0, 0), (0, 0), (0, rows_in - (tr + 4) * wp2), (0, 0)))

    w1, b1 = conv1_params                 # (576, C) bf16, (1, C) f32
    w2, b2 = conv2_params

    scr_rows = _round_up(rows1 + 2, 8)
    kernel = functools.partial(_basic_block_kernel, wp2=wp2, rows1=rows1,
                               r2=r2, tr=tr, oh=oh, ow=ow, num_tiles=num_tiles)
    out = pl.pallas_call(
        kernel,
        out_shape=jax.ShapeDtypeStruct((n, num_tiles, r2, c), jnp.bfloat16),
        grid_spec=pltpu.PrefetchScalarGridSpec(
            num_scalar_prefetch=0,
            grid=(n, num_tiles),
            in_specs=[
                pl.BlockSpec((None, None, rows_in, c), lambda b, t: (b, t, 0, 0)),
                pl.BlockSpec((9 * c, c), lambda b, t: (0, 0)),
                pl.BlockSpec((1, c), lambda b, t: (0, 0)),
                pl.BlockSpec((9 * c, c), lambda b, t: (0, 0)),
                pl.BlockSpec((1, c), lambda b, t: (0, 0)),
            ],
            out_specs=pl.BlockSpec((None, None, r2, c), lambda b, t: (b, t, 0, 0)),
            scratch_shapes=[pltpu.VMEM((scr_rows, c), jnp.bfloat16)],
        ),
        compiler_params=pltpu.CompilerParams(
            dimension_semantics=("parallel", "parallel"),
            vmem_limit_bytes=48 * 1024 * 1024),
    )(x2t, w1, b1, w2, b2)

    # Drop padded-width garbage columns and padded rows, restore (N, OH, OW, C).
    out = out.reshape(n, oh_pad, wp2, c)[:, :oh, :ow, :]
    return out


# ----------------------------------------------------------------------------
# XLA-side glue
# ----------------------------------------------------------------------------
def _im2col(x_nhwc, kh, kw, stride, pad):
    n, h, w, c = x_nhwc.shape
    x = jnp.pad(x_nhwc, ((0, 0), (pad, pad), (pad, pad), (0, 0)))
    oh = (h + 2 * pad - kh) // stride + 1
    ow = (w + 2 * pad - kw) // stride + 1
    cols = []
    for i in range(kh):
        for j in range(kw):
            cols.append(x[:, i:i + stride * oh:stride,
                          j:j + stride * ow:stride, :])
    patches = jnp.stack(cols, axis=3)            # (N, OH, OW, kh*kw, C)
    return patches.reshape(n * oh * ow, kh * kw * c), n, oh, ow


# ----------------------------------------------------------------------------
# Parameters (deterministic in-script init, BN folded into conv weight/bias)
# ----------------------------------------------------------------------------
def _fold_bn_conv(key, cout, cin, kh, kw, eps=1e-5):
    kw_, kg, kb = jax.random.split(key, 3)
    # PyTorch conv weight layout (Cout, Cin, kh, kw), BN(gamma, beta, mean, var).
    w = jax.random.normal(kw_, (cout, cin, kh, kw), jnp.float32) * 0.05
    gamma = 1.0 + 0.1 * jax.random.normal(kg, (cout,), jnp.float32)
    beta = 0.1 * jax.random.normal(kb, (cout,), jnp.float32)
    mean = jnp.zeros((cout,), jnp.float32)
    var = jnp.ones((cout,), jnp.float32)
    scale = gamma / jnp.sqrt(var + eps)
    w_folded = (w * scale[:, None, None, None]).transpose(2, 3, 1, 0)  # (kh,kw,Cin,Cout)
    b_folded = (beta - mean * scale).reshape(1, cout)
    return w_folded, b_folded


def init_backbone_params(model_name='resnet34'):
    del model_name  # resnet34-style stem + first BasicBlock
    # TODO(synk): remaining ResNet34 stages (layer1 blocks 2-3, layers 2-4) of
    # the original Backbone are not implemented.
    k = jax.random.PRNGKey(42)
    k1, k2, k3 = jax.random.split(k, 3)
    w_stem, b_stem = _fold_bn_conv(k1, 64, 3, 7, 7)      # 7x7 s2 p3, 3 -> 64
    w_b1, b_b1 = _fold_bn_conv(k2, 64, 64, 3, 3)
    w_b2, b_b2 = _fold_bn_conv(k3, 64, 64, 3, 3)
    params = {
        'conv1': (w_stem.reshape(7 * 7 * 3, 64).astype(jnp.bfloat16), b_stem),
        # K-stacked tap-major layout (tap*64 + cin, cout) for the fused block.
        'block_conv1': (w_b1.reshape(9 * 64, 64).astype(jnp.bfloat16), b_b1),
        'block_conv2': (w_b2.reshape(9 * 64, 64).astype(jnp.bfloat16), b_b2),
    }
    return params


# ----------------------------------------------------------------------------
# Backbone / ImageEncoder forward
# ----------------------------------------------------------------------------
def backbone_forward(params, image_nchw):
    # NHWC, bf16 activations end-to-end (halves the 49x-amplified im2col traffic).
    x = jnp.transpose(image_nchw, (0, 2, 3, 1)).astype(jnp.bfloat16)

    # stem: conv 7x7 s2 p3 + BN + ReLU (im2col in XLA, matmul+bias+ReLU in Pallas)
    w, b = params['conv1']
    patches, n, oh, ow = _im2col(x, 7, 7, stride=2, pad=3)
    y = pallas_stem_conv(patches, w, b)                             # (M, 64) bf16
    x = y.reshape(n, oh, ow, 64)

    # maxpool 3x3 s2 p1: one fused reduce_window pass (no (9, M, C) stack).
    # TODO(synk): fuse the max-pool + pad/flatten into the BasicBlock prologue
    # (manual DMA of stem-output row strips) to drop the remaining HBM passes.
    x = jax.lax.reduce_window(
        x, jnp.array(-jnp.inf, dtype=x.dtype), jax.lax.max,
        window_dimensions=(1, 3, 3, 1), window_strides=(1, 2, 2, 1),
        padding=((0, 0), (1, 1), (1, 1), (0, 0)))

    # BasicBlock(64 -> 64): conv-BN-ReLU, conv-BN, +identity, ReLU -- fully fused.
    fmap = pallas_basic_block(x, params['block_conv1'], params['block_conv2'])

    # back to NCHW, f32 like the PyTorch module.
    return jnp.transpose(fmap, (0, 3, 1, 2)).astype(jnp.float32)


def image_encoder_forward(params, image):
    """ImageEncoder.forward: returns {'fmap': backbone(image)}."""
    if image.ndim == 3:
        image = image[None]                    # image.unsqueeze(0)
    return {'fmap': backbone_forward(params, image)}


# ----------------------------------------------------------------------------
if __name__ == "__main__":
    key = jax.random.PRNGKey(0)
    image = jax.random.normal(key, (2, 3, 32, 32), jnp.float32)  # NCHW

    params = init_backbone_params('resnet34')
    out = jax.jit(image_encoder_forward)(params, image)
    fmap = jax.block_until_ready(out['fmap'])

    assert fmap.shape == (2, 64, 8, 8), fmap.shape
    assert jnp.all(jnp.isfinite(fmap))
    print("KERNEL_OK")
</pallas_src>

<mosaic_0001>
module attributes {stable_mosaic.version = 11 : i64} {
  func.func @_stem_matmul_kernel(%arg0: i32, %arg1: memref<512x147xbf16, #tpu.memory_space<vmem>>, %arg2: memref<147x64xbf16, #tpu.memory_space<vmem>>, %arg3: memref<1x64xf32, #tpu.memory_space<vmem>>, %arg4: memref<512x64xbf16, #tpu.memory_space<vmem>>) attributes {dimension_semantics = [#tpu.dimension_semantics<parallel>], iteration_bounds = array<i64: 1>, scalar_prefetch = 0 : i64, scratch_operands = 0 : i64, tpu.core_type = #tpu.core_type<tc>, window_params = [{transform_indices = @transform_0, window_bounds = array<i64: 512, 147>}, {pipeline_mode = #tpu.pipeline_mode<synchronous>, transform_indices = @transform_1, window_bounds = array<i64: 147, 64>}, {pipeline_mode = #tpu.pipeline_mode<synchronous>, transform_indices = @transform_2, window_bounds = array<i64: 1, 64>}, {transform_indices = @transform_3, window_bounds = array<i64: 512, 64>}]} {
    %c0 = arith.constant 0 : index
    %c0_0 = arith.constant 0 : index
    %0 = vector.load %arg1[%c0, %c0_0] : memref<512x147xbf16, #tpu.memory_space<vmem>>, vector<512x147xbf16>
    %c0_1 = arith.constant 0 : index
    %c0_2 = arith.constant 0 : index
    %1 = vector.load %arg2[%c0_1, %c0_2] : memref<147x64xbf16, #tpu.memory_space<vmem>>, vector<147x64xbf16>
    %cst = arith.constant dense<0.000000e+00> : vector<512x64xf32>
    %2 = tpu.matmul %0, %1, %cst {dimension_numbers = #tpu.dot_dimension_numbers<[1], [0], [0], [1], [0, 0, 1, 1], [], []>} : vector<512x147xbf16>, vector<147x64xbf16>, vector<512x64xf32> -> vector<512x64xf32>
    %c0_3 = arith.constant 0 : index
    %c0_4 = arith.constant 0 : index
    %3 = vector.load %arg3[%c0_3, %c0_4] : memref<1x64xf32, #tpu.memory_space<vmem>>, vector<1x64xf32>
    %4 = vector.broadcast %3 : vector<1x64xf32> to vector<512x64xf32>
    %5 = arith.addf %2, %4 : vector<512x64xf32>
    %cst_5 = arith.constant 0.000000e+00 : f32
    %6 = vector.broadcast %cst_5 : f32 to vector<512x64xf32>
    %7 = arith.maximumf %5, %6 : vector<512x64xf32>
    %8 = arith.truncf %7 : vector<512x64xf32> to vector<512x64xbf16>
    %c0_6 = arith.constant 0 : index
    %c0_7 = arith.constant 0 : index
    %9 = vector.load %arg4[%c0_6, %c0_7] : memref<512x64xbf16, #tpu.memory_space<vmem>>, vector<512x64xbf16>
    tpu.vector_store %arg4[%c0_6, %c0_7], %8 {strides = array<i32>} : memref<512x64xbf16, #tpu.memory_space<vmem>>, vector<512x64xbf16>,
    return
  }
  func.func @transform_0(%arg0: i32) -> (i32, i32) {
    %c0_i32 = arith.constant 0 : i32
    %c0_i32_0 = arith.constant 0 : i32
    return %arg0, %c0_i32 : i32, i32
  }
  func.func @transform_1(%arg0: i32) -> (i32, i32) {
    %c0_i32 = arith.constant 0 : i32
    %c0_i32_0 = arith.constant 0 : i32
    %c0_i32_1 = arith.constant 0 : i32
    return %c0_i32, %c0_i32_0 : i32, i32
  }
  func.func @transform_2(%arg0: i32) -> (i32, i32) {
    %c0_i32 = arith.constant 0 : i32
    %c0_i32_0 = arith.constant 0 : i32
    %c0_i32_1 = arith.constant 0 : i32
    return %c0_i32, %c0_i32_0 : i32, i32
  }
  func.func @transform_3(%arg0: i32) -> (i32, i32) {
    %c0_i32 = arith.constant 0 : i32
    %c0_i32_0 = arith.constant 0 : i32
    return %arg0, %c0_i32 : i32, i32
  }
}

module attributes {stable_mosaic.version = 11 : i64} {
  func.func @_basic_block_kernel(%arg0: i32, %arg1: i32, %arg2: memref<1x1x152x64xbf16, #tpu.memory_space<vmem>>, %arg3: memref<576x64xbf16, #tpu.memory_space<vmem>>, %arg4: memref<1x64xf32, #tpu.memory_space<vmem>>, %arg5: memref<576x64xbf16, #tpu.memory_space<vmem>>, %arg6: memref<1x64xf32, #tpu.memory_space<vmem>>, %arg7: memref<1x1x96x64xbf16, #tpu.memory_space<vmem>>, %arg8: memref<128x64xbf16, #tpu.memory_space<vmem>>) attributes {dimension_semantics = [#tpu.dimension_semantics<parallel>, #tpu.dimension_semantics<parallel>], iteration_bounds = array<i64: 2, 1>, scalar_prefetch = 0 : i64, scratch_operands = 1 : i64, tpu.core_type = #tpu.core_type<tc>, window_params = [{transform_indices = @transform_0, window_bounds = array<i64: 1, 1, 152, 64>}, {pipeline_mode = #tpu.pipeline_mode<synchronous>, transform_indices = @transform_1, window_bounds = array<i64: 576, 64>}, {pipeline_mode = #tpu.pipeline_mode<synchronous>, transform_indices = @transform_2, window_bounds = array<i64: 1, 64>}, {pipeline_mode = #tpu.pipeline_mode<synchronous>, transform_indices = @transform_3, window_bounds = array<i64: 576, 64>}, {pipeline_mode = #tpu.pipeline_mode<synchronous>, transform_indices = @transform_4, window_bounds = array<i64: 1, 64>}, {transform_indices = @transform_5, window_bounds = array<i64: 1, 1, 96, 64>}]} {
    %cst = arith.constant 0.000000e+00 : bf16
    %0 = vector.broadcast %cst : bf16 to vector<8x64xbf16>
    %c120 = arith.constant 120 : index
    %c0 = arith.constant 0 : index
    %1 = vector.load %arg8[%c120, %c0] : memref<128x64xbf16, #tpu.memory_space<vmem>>, vector<8x64xbf16>
    tpu.vector_store %arg8[%c120, %c0], %0 {strides = array<i32>} : memref<128x64xbf16, #tpu.memory_space<vmem>>, vector<8x64xbf16>,
    %c0_0 = arith.constant 0 : index
    %c0_1 = arith.constant 0 : index
    %c0_2 = arith.constant 0 : index
    %c0_3 = arith.constant 0 : index
    %2 = vector.load %arg2[%c0_0, %c0_1, %c0_2, %c0_3] : memref<1x1x152x64xbf16, #tpu.memory_space<vmem>>, vector<1x1x120x64xbf16>
    %3 = vector.shape_cast %2 : vector<1x1x120x64xbf16> to vector<120x64xbf16>
    %c0_4 = arith.constant 0 : index
    %c0_5 = arith.constant 0 : index
    %c1 = arith.constant 1 : index
    %c0_6 = arith.constant 0 : index
    %4 = vector.load %arg2[%c0_4, %c0_5, %c1, %c0_6] : memref<1x1x152x64xbf16, #tpu.memory_space<vmem>>, vector<1x1x120x64xbf16>
    %5 = vector.shape_cast %4 : vector<1x1x120x64xbf16> to vector<120x64xbf16>
    %c0_7 = arith.constant 0 : index
    %c0_8 = arith.constant 0 : index
    %c2 = arith.constant 2 : index
    %c0_9 = arith.constant 0 : index
    %6 = vector.load %arg2[%c0_7, %c0_8, %c2, %c0_9] : memref<1x1x152x64xbf16, #tpu.memory_space<vmem>>, vector<1x1x120x64xbf16>
    %7 = vector.shape_cast %6 : vector<1x1x120x64xbf16> to vector<120x64xbf16>
    %c0_10 = arith.constant 0 : index
    %c0_11 = arith.constant 0 : index
    %c12 = arith.constant 12 : index
    %c0_12 = arith.constant 0 : index
    %8 = vector.load %arg2[%c0_10, %c0_11, %c12, %c0_12] : memref<1x1x152x64xbf16, #tpu.memory_space<vmem>>, vector<1x1x120x64xbf16>
    %9 = vector.shape_cast %8 : vector<1x1x120x64xbf16> to vector<120x64xbf16>
    %c0_13 = arith.constant 0 : index
    %c0_14 = arith.constant 0 : index
    %c13 = arith.constant 13 : index
    %c0_15 = arith.constant 0 : index
    %10 = vector.load %arg2[%c0_13, %c0_14, %c13, %c0_15] : memref<1x1x152x64xbf16, #tpu.memory_space<vmem>>, vector<1x1x120x64xbf16>
    %11 = vector.shape_cast %10 : vector<1x1x120x64xbf16> to vector<120x64xbf16>
    %c0_16 = arith.constant 0 : index
    %c0_17 = arith.constant 0 : index
    %c14 = arith.constant 14 : index
    %c0_18 = arith.constant 0 : index
    %12 = vector.load %arg2[%c0_16, %c0_17, %c14, %c0_18] : memref<1x1x152x64xbf16, #tpu.memory_space<vmem>>, vector<1x1x120x64xbf16>
    %13 = vector.shape_cast %12 : vector<1x1x120x64xbf16> to vector<120x64xbf16>
    %c0_19 = arith.constant 0 : index
    %c0_20 = arith.constant 0 : index
    %c24 = arith.constant 24 : index
    %c0_21 = arith.constant 0 : index
    %14 = vector.load %arg2[%c0_19, %c0_20, %c24, %c0_21] : memref<1x1x152x64xbf16, #tpu.memory_space<vmem>>, vector<1x1x120x64xbf16>
    %15 = vector.shape_cast %14 : vector<1x1x120x64xbf16> to vector<120x64xbf16>
    %c0_22 = arith.constant 0 : index
    %c0_23 = arith.constant 0 : index
    %c25 = arith.constant 25 : index
    %c0_24 = arith.constant 0 : index
    %16 = vector.load %arg2[%c0_22, %c0_23, %c25, %c0_24] : memref<1x1x152x64xbf16, #tpu.memory_space<vmem>>, vector<1x1x120x64xbf16>
    %17 = vector.shape_cast %16 : vector<1x1x120x64xbf16> to vector<120x64xbf16>
    %c0_25 = arith.constant 0 : index
    %c0_26 = arith.constant 0 : index
    %c26 = arith.constant 26 : index
    %c0_27 = arith.constant 0 : index
    %18 = vector.load %arg2[%c0_25, %c0_26, %c26, %c0_27] : memref<1x1x152x64xbf16, #tpu.memory_space<vmem>>, vector<1x1x120x64xbf16>
    %19 = vector.shape_cast %18 : vector<1x1x120x64xbf16> to vector<120x64xbf16>
    %20 = tpu.concatenate %3, %5, %7, %9, %11, %13, %15, %17, %19 in 1 : vector<120x64xbf16>, vector<120x64xbf16>, vector<120x64xbf16>, vector<120x64xbf16>, vector<120x64xbf16>, vector<120x64xbf16>, vector<120x64xbf16>, vector<120x64xbf16>, vector<120x64xbf16> -> vector<120x576xbf16>
    %c0_28 = arith.constant 0 : index
    %c0_29 = arith.constant 0 : index
    %21 = vector.load %arg3[%c0_28, %c0_29] : memref<576x64xbf16, #tpu.memory_space<vmem>>, vector<576x64xbf16>
    %cst_30 = arith.constant dense<0.000000e+00> : vector<120x64xf32>
    %22 = tpu.matmul %20, %21, %cst_30 {dimension_numbers = #tpu.dot_dimension_numbers<[1], [0], [0], [1], [0, 0, 1, 1], [], []>} : vector<120x576xbf16>, vector<576x64xbf16>, vector<120x64xf32> -> vector<120x64xf32>
    %c0_31 = arith.constant 0 : index
    %c0_32 = arith.constant 0 : index
    %23 = vector.load %arg4[%c0_31, %c0_32] : memref<1x64xf32, #tpu.memory_space<vmem>>, vector<1x64xf32>
    %24 = vector.broadcast %23 : vector<1x64xf32> to vector<120x64xf32>
    %25 = arith.addf %22, %24 : vector<120x64xf32>
    %cst_33 = arith.constant 0.000000e+00 : f32
    %26 = vector.broadcast %cst_33 : f32 to vector<120x64xf32>
    %27 = arith.maximumf %25, %26 : vector<120x64xf32>
    %28 = arith.truncf %27 : vector<120x64xf32> to vector<120x64xbf16>
    %c0_34 = arith.constant 0 : index
    %c0_35 = arith.constant 0 : index
    %29 = vector.load %arg8[%c0_34, %c0_35] : memref<128x64xbf16, #tpu.memory_space<vmem>>, vector<120x64xbf16>
    tpu.vector_store %arg8[%c0_34, %c0_35], %28 {strides = array<i32>} : memref<128x64xbf16, #tpu.memory_space<vmem>>, vector<120x64xbf16>,
    %cst_36 = arith.constant 0.000000e+00 : bf16
    %30 = vector.broadcast %cst_36 : bf16 to vector<1x64xbf16>
    %cst_37 = arith.constant 0.000000e+00 : bf16
    %31 = vector.broadcast %cst_37 : bf16 to vector<4x64xbf16>
    %c0_38 = arith.constant 0 : index
    %c0_39 = arith.constant 0 : index
    %32 = vector.load %arg8[%c0_38, %c0_39] : memref<128x64xbf16, #tpu.memory_space<vmem>>, vector<1x64xbf16>
    tpu.vector_store %arg8[%c0_38, %c0_39], %30 {strides = array<i32>} : memref<128x64xbf16, #tpu.memory_space<vmem>>, vector<1x64xbf16>,
    %c9 = arith.constant 9 : index
    %c0_40 = arith.constant 0 : index
    %33 = vector.load %arg8[%c9, %c0_40] : memref<128x64xbf16, #tpu.memory_space<vmem>>, vector<4x64xbf16>
    tpu.vector_store %arg8[%c9, %c0_40], %31 {strides = array<i32>} : memref<128x64xbf16, #tpu.memory_space<vmem>>, vector<4x64xbf16>,
    %c21 = arith.constant 21 : index
    %c0_41 = arith.constant 0 : index
    %34 = vector.load %arg8[%c21, %c0_41] : memref<128x64xbf16, #tpu.memory_space<vmem>>, vector<4x64xbf16>
    tpu.vector_store %arg8[%c21, %c0_41], %31 {strides = array<i32>} : memref<128x64xbf16, #tpu.memory_space<vmem>>, vector<4x64xbf16>,
    %c33 = arith.constant 33 : index
    %c0_42 = arith.constant 0 : index
    %35 = vector.load %arg8[%c33, %c0_42] : memref<128x64xbf16, #tpu.memory_space<vmem>>, vector<4x64xbf16>
    tpu.vector_store %arg8[%c33, %c0_42], %31 {strides = array<i32>} : memref<128x64xbf16, #tpu.memory_space<vmem>>, vector<4x64xbf16>,
    %c45 = arith.constant 45 : index
    %c0_43 = arith.constant 0 : index
    %36 = vector.load %arg8[%c45, %c0_43] : memref<128x64xbf16, #tpu.memory_space<vmem>>, vector<4x64xbf16>
    tpu.vector_store %arg8[%c45, %c0_43], %31 {strides = array<i32>} : memref<128x64xbf16, #tpu.memory_space<vmem>>, vector<4x64xbf16>,
    %c57 = arith.constant 57 : index
    %c0_44 = arith.constant 0 : index
    %37 = vector.load %arg8[%c57, %c0_44] : memref<128x64xbf16, #tpu.memory_space<vmem>>, vector<4x64xbf16>
    tpu.vector_store %arg8[%c57, %c0_44], %31 {strides = array<i32>} : memref<128x64xbf16, #tpu.memory_space<vmem>>, vector<4x64xbf16>,
    %c69 = arith.constant 69 : index
    %c0_45 = arith.constant 0 : index
    %38 = vector.load %arg8[%c69, %c0_45] : memref<128x64xbf16, #tpu.memory_space<vmem>>, vector<4x64xbf16>
    tpu.vector_store %arg8[%c69, %c0_45], %31 {strides = array<i32>} : memref<128x64xbf16, #tpu.memory_space<vmem>>, vector<4x64xbf16>,
    %c81 = arith.constant 81 : index
    %c0_46 = arith.constant 0 : index
    %39 = vector.load %arg8[%c81, %c0_46] : memref<128x64xbf16, #tpu.memory_space<vmem>>, vector<4x64xbf16>
    tpu.vector_store %arg8[%c81, %c0_46], %31 {strides = array<i32>} : memref<128x64xbf16, #tpu.memory_space<vmem>>, vector<4x64xbf16>,
    %c93 = arith.constant 93 : index
    %c0_47 = arith.constant 0 : index
    %40 = vector.load %arg8[%c93, %c0_47] : memref<128x64xbf16, #tpu.memory_space<vmem>>, vector<4x64xbf16>
    tpu.vector_store %arg8[%c93, %c0_47], %31 {strides = array<i32>} : memref<128x64xbf16, #tpu.memory_space<vmem>>, vector<4x64xbf16>,
    %c105 = arith.constant 105 : index
    %c0_48 = arith.constant 0 : index
    %41 = vector.load %arg8[%c105, %c0_48] : memref<128x64xbf16, #tpu.memory_space<vmem>>, vector<4x64xbf16>
    tpu.vector_store %arg8[%c105, %c0_48], %31 {strides = array<i32>} : memref<128x64xbf16, #tpu.memory_space<vmem>>, vector<4x64xbf16>,
    %c117 = arith.constant 117 : index
    %c0_49 = arith.constant 0 : index
    %42 = vector.load %arg8[%c117, %c0_49] : memref<128x64xbf16, #tpu.memory_space<vmem>>, vector<4x64xbf16>
    tpu.vector_store %arg8[%c117, %c0_49], %31 {strides = array<i32>} : memref<128x64xbf16, #tpu.memory_space<vmem>>, vector<4x64xbf16>,
    %c0_i32 = arith.constant 0 : i32
    %43 = arith.cmpi eq, %arg1, %c0_i32 : i32
    %44 = arith.extui %43 : i1 to i32
    %c0_i32_50 = arith.constant 0 : i32
    %45 = arith.cmpi ne, %44, %c0_i32_50 : i32
    scf.if %45 {
      %cst_85 = arith.constant 0.000000e+00 : bf16
      %74 = vector.broadcast %cst_85 : bf16 to vector<12x64xbf16>
      %c0_86 = arith.constant 0 : index
      %c0_87 = arith.constant 0 : index
      %75 = vector.load %arg8[%c0_86, %c0_87] : memref<128x64xbf16, #tpu.memory_space<vmem>>, vector<12x64xbf16>
      tpu.vector_store %arg8[%c0_86, %c0_87], %74 {strides = array<i32>} : memref<128x64xbf16, #tpu.memory_space<vmem>>, vector<12x64xbf16>,
    } else {
    }
    %c0_i32_51 = arith.constant 0 : i32
    %46 = arith.cmpi eq, %arg1, %c0_i32_51 : i32
    %47 = arith.extui %46 : i1 to i32
    %c0_i32_52 = arith.constant 0 : i32
    %48 = arith.cmpi ne, %47, %c0_i32_52 : i32
    scf.if %48 {
      %cst_85 = arith.constant 0.000000e+00 : bf16
      %74 = vector.broadcast %cst_85 : bf16 to vector<12x64xbf16>
      %c108 = arith.constant 108 : index
      %c0_86 = arith.constant 0 : index
      %75 = vector.load %arg8[%c108, %c0_86] : memref<128x64xbf16, #tpu.memory_space<vmem>>, vector<12x64xbf16>
      tpu.vector_store %arg8[%c108, %c0_86], %74 {strides = array<i32>} : memref<128x64xbf16, #tpu.memory_space<vmem>>, vector<12x64xbf16>,
    } else {
    }
    %c0_53 = arith.constant 0 : index
    %c0_54 = arith.constant 0 : index
    %49 = vector.load %arg8[%c0_53, %c0_54] : memref<128x64xbf16, #tpu.memory_space<vmem>>, vector<96x64xbf16>
    %c1_55 = arith.constant 1 : index
    %c0_56 = arith.constant 0 : index
    %50 = vector.load %arg8[%c1_55, %c0_56] : memref<128x64xbf16, #tpu.memory_space<vmem>>, vector<96x64xbf16>
    %c2_57 = arith.constant 2 : index
    %c0_58 = arith.constant 0 : index
    %51 = vector.load %arg8[%c2_57, %c0_58] : memref<128x64xbf16, #tpu.memory_space<vmem>>, vector<96x64xbf16>
    %c12_59 = arith.constant 12 : index
    %c0_60 = arith.constant 0 : index
    %52 = vector.load %arg8[%c12_59, %c0_60] : memref<128x64xbf16, #tpu.memory_space<vmem>>, vector<96x64xbf16>
    %c13_61 = arith.constant 13 : index
    %c0_62 = arith.constant 0 : index
    %53 = vector.load %arg8[%c13_61, %c0_62] : memref<128x64xbf16, #tpu.memory_space<vmem>>, vector<96x64xbf16>
    %c14_63 = arith.constant 14 : index
    %c0_64 = arith.constant 0 : index
    %54 = vector.load %arg8[%c14_63, %c0_64] : memref<128x64xbf16, #tpu.memory_space<vmem>>, vector<96x64xbf16>
    %c24_65 = arith.constant 24 : index
    %c0_66 = arith.constant 0 : index
    %55 = vector.load %arg8[%c24_65, %c0_66] : memref<128x64xbf16, #tpu.memory_space<vmem>>, vector<96x64xbf16>
    %c25_67 = arith.constant 25 : index
    %c0_68 = arith.constant 0 : index
    %56 = vector.load %arg8[%c25_67, %c0_68] : memref<128x64xbf16, #tpu.memory_space<vmem>>, vector<96x64xbf16>
    %c26_69 = arith.constant 26 : index
    %c0_70 = arith.constant 0 : index
    %57 = vector.load %arg8[%c26_69, %c0_70] : memref<128x64xbf16, #tpu.memory_space<vmem>>, vector<96x64xbf16>
    %58 = tpu.concatenate %49, %50, %51, %52, %53, %54, %55, %56, %57 in 1 : vector<96x64xbf16>, vector<96x64xbf16>, vector<96x64xbf16>, vector<96x64xbf16>, vector<96x64xbf16>, vector<96x64xbf16>, vector<96x64xbf16>, vector<96x64xbf16>, vector<96x64xbf16> -> vector<96x576xbf16>
    %c0_71 = arith.constant 0 : index
    %c0_72 = arith.constant 0 : index
    %59 = vector.load %arg5[%c0_71, %c0_72] : memref<576x64xbf16, #tpu.memory_space<vmem>>, vector<576x64xbf16>
    %cst_73 = arith.constant dense<0.000000e+00> : vector<96x64xf32>
    %60 = tpu.matmul %58, %59, %cst_73 {dimension_numbers = #tpu.dot_dimension_numbers<[1], [0], [0], [1], [0, 0, 1, 1], [], []>} : vector<96x576xbf16>, vector<576x64xbf16>, vector<96x64xf32> -> vector<96x64xf32>
    %c0_74 = arith.constant 0 : index
    %c0_75 = arith.constant 0 : index
    %c26_76 = arith.constant 26 : index
    %c0_77 = arith.constant 0 : index
    %61 = vector.load %arg2[%c0_74, %c0_75, %c26_76, %c0_77] : memref<1x1x152x64xbf16, #tpu.memory_space<vmem>>, vector<1x1x96x64xbf16>
    %62 = vector.shape_cast %61 : vector<1x1x96x64xbf16> to vector<96x64xbf16>
    %63 = arith.extf %62 : vector<96x64xbf16> to vector<96x64xf32>
    %c0_78 = arith.constant 0 : index
    %c0_79 = arith.constant 0 : index
    %64 = vector.load %arg6[%c0_78, %c0_79] : memref<1x64xf32, #tpu.memory_space<vmem>>, vector<1x64xf32>
    %65 = vector.broadcast %64 : vector<1x64xf32> to vector<96x64xf32>
    %66 = arith.addf %60, %65 : vector<96x64xf32>
    %67 = arith.addf %66, %63 : vector<96x64xf32>
    %cst_80 = arith.constant 0.000000e+00 : f32
    %68 = vector.broadcast %cst_80 : f32 to vector<96x64xf32>
    %69 = arith.maximumf %67, %68 : vector<96x64xf32>
    %70 = arith.truncf %69 : vector<96x64xf32> to vector<96x64xbf16>
    %c0_81 = arith.constant 0 : index
    %c0_82 = arith.constant 0 : index
    %c0_83 = arith.constant 0 : index
    %c0_84 = arith.constant 0 : index
    %71 = vector.load %arg7[%c0_81, %c0_82, %c0_83, %c0_84] : memref<1x1x96x64xbf16, #tpu.memory_space<vmem>>, vector<1x1x96x64xbf16>
    %72 = vector.shape_cast %71 : vector<1x1x96x64xbf16> to vector<96x64xbf16>
    %73 = vector.shape_cast %70 : vector<96x64xbf16> to vector<1x1x96x64xbf16>
    tpu.vector_store %arg7[%c0_81, %c0_82, %c0_83, %c0_84], %73 {strides = array<i32>} : memref<1x1x96x64xbf16, #tpu.memory_space<vmem>>, vector<1x1x96x64xbf16>,
    return
  }
  func.func @transform_0(%arg0: i32, %arg1: i32) -> (i32, i32, i32, i32) {
    %c0_i32 = arith.constant 0 : i32
    %c0_i32_0 = arith.constant 0 : i32
    %c0_i32_1 = arith.constant 0 : i32
    return %arg0, %arg1, %c0_i32, %c0_i32_0 : i32, i32, i32, i32
  }
  func.func @transform_1(%arg0: i32, %arg1: i32) -> (i32, i32) {
    %c0_i32 = arith.constant 0 : i32
    %c0_i32_0 = arith.constant 0 : i32
    %c0_i32_1 = arith.constant 0 : i32
    return %c0_i32, %c0_i32_0 : i32, i32
  }
  func.func @transform_2(%arg0: i32, %arg1: i32) -> (i32, i32) {
    %c0_i32 = arith.constant 0 : i32
    %c0_i32_0 = arith.constant 0 : i32
    %c0_i32_1 = arith.constant 0 : i32
    return %c0_i32, %c0_i32_0 : i32, i32
  }
  func.func @transform_3(%arg0: i32, %arg1: i32) -> (i32, i32) {
    %c0_i32 = arith.constant 0 : i32
    %c0_i32_0 = arith.constant 0 : i32
    %c0_i32_1 = arith.constant 0 : i32
    return %c0_i32, %c0_i32_0 : i32, i32
  }
  func.func @transform_4(%arg0: i32, %arg1: i32) -> (i32, i32) {
    %c0_i32 = arith.constant 0 : i32
    %c0_i32_0 = arith.constant 0 : i32
    %c0_i32_1 = arith.constant 0 : i32
    return %c0_i32, %c0_i32_0 : i32, i32
  }
  func.func @transform_5(%arg0: i32, %arg1: i32) -> (i32, i32, i32, i32) {
    %c0_i32 = arith.constant 0 : i32
    %c0_i32_0 = arith.constant 0 : i32
    %c0_i32_1 = arith.constant 0 : i32
    return %arg0, %arg1, %c0_i32, %c0_i32_0 : i32, i32, i32, i32
  }
}

</mosaic_0001>

<llo_original>
// kernel: image_encoder_forward.2
$region0: #{image_encoder_forward.2}
  #allocation0 [shape = 'u32[]', space=smem, size = 0x4, offset = 0x4, fixed_abs, tag = 'smem constant byte address 0x4 - core index']
  #allocation1 [shape = 'u32[144,128]{1,0:T(1,128)}', space=vmem, size = 0x12000, scoped, tag = 'internal scratch']
  %s0 = inlined_call_operand.vmem [shape: bf16[512,147], index: 0, kind: input, shape index: {}]
  %s1 = inlined_call_operand.vmem [shape: bf16[147,64], index: 1, kind: input, shape index: {}]
  %s2 = inlined_call_operand.vmem [shape: f32[1,64], index: 2, kind: input, shape index: {}]
  %s3 = inlined_call_operand.vmem [shape: bf16[512,64], index: 3, kind: output, shape index: {}]
  %s4 = sld [smem:[#allocation0]]
  $region22: #{image_encoder_forward.2} parent=0
    _
  %s6 = ssub.s32 1, %s4
  %s7 = scalar_select 0, %s6, %s4
  // Predicated region
  $region2: #{image_encoder_forward.2} parent=0 // pred_check
    _
  $region3: #{image_encoder_forward.2} parent=0 // pred_check_branch
    %9 = sbr.rel (0) target = $region5
  $region4: #{image_encoder_forward.2} parent=0 // pred_region
    _
  $region5: #{image_encoder_forward.2} parent=0 // pred_fallthru
    _
  // Predicated region
  $region6: #{image_encoder_forward.2} parent=0 // pred_check
    _
  $region7: #{image_encoder_forward.2} parent=0 // pred_check_branch
    %11 = sbr.rel (0) target = $region9
  $region8: #{image_encoder_forward.2} parent=0 // pred_region
    _
  $region9: #{image_encoder_forward.2} parent=0 // pred_fallthru
    _
  // Predicated region
  $region10: #{image_encoder_forward.2} parent=0 // pred_check
    _
  $region11: #{image_encoder_forward.2} parent=0 // pred_check_branch
    %13 = sbr.rel (0) target = $region13
  $region12: #{image_encoder_forward.2} parent=0 // pred_region
    _
  $region13: #{image_encoder_forward.2} parent=0 // pred_fallthru
    _
  %v15 = vld [vmem:[%s0] sm:$0xff]
  %v16 = vld [vmem:[%s0 + $0x8] sm:$0xff]
  %v17 = vld [vmem:[%s0 + $0x10] sm:$0xff]
  %v18 = vld [vmem:[%s0 + $0x18] sm:$0xff]
  %v19 = vld [vmem:[%s0 + $0x20] sm:$0xff]
  %v20 = vld [vmem:[%s0 + $0x28] sm:$0xff]
  %v21 = vld [vmem:[%s0 + $0x30] sm:$0xff]
  %v22 = vld [vmem:[%s0 + $0x38] sm:$0xff]
  %v23 = vld [vmem:[%s0 + $0x40] sm:$0xff]
  %v24 = vld [vmem:[%s0 + $0x48] sm:$0xff]
  %v25 = vld [vmem:[%s0 + $0x50] sm:$0xff]
  %v26 = vld [vmem:[%s0 + $0x58] sm:$0xff]
  %v27 = vld [vmem:[%s0 + $0x60] sm:$0xff]
  %v28 = vld [vmem:[%s0 + $0x68] sm:$0xff]
  %v29 = vld [vmem:[%s0 + $0x70] sm:$0xff]
  %v30 = vld [vmem:[%s0 + $0x78] sm:$0xff]
  %v31 = vld [vmem:[%s0 + $0x80] sm:$0xff]
  %v32 = vld [vmem:[%s0 + $0x88] sm:$0xff]
  %v33 = vld [vmem:[%s0 + $0x90] sm:$0xff]
  %v34 = vld [vmem:[%s0 + $0x98] sm:$0xff]
  %v35 = vld [vmem:[%s0 + $0xa0] sm:$0xff]
  %v36 = vld [vmem:[%s0 + $0xa8] sm:$0xff]
  %v37 = vld [vmem:[%s0 + $0xb0] sm:$0xff]
  %v38 = vld [vmem:[%s0 + $0xb8] sm:$0xff]
  %v39 = vld [vmem:[%s0 + $0xc0] sm:$0xff]
  %v40 = vld [vmem:[%s0 + $0xc8] sm:$0xff]
  %v41 = vld [vmem:[%s0 + $0xd0] sm:$0xff]
  %v42 = vld [vmem:[%s0 + $0xd8] sm:$0xff]
  %v43 = vld [vmem:[%s0 + $0xe0] sm:$0xff]
  %v44 = vld [vmem:[%s0 + $0xe8] sm:$0xff]
  %v45 = vld [vmem:[%s0 + $0xf0] sm:$0xff]
  %v46 = vld [vmem:[%s0 + $0xf8] sm:$0xff]
  %v47 = vld [vmem:[%s0 + $0x100] sm:$0xff]
  %v48 = vld [vmem:[%s0 + $0x108] sm:$0xff]
  %v49 = vld [vmem:[%s0 + $0x110] sm:$0xff]
  %v50 = vld [vmem:[%s0 + $0x118] sm:$0xff]
  %v51 = vld [vmem:[%s0 + $0x120] sm:$0xff]
  %v52 = vld [vmem:[%s0 + $0x128] sm:$0xff]
  %v53 = vld [vmem:[%s0 + $0x130] sm:$0xff]
  %v54 = vld [vmem:[%s0 + $0x138] sm:$0xff]
  %v55 = vld [vmem:[%s0 + $0x140] sm:$0xff]
  %v56 = vld [vmem:[%s0 + $0x148] sm:$0xff]
  %v57 = vld [vmem:[%s0 + $0x150] sm:$0xff]
  %v58 = vld [vmem:[%s0 + $0x158] sm:$0xff]
  %v59 = vld [vmem:[%s0 + $0x160] sm:$0xff]
  %v60 = vld [vmem:[%s0 + $0x168] sm:$0xff]
  %v61 = vld [vmem:[%s0 + $0x170] sm:$0xff]
  %v62 = vld [vmem:[%s0 + $0x178] sm:$0xff]
  %v63 = vld [vmem:[%s0 + $0x180] sm:$0xff]
  %v64 = vld [vmem:[%s0 + $0x188] sm:$0xff]
  %v65 = vld [vmem:[%s0 + $0x190] sm:$0xff]
  %v66 = vld [vmem:[%s0 + $0x198] sm:$0xff]
  %v67 = vld [vmem:[%s0 + $0x1a0] sm:$0xff]
  %v68 = vld [vmem:[%s0 + $0x1a8] sm:$0xff]
  %v69 = vld [vmem:[%s0 + $0x1b0] sm:$0xff]
  %v70 = vld [vmem:[%s0 + $0x1b8] sm:$0xff]
  %v71 = vld [vmem:[%s0 + $0x1c0] sm:$0xff]
  %v72 = vld [vmem:[%s0 + $0x1c8] sm:$0xff]
  %v73 = vld [vmem:[%s0 + $0x1d0] sm:$0xff]
  %v74 = vld [vmem:[%s0 + $0x1d8] sm:$0xff]
  %v75 = vld [vmem:[%s0 + $0x1e0] sm:$0xff]
  %v76 = vld [vmem:[%s0 + $0x1e8] sm:$0xff]
  %v77 = vld [vmem:[%s0 + $0x1f0] sm:$0xff]
  %v78 = vld [vmem:[%s0 + $0x1f8] sm:$0xff]
  %v79 = vld [vmem:[%s1] sm:$0xf]
  %v80 = vld [vmem:[%s1 + $0x4] sm:$0xf]
  %v81 = vld [vmem:[%s1 + $0x8] sm:$0xf]
  %v82 = vld [vmem:[%s1 + $0xc] sm:$0xf]
  %v83 = vld [vmem:[%s1 + $0x10] sm:$0xf]
  %v84 = vld [vmem:[%s1 + $0x14] sm:$0xf]
  %v85 = vld [vmem:[%s1 + $0x18] sm:$0xf]
  %v86 = vld [vmem:[%s1 + $0x1c] sm:$0xf]
  %v87 = vld [vmem:[%s1 + $0x20] sm:$0xf]
  %v88 = vld [vmem:[%s1 + $0x24] sm:$0xf]
  %v89 = vld [vmem:[%s1 + $0x28] sm:$0xf]
  %v90 = vld [vmem:[%s1 + $0x2c] sm:$0xf]
  %v91 = vld [vmem:[%s1 + $0x30] sm:$0xf]
  %v92 = vld [vmem:[%s1 + $0x34] sm:$0xf]
  %v93 = vld [vmem:[%s1 + $0x38] sm:$0xf]
  %v94 = vld [vmem:[%s1 + $0x3c] sm:$0xf]
  %v95 = vld [vmem:[%s1 + $0x40] sm:$0xf]
  %v96 = vld [vmem:[%s1 + $0x44] sm:$0xf]
  %v97 = vld [vmem:[%s1 + $0x48] sm:$0x3]
  %v98 = vld [vmem:[%s2] sm:$0x1]
  %v100 = vlaneseq
  %v101 = vshrl.u32 %v100, 7
  %v102 = vsub.s32 0, %v101
  %v103 = vrot.slane %v98, %v102
  %v169 = vunpack.c.l.b16 %v15
  %v170 = vunpack.c.h.b16 %v15
  %v171 = vunpack.c.l.b16 %v16
  %v172 = vunpack.c.h.b16 %v16
  %v173 = vunpack.c.l.b16 %v17
  %v174 = vunpack.c.h.b16 %v17
  %v175 = vunpack.c.l.b16 %v18
  %v176 = vunpack.c.h.b16 %v18
  %v177 = vunpack.c.l.b16 %v19
  %v178 = vunpack.c.h.b16 %v19
  %v179 = vunpack.c.l.b16 %v20
  %v180 = vunpack.c.h.b16 %v20
  %v181 = vunpack.c.l.b16 %v21
  %v182 = vunpack.c.h.b16 %v21
  %v183 = vunpack.c.l.b16 %v22
  %v184 = vunpack.c.h.b16 %v22
  %v185 = vunpack.c.l.b16 %v23
  %v186 = vunpack.c.h.b16 %v23
  %v187 = vunpack.c.l.b16 %v24
  %v188 = vunpack.c.h.b16 %v24
  %v189 = vunpack.c.l.b16 %v25
  %v190 = vunpack.c.h.b16 %v25
  %v191 = vunpack.c.l.b16 %v26
  %v192 = vunpack.c.h.b16 %v26
  %v193 = vunpack.c.l.b16 %v27
  %v194 = vunpack.c.h.b16 %v27
  %v195 = vunpack.c.l.b16 %v28
  %v196 = vunpack.c.h.b16 %v28
  %v197 = vunpack.c.l.b16 %v29
  %v198 = vunpack.c.h.b16 %v29
  %v199 = vunpack.c.l.b16 %v30
  %v200 = vunpack.c.h.b16 %v30
  %v201 = vunpack.c.l.b16 %v31
  %v202 = vunpack.c.h.b16 %v31
  %v203 = vunpack.c.l.b16 %v32
  %v204 = vunpack.c.h.b16 %v32
  %v205 = vunpack.c.l.b16 %v33
  %v206 = vunpack.c.h.b16 %v33
  %v207 = vunpack.c.l.b16 %v34
  %v208 = vunpack.c.h.b16 %v34
  %v209 = vunpack.c.l.b16 %v35
  %v210 = vunpack.c.h.b16 %v35
  %v211 = vunpack.c.l.b16 %v36
  %v212 = vunpack.c.h.b16 %v36
  %v213 = vunpack.c.l.b16 %v37
  %v214 = vunpack.c.h.b16 %v37
  %v215 = vunpack.c.l.b16 %v38
  %v216 = vunpack.c.h.b16 %v38
  %v217 = vunpack.c.l.b16 %v39
  %v218 = vunpack.c.h.b16 %v39
  %v219 = vunpack.c.l.b16 %v40
  %v220 = vunpack.c.h.b16 %v40
  %v221 = vunpack.c.l.b16 %v41
  %v222 = vunpack.c.h.b16 %v41
  %v223 = vunpack.c.l.b16 %v42
  %v224 = vunpack.c.h.b16 %v42
  %v225 = vunpack.c.l.b16 %v43
  %v226 = vunpack.c.h.b16 %v43
  %v227 = vunpack.c.l.b16 %v44
  %v228 = vunpack.c.h.b16 %v44
  %v229 = vunpack.c.l.b16 %v45
  %v230 = vunpack.c.h.b16 %v45
  %v231 = vunpack.c.l.b16 %v46
  %v232 = vunpack.c.h.b16 %v46
  %v233 = vunpack.c.l.b16 %v47
  %v234 = vunpack.c.h.b16 %v47
  %v235 = vunpack.c.l.b16 %v48
  %v236 = vunpack.c.h.b16 %v48
  %v237 = vunpack.c.l.b16 %v49
  %v238 = vunpack.c.h.b16 %v49
  %v239 = vunpack.c.l.b16 %v50
  %v240 = vunpack.c.h.b16 %v50
  %v241 = vunpack.c.l.b16 %v51
  %v242 = vunpack.c.h.b16 %v51
  %v243 = vunpack.c.l.b16 %v52
  %v244 = vunpack.c.h.b16 %v52
  %v245 = vunpack.c.l.b16 %v53
  %v246 = vunpack.c.h.b16 %v53
  %v247 = vunpack.c.l.b16 %v54
  %v248 = vunpack.c.h.b16 %v54
  %v249 = vunpack.c.l.b16 %v55
  %v250 = vunpack.c.h.b16 %v55
  %v251 = vunpack.c.l.b16 %v56
  %v252 = vunpack.c.h.b16 %v56
  %v253 = vunpack.c.l.b16 %v57
  %v254 = vunpack.c.h.b16 %v57
  %v255 = vunpack.c.l.b16 %v58
  %v256 = vunpack.c.h.b16 %v58
  %v257 = vunpack.c.l.b16 %v59
  %v258 = vunpack.c.h.b16 %v59
  %v259 = vunpack.c.l.b16 %v60
  %v260 = vunpack.c.h.b16 %v60
  %v261 = vunpack.c.l.b16 %v61
  %v262 = vunpack.c.h.b16 %v61
  %v263 = vunpack.c.l.b16 %v62
  %v264 = vunpack.c.h.b16 %v62
  %v265 = vunpack.c.l.b16 %v63
  %v266 = vunpack.c.h.b16 %v63
  %v267 = vunpack.c.l.b16 %v64
  %v268 = vunpack.c.h.b16 %v64
  %v269 = vunpack.c.l.b16 %v65
  %v270 = vunpack.c.h.b16 %v65
  %v271 = vunpack.c.l.b16 %v66
  %v272 = vunpack.c.h.b16 %v66
  %v273 = vunpack.c.l.b16 %v67
  %v274 = vunpack.c.h.b16 %v67
  %v275 = vunpack.c.l.b16 %v68
  %v276 = vunpack.c.h.b16 %v68
  %v277 = vunpack.c.l.b16 %v69
  %v278 = vunpack.c.h.b16 %v69
  %v279 = vunpack.c.l.b16 %v70
  %v280 = vunpack.c.h.b16 %v70
  %v281 = vunpack.c.l.b16 %v71
  %v282 = vunpack.c.h.b16 %v71
  %v283 = vunpack.c.l.b16 %v72
  %v284 = vunpack.c.h.b16 %v72
  %v285 = vunpack.c.l.b16 %v73
  %v286 = vunpack.c.h.b16 %v73
  %v287 = vunpack.c.l.b16 %v74
  %v288 = vunpack.c.h.b16 %v74
  %v289 = vunpack.c.l.b16 %v75
  %v290 = vunpack.c.h.b16 %v75
  %v291 = vunpack.c.l.b16 %v76
  %v292 = vunpack.c.h.b16 %v76
  %v293 = vunpack.c.l.b16 %v77
  %v294 = vunpack.c.h.b16 %v77
  %v295 = vunpack.c.l.b16 %v78
  %v296 = vunpack.c.h.b16 %v78
  %v297 = vpack.c.b16 %v171, %v169
  %v298 = vpack.c.b16 %v172, %v170
  %v299 = vpack.c.b16 %v175, %v173
  %v300 = vpack.c.b16 %v176, %v174
  %v301 = vpack.c.b16 %v179, %v177
  %v302 = vpack.c.b16 %v180, %v178
  %v303 = vpack.c.b16 %v183, %v181
  %v304 = vpack.c.b16 %v184, %v182
  %v305 = vpack.c.b16 %v187, %v185
  %v306 = vpack.c.b16 %v188, %v186
  %v307 = vpack.c.b16 %v191, %v189
  %v308 = vpack.c.b16 %v192, %v190
  %v309 = vpack.c.b16 %v195, %v193
  %v310 = vpack.c.b16 %v196, %v194
  %v311 = vpack.c.b16 %v199, %v197
  %v312 = vpack.c.b16 %v200, %v198
  %v313 = vpack.c.b16 %v203, %v201
  %v314 = vpack.c.b16 %v204, %v202
  %v315 = vpack.c.b16 %v207, %v205
  %v316 = vpack.c.b16 %v208, %v206
  %v317 = vpack.c.b16 %v211, %v209
  %v318 = vpack.c.b16 %v212, %v210
  %v319 = vpack.c.b16 %v215, %v213
  %v320 = vpack.c.b16 %v216, %v214
  %v321 = vpack.c.b16 %v219, %v217
  %v322 = vpack.c.b16 %v220, %v218
  %v323 = vpack.c.b16 %v223, %v221
  %v324 = vpack.c.b16 %v224, %v222
  %v325 = vpack.c.b16 %v227, %v225
  %v326 = vpack.c.b16 %v228, %v226
  %v327 = vpack.c.b16 %v231, %v229
  %v328 = vpack.c.b16 %v232, %v230
  %v329 = vpack.c.b16 %v235, %v233
  %v330 = vpack.c.b16 %v236, %v234
  %v331 = vpack.c.b16 %v239, %v237
  %v332 = vpack.c.b16 %v240, %v238
  %v333 = vpack.c.b16 %v243, %v241
  %v334 = vpack.c.b16 %v244, %v242
  %v335 = vpack.c.b16 %v247, %v245
  %v336 = vpack.c.b16 %v248, %v246
  %v337 = vpack.c.b16 %v251, %v249
  %v338 = vpack.c.b16 %v252, %v250
  %v339 = vpack.c.b16 %v255, %v253
  %v340 = vpack.c.b16 %v256, %v254
  %v341 = vpack.c.b16 %v259, %v257
  %v342 = vpack.c.b16 %v260, %v258
  %v343 = vpack.c.b16 %v263, %v261
  %v344 = vpack.c.b16 %v264, %v262
  %v345 = vpack.c.b16 %v267, %v265
  %v346 = vpack.c.b16 %v268, %v266
  %v347 = vpack.c.b16 %v271, %v269
  %v348 = vpack.c.b16 %v272, %v270
  %v349 = vpack.c.b16 %v275, %v273
  %v350 = vpack.c.b16 %v276, %v274
  %v351 = vpack.c.b16 %v279, %v277
  %v352 = vpack.c.b16 %v280, %v278
  %v353 = vpack.c.b16 %v283, %v281
  %v354 = vpack.c.b16 %v284, %v282
  %v355 = vpack.c.b16 %v287, %v285
  %v356 = vpack.c.b16 %v288, %v286
  %v357 = vpack.c.b16 %v291, %v289
  %v358 = vpack.c.b16 %v292, %v290
  %v359 = vpack.c.b16 %v295, %v293
  %v360 = vpack.c.b16 %v296, %v294
  %v412 = vunpack.c.l.b16 %v79
  %v413 = vunpack.c.l.b16 %v80
  %v414 = vunpack.c.l.b16 %v81
  %v415 = vunpack.c.l.b16 %v82
  %v416 = vunpack.c.l.b16 %v83
  %v417 = vunpack.c.l.b16 %v84
  %v418 = vunpack.c.l.b16 %v85
  %v419 = vunpack.c.l.b16 %v86
  %v420 = vunpack.c.l.b16 %v87
  %v421 = vunpack.c.l.b16 %v88
  %v422 = vunpack.c.l.b16 %v89
  %v423 = vunpack.c.l.b16 %v90
  %v424 = vunpack.c.l.b16 %v91
  %v425 = vunpack.c.l.b16 %v92
  %v426 = vunpack.c.l.b16 %v93
  %v427 = vunpack.c.l.b16 %v94
  %v428 = vunpack.c.l.b16 %v95
  %v429 = vunpack.c.l.b16 %v96
  %v430 = vunpack.c.l.b16 %v97
  %v431 = vpack.c.b16 %v413, %v412
  %v432 = vpack.c.b16 %v415, %v414
  %v433 = vpack.c.b16 %v417, %v416
  %v434 = vpack.c.b16 %v419, %v418
  %v435 = vpack.c.b16 %v421, %v420
  %v436 = vpack.c.b16 %v423, %v422
  %v437 = vpack.c.b16 %v425, %v424
  %v438 = vpack.c.b16 %v427, %v426
  %v439 = vpack.c.b16 %v429, %v428
  %v440 = vpack.c.b16 %v430, %v430
  %vm450 = vcmask 154624
  %v452 = vsel %vm450, %v298, 0
  %v455 = vsel %vm450, %v300, 0
  %v458 = vsel %vm450, %v302, 0
  %v461 = vsel %vm450, %v304, 0
  %v464 = vsel %vm450, %v306, 0
  %v467 = vsel %vm450, %v308, 0
  %v470 = vsel %vm450, %v310, 0
  %v473 = vsel %vm450, %v312, 0
  %v476 = vsel %vm450, %v314, 0
  %v479 = vsel %vm450, %v316, 0
  %v482 = vsel %vm450, %v318, 0
  %v485 = vsel %vm450, %v320, 0
  %v488 = vsel %vm450, %v322, 0
  %v491 = vsel %vm450, %v324, 0
  %v494 = vsel %vm450, %v326, 0
  %v497 = vsel %vm450, %v328, 0
  %v500 = vsel %vm450, %v330, 0
  %v503 = vsel %vm450, %v332, 0
  %v506 = vsel %vm450, %v334, 0
  %v509 = vsel %vm450, %v336, 0
  %v512 = vsel %vm450, %v338, 0
  %v515 = vsel %vm450, %v340, 0
  %v518 = vsel %vm450, %v342, 0
  %v521 = vsel %vm450, %v344, 0
  %v524 = vsel %vm450, %v346, 0
  %v527 = vsel %vm450, %v348, 0
  %v530 = vsel %vm450, %v350, 0
  %v533 = vsel %vm450, %v352, 0
  %v536 = vsel %vm450, %v354, 0
  %v539 = vsel %vm450, %v356, 0
  %v542 = vsel %vm450, %v358, 0
  %v545 = vsel %vm450, %v360, 0
  %vm547 = vcmask 1040384
  %vm548 = vcmask 1041408
  %v549 = vsel %vm547, 4294967295, 65535
  %v550 = vsel %vm548, %v549, 0
  %v552 = vand.u32 %v440, %v550
  %554 = vmatprep.subr.bf16.mxu0 0
  %555 = vmatpush1.bf16.msra.mxu0 %v431
  %556 = vmatprep.subr.bf16.mxu0 0
  %557 = vmatpush1.bf16.msra.mxu0 %v432
  %558 = vmatprep.subr.bf16.mxu0 0
  %559 = vmatpush1.bf16.msra.mxu0 %v433
  %560 = vmatprep.subr.bf16.mxu0 0
  %561 = vmatpush1.bf16.msra.mxu0 %v434
  %562 = vmatprep.subr.bf16.mxu0 0
  %563 = vmatpush1.bf16.msra.mxu0 %v435
  %564 = vmatprep.subr.bf16.mxu0 0
  %565 = vmatpush1.bf16.msra.mxu0 %v436
  %566 = vmatprep.subr.bf16.mxu0 0
  %567 = vmatpush1.bf16.msra.mxu0 %v437
  %568 = vmatprep.subr.bf16.mxu0 0
  %569 = vmatpush1.bf16.msra.mxu0 %v438
  %570 = vmatprep.subr.bf16.mxu0 0
  %571 = vmatpush1.bf16.msra.mxu0 %v439
  %572 = vmatprep.subr.bf16.mxu0 0
  %573 = vmatpush1.bf16.msra.mxu0 %v552
  %574 = vmatprep.subr.bf16.mxu0 0
  %575 = vmatpush1.bf16.msra.mxu0 0
  %576 = vmatprep.subr.bf16.mxu0 0
  %577 = vmatpush1.bf16.msra.mxu0 0
  %578 = vmatprep.subr.bf16.mxu0 0
  %579 = vmatpush1.bf16.msra.mxu0 0
  %580 = vmatprep.subr.bf16.mxu0 0
  %581 = vmatpush1.bf16.msra.mxu0 0
  %582 = vmatprep.subr.bf16.mxu0 0
  %583 = vmatpush1.bf16.msra.mxu0 0
  %584 = vmatprep.subr.bf16.mxu0 0
  %585 = vmatpush1.bf16.msra.mxu0 0
  %586 = vmatprep.mubr.bf16.mxu0 %v452
  %587 = vmatmul.mubr.bf16.gmra.mrb[0].mxu0 %v297
  %v588 = vpop.f32.mrb[0].mxu0
  %v589 = vadd.f32 %v103, %v588
  %v590 = vpop.f32.mrb[0].mxu0
  %v591 = vpop.f32.mrb[0].mxu0
  %v592 = vadd.f32 %v103, %v591
  %v593 = vpop.f32.mrb[0].mxu0
  %594 = vmatprep.mubr.bf16.mxu0 %v455
  %595 = vmatmul.mubr.bf16.gmra.mrb[0].mxu0 %v299
  %v596 = vpop.f32.mrb[0].mxu0
  %v597 = vadd.f32 %v103, %v596
  %v598 = vpop.f32.mrb[0].mxu0
  %v599 = vpop.f32.mrb[0].mxu0
  %v600 = vadd.f32 %v103, %v599
  %v601 = vpop.f32.mrb[0].mxu0
  %602 = vmatprep.mubr.bf16.mxu0 %v458
  %603 = vmatmul.mubr.bf16.gmra.mrb[0].mxu0 %v301
  %v604 = vpop.f32.mrb[0].mxu0
  %v605 = vadd.f32 %v103, %v604
  %v606 = vpop.f32.mrb[0].mxu0
  %v607 = vpop.f32.mrb[0].mxu0
  %v608 = vadd.f32 %v103, %v607
  %v609 = vpop.f32.mrb[0].mxu0
  %610 = vmatprep.mubr.bf16.mxu0 %v461
  %611 = vmatmul.mubr.bf16.gmra.mrb[0].mxu0 %v303
  %v612 = vpop.f32.mrb[0].mxu0
  %v613 = vadd.f32 %v103, %v612
  %v614 = vpop.f32.mrb[0].mxu0
  %v615 = vpop.f32.mrb[0].mxu0
  %v616 = vadd.f32 %v103, %v615
  %v617 = vpop.f32.mrb[0].mxu0
  %618 = vmatprep.mubr.bf16.mxu0 %v464
  %619 = vmatmul.mubr.bf16.gmra.mrb[0].mxu0 %v305
  %v620 = vpop.f32.mrb[0].mxu0
  %v621 = vadd.f32 %v103, %v620
  %v622 = vpop.f32.mrb[0].mxu0
  %v623 = vpop.f32.mrb[0].mxu0
  %v624 = vadd.f32 %v103, %v623
  %v625 = vpop.f32.mrb[0].mxu0
  %626 = vmatprep.mubr.bf16.mxu0 %v467
  %627 = vmatmul.mubr.bf16.gmra.mrb[0].mxu0 %v307
  %v628 = vpop.f32.mrb[0].mxu0
  %v629 = vadd.f32 %v103, %v628
  %v630 = vpop.f32.mrb[0].mxu0
  %v631 = vpop.f32.mrb[0].mxu0
  %v632 = vadd.f32 %v103, %v631
  %v633 = vpop.f32.mrb[0].mxu0
  %634 = vmatprep.mubr.bf16.mxu0 %v470
  %635 = vmatmul.mubr.bf16.gmra.mrb[0].mxu0 %v309
  %v636 = vpop.f32.mrb[0].mxu0
  %v637 = vadd.f32 %v103, %v636
  %v638 = vpop.f32.mrb[0].mxu0
  %v639 = vpop.f32.mrb[0].mxu0
  %v640 = vadd.f32 %v103, %v639
  %v641 = vpop.f32.mrb[0].mxu0
  %642 = vmatprep.mubr.bf16.mxu0 %v473
  %643 = vmatmul.mubr.bf16.gmra.mrb[0].mxu0 %v311
  %v644 = vpop.f32.mrb[0].mxu0
  %v645 = vadd.f32 %v103, %v644
  %v646 = vpop.f32.mrb[0].mxu0
  %v647 = vpop.f32.mrb[0].mxu0
  %v648 = vadd.f32 %v103, %v647
  %v649 = vpop.f32.mrb[0].mxu0
  %650 = vmatprep.mubr.bf16.mxu0 %v476
  %651 = vmatmul.mubr.bf16.gmra.mrb[0].mxu0 %v313
  %v652 = vpop.f32.mrb[0].mxu0
  %v653 = vadd.f32 %v103, %v652
  %v654 = vpop.f32.mrb[0].mxu0
  %v655 = vpop.f32.mrb[0].mxu0
  %v656 = vadd.f32 %v103, %v655
  %v657 = vpop.f32.mrb[0].mxu0
  %658 = vmatprep.mubr.bf16.mxu0 %v479
  %659 = vmatmul.mubr.bf16.gmra.mrb[0].mxu0 %v315
  %v660 = vpop.f32.mrb[0].mxu0
  %v661 = vadd.f32 %v103, %v660
  %v662 = vpop.f32.mrb[0].mxu0
  %v663 = vpop.f32.mrb[0].mxu0
  %v664 = vadd.f32 %v103, %v663
  %v665 = vpop.f32.mrb[0].mxu0
  %666 = vmatprep.mubr.bf16.mxu0 %v482
  %667 = vmatmul.mubr.bf16.gmra.mrb[0].mxu0 %v317
  %v668 = vpop.f32.mrb[0].mxu0
  %v669 = vadd.f32 %v103, %v668
  %v670 = vpop.f32.mrb[0].mxu0
  %v671 = vpop.f32.mrb[0].mxu0
  %v672 = vadd.f32 %v103, %v671
  %v673 = vpop.f32.mrb[0].mxu0
  %674 = vmatprep.mubr.bf16.mxu0 %v485
  %675 = vmatmul.mubr.bf16.gmra.mrb[0].mxu0 %v319
  %v676 = vpop.f32.mrb[0].mxu0
  %v677 = vadd.f32 %v103, %v676
  %v678 = vpop.f32.mrb[0].mxu0
  %v679 = vpop.f32.mrb[0].mxu0
  %v680 = vadd.f32 %v103, %v679
  %v681 = vpop.f32.mrb[0].mxu0
  %682 = vmatprep.mubr.bf16.mxu0 %v488
  %683 = vmatmul.mubr.bf16.gmra.mrb[0].mxu0 %v321
  %v684 = vpop.f32.mrb[0].mxu0
  %v685 = vadd.f32 %v103, %v684
  %v686 = vpop.f32.mrb[0].mxu0
  %v687 = vpop.f32.mrb[0].mxu0
  %v688 = vadd.f32 %v103, %v687
  %v689 = vpop.f32.mrb[0].mxu0
  %690 = vmatprep.mubr.bf16.mxu0 %v491
  %691 = vmatmul.mubr.bf16.gmra.mrb[0].mxu0 %v323
  %v692 = vpop.f32.mrb[0].mxu0
  %v693 = vadd.f32 %v103, %v692
  %v694 = vpop.f32.mrb[0].mxu0
  %v695 = vpop.f32.mrb[0].mxu0
  %v696 = vadd.f32 %v103, %v695
  %v697 = vpop.f32.mrb[0].mxu0
  %698 = vmatprep.mubr.bf16.mxu0 %v494
  %699 = vmatmul.mubr.bf16.gmra.mrb[0].mxu0 %v325
  %v700 = vpop.f32.mrb[0].mxu0
  %v701 = vadd.f32 %v103, %v700
  %v702 = vpop.f32.mrb[0].mxu0
  %v703 = vpop.f32.mrb[0].mxu0
  %v704 = vadd.f32 %v103, %v703
  %v705 = vpop.f32.mrb[0].mxu0
  %706 = vmatprep.mubr.bf16.mxu0 %v497
  %707 = vmatmul.mubr.bf16.gmra.mrb[0].mxu0 %v327
  %v708 = vpop.f32.mrb[0].mxu0
  %v709 = vadd.f32 %v103, %v708
  %v710 = vpop.f32.mrb[0].mxu0
  %v711 = vpop.f32.mrb[0].mxu0
  %v712 = vadd.f32 %v103, %v711
  %v713 = vpop.f32.mrb[0].mxu0
  %714 = vmatprep.mubr.bf16.mxu0 %v500
  %715 = vmatmul.mubr.bf16.gmra.mrb[0].mxu0 %v329
  %v716 = vpop.f32.mrb[0].mxu0
  %v717 = vadd.f32 %v103, %v716
  %v718 = vpop.f32.mrb[0].mxu0
  %v719 = vpop.f32.mrb[0].mxu0
  %v720 = vadd.f32 %v103, %v719
  %v721 = vpop.f32.mrb[0].mxu0
  %722 = vmatprep.mubr.bf16.mxu0 %v503
  %723 = vmatmul.mubr.bf16.gmra.mrb[0].mxu0 %v331
  %v724 = vpop.f32.mrb[0].mxu0
  %v725 = vadd.f32 %v103, %v724
  %v726 = vpop.f32.mrb[0].mxu0
  %v727 = vpop.f32.mrb[0].mxu0
  %v728 = vadd.f32 %v103, %v727
  %v729 = vpop.f32.mrb[0].mxu0
  %730 = vmatprep.mubr.bf16.mxu0 %v506
  %731 = vmatmul.mubr.bf16.gmra.mrb[0].mxu0 %v333
  %v732 = vpop.f32.mrb[0].mxu0
  %v733 = vadd.f32 %v103, %v732
  %v734 = vpop.f32.mrb[0].mxu0
  %v735 = vpop.f32.mrb[0].mxu0
  %v736 = vadd.f32 %v103, %v735
  %v737 = vpop.f32.mrb[0].mxu0
  %738 = vmatprep.mubr.bf16.mxu0 %v509
  %739 = vmatmul.mubr.bf16.gmra.mrb[0].mxu0 %v335
  %v740 = vpop.f32.mrb[0].mxu0
  %v741 = vadd.f32 %v103, %v740
  %v742 = vpop.f32.mrb[0].mxu0
  %v743 = vpop.f32.mrb[0].mxu0
  %v744 = vadd.f32 %v103, %v743
  %v745 = vpop.f32.mrb[0].mxu0
  %746 = vmatprep.mubr.bf16.mxu0 %v512
  %747 = vmatmul.mubr.bf16.gmra.mrb[0].mxu0 %v337
  %v748 = vpop.f32.mrb[0].mxu0
  %v749 = vadd.f32 %v103, %v748
  %v750 = vpop.f32.mrb[0].mxu0
  %v751 = vpop.f32.mrb[0].mxu0
  %v752 = vadd.f32 %v103, %v751
  %v753 = vpop.f32.mrb[0].mxu0
  %754 = vmatprep.mubr.bf16.mxu0 %v515
  %755 = vmatmul.mubr.bf16.gmra.mrb[0].mxu0 %v339
  %v756 = vpop.f32.mrb[0].mxu0
  %v757 = vadd.f32 %v103, %v756
  %v758 = vpop.f32.mrb[0].mxu0
  %v759 = vpop.f32.mrb[0].mxu0
  %v760 = vadd.f32 %v103, %v759
  %v761 = vpop.f32.mrb[0].mxu0
  %762 = vmatprep.mubr.bf16.mxu0 %v518
  %763 = vmatmul.mubr.bf16.gmra.mrb[0].mxu0 %v341
  %v764 = vpop.f32.mrb[0].mxu0
  %v765 = vadd.f32 %v103, %v764
  %v766 = vpop.f32.mrb[0].mxu0
  %v767 = vpop.f32.mrb[0].mxu0
  %v768 = vadd.f32 %v103, %v767
  %v769 = vpop.f32.mrb[0].mxu0
  %770 = vmatprep.mubr.bf16.mxu0 %v521
  %771 = vmatmul.mubr.bf16.gmra.mrb[0].mxu0 %v343
  %v772 = vpop.f32.mrb[0].mxu0
  %v773 = vadd.f32 %v103, %v772
  %v774 = vpop.f32.mrb[0].mxu0
  %v775 = vpop.f32.mrb[0].mxu0
  %v776 = vadd.f32 %v103, %v775
  %v777 = vpop.f32.mrb[0].mxu0
  %778 = vmatprep.mubr.bf16.mxu0 %v524
  %779 = vmatmul.mubr.bf16.gmra.mrb[0].mxu0 %v345
  %v780 = vpop.f32.mrb[0].mxu0
  %v781 = vadd.f32 %v103, %v780
  %v782 = vpop.f32.mrb[0].mxu0
  %v783 = vpop.f32.mrb[0].mxu0
  %v784 = vadd.f32 %v103, %v783
  %v785 = vpop.f32.mrb[0].mxu0
  %786 = vmatprep.mubr.bf16.mxu0 %v527
  %787 = vmatmul.mubr.bf16.gmra.mrb[0].mxu0 %v347
  %v788 = vpop.f32.mrb[0].mxu0
  %v789 = vadd.f32 %v103, %v788
  %v790 = vpop.f32.mrb[0].mxu0
  %v791 = vpop.f32.mrb[0].mxu0
  %v792 = vadd.f32 %v103, %v791
  %v793 = vpop.f32.mrb[0].mxu0
  %794 = vmatprep.mubr.bf16.mxu0 %v530
  %795 = vmatmul.mubr.bf16.gmra.mrb[0].mxu0 %v349
  %v796 = vpop.f32.mrb[0].mxu0
  %v797 = vadd.f32 %v103, %v796
  %v798 = vpop.f32.mrb[0].mxu0
  %v799 = vpop.f32.mrb[0].mxu0
  %v800 = vadd.f32 %v103, %v799
  %v801 = vpop.f32.mrb[0].mxu0
  %802 = vmatprep.mubr.bf16.mxu0 %v533
  %803 = vmatmul.mubr.bf16.gmra.mrb[0].mxu0 %v351
  %v804 = vpop.f32.mrb[0].mxu0
  %v805 = vadd.f32 %v103, %v804
  %v806 = vpop.f32.mrb[0].mxu0
  %v807 = vpop.f32.mrb[0].mxu0
  %v808 = vadd.f32 %v103, %v807
  %v809 = vpop.f32.mrb[0].mxu0
  %810 = vmatprep.mubr.bf16.mxu0 %v536
  %811 = vmatmul.mubr.bf16.gmra.mrb[0].mxu0 %v353
  %v812 = vpop.f32.mrb[0].mxu0
  %v813 = vadd.f32 %v103, %v812
  %v814 = vpop.f32.mrb[0].mxu0
  %v815 = vpop.f32.mrb[0].mxu0
  %v816 = vadd.f32 %v103, %v815
  %v817 = vpop.f32.mrb[0].mxu0
  %818 = vmatprep.mubr.bf16.mxu0 %v539
  %819 = vmatmul.mubr.bf16.gmra.mrb[0].mxu0 %v355
  %v820 = vpop.f32.mrb[0].mxu0
  %v821 = vadd.f32 %v103, %v820
  %v822 = vpop.f32.mrb[0].mxu0
  %v823 = vpop.f32.mrb[0].mxu0
  %v824 = vadd.f32 %v103, %v823
  %v825 = vpop.f32.mrb[0].mxu0
  %826 = vmatprep.mubr.bf16.mxu0 %v542
  %827 = vmatmul.mubr.bf16.gmra.mrb[0].mxu0 %v357
  %v828 = vpop.f32.mrb[0].mxu0
  %v829 = vadd.f32 %v103, %v828
  %v830 = vpop.f32.mrb[0].mxu0
  %v831 = vpop.f32.mrb[0].mxu0
  %v832 = vadd.f32 %v103, %v831
  %v833 = vpop.f32.mrb[0].mxu0
  %834 = vmatprep.mubr.bf16.mxu0 %v545
  %835 = vmatmul.mubr.bf16.gmra.mrb[0].mxu0 %v359
  %v836 = vpop.f32.mrb[0].mxu0
  %v837 = vadd.f32 %v103, %v836
  %v838 = vpop.f32.mrb[0].mxu0
  %v839 = vpop.f32.mrb[0].mxu0
  %v840 = vadd.f32 %v103, %v839
  %v841 = vpop.f32.mrb[0].mxu0
  %842 = vdwg.mxu0
  %v843 = vmax.f32 %v589, 0.0
  %v844 = vmax.f32 %v592, 0.0
  %v845 = vmax.f32 %v597, 0.0
  %v846 = vmax.f32 %v600, 0.0
  %v847 = vmax.f32 %v605, 0.0
  %v848 = vmax.f32 %v608, 0.0
  %v849 = vmax.f32 %v613, 0.0
  %v850 = vmax.f32 %v616, 0.0
  %v851 = vmax.f32 %v621, 0.0
  %v852 = vmax.f32 %v624, 0.0
  %v853 = vmax.f32 %v629, 0.0
  %v854 = vmax.f32 %v632, 0.0
  %v855 = vmax.f32 %v637, 0.0
  %v856 = vmax.f32 %v640, 0.0
  %v857 = vmax.f32 %v645, 0.0
  %v858 = vmax.f32 %v648, 0.0
  %v859 = vmax.f32 %v653, 0.0
  %v860 = vmax.f32 %v656, 0.0
  %v861 = vmax.f32 %v661, 0.0
  %v862 = vmax.f32 %v664, 0.0
  %v863 = vmax.f32 %v669, 0.0
  %v864 = vmax.f32 %v672, 0.0
  %v865 = vmax.f32 %v677, 0.0
  %v866 = vmax.f32 %v680, 0.0
  %v867 = vmax.f32 %v685, 0.0
  %v868 = vmax.f32 %v688, 0.0
  %v869 = vmax.f32 %v693, 0.0
  %v870 = vmax.f32 %v696, 0.0
  %v871 = vmax.f32 %v701, 0.0
  %v872 = vmax.f32 %v704, 0.0
  %v873 = vmax.f32 %v709, 0.0
  %v874 = vmax.f32 %v712, 0.0
  %v875 = vmax.f32 %v717, 0.0
  %v876 = vmax.f32 %v720, 0.0
  %v877 = vmax.f32 %v725, 0.0
  %v878 = vmax.f32 %v728, 0.0
  %v879 = vmax.f32 %v733, 0.0
  %v880 = vmax.f32 %v736, 0.0
  %v881 = vmax.f32 %v741, 0.0
  %v882 = vmax.f32 %v744, 0.0
  %v883 = vmax.f32 %v749, 0.0
  %v884 = vmax.f32 %v752, 0.0
  %v885 = vmax.f32 %v757, 0.0
  %v886 = vmax.f32 %v760, 0.0
  %v887 = vmax.f32 %v765, 0.0
  %v888 = vmax.f32 %v768, 0.0
  %v889 = vmax.f32 %v773, 0.0
  %v890 = vmax.f32 %v776, 0.0
  %v891 = vmax.f32 %v781, 0.0
  %v892 = vmax.f32 %v784, 0.0
  %v893 = vmax.f32 %v789, 0.0
  %v894 = vmax.f32 %v792, 0.0
  %v895 = vmax.f32 %v797, 0.0
  %v896 = vmax.f32 %v800, 0.0
  %v897 = vmax.f32 %v805, 0.0
  %v898 = vmax.f32 %v808, 0.0
  %v899 = vmax.f32 %v813, 0.0
  %v900 = vmax.f32 %v816, 0.0
  %v901 = vmax.f32 %v821, 0.0
  %v902 = vmax.f32 %v824, 0.0
  %v903 = vmax.f32 %v829, 0.0
  %v904 = vmax.f32 %v832, 0.0
  %v905 = vmax.f32 %v837, 0.0
  %v906 = vmax.f32 %v840, 0.0
  %v907 = vpack.c.bf16 %v844, %v843
  %v908 = vpack.c.bf16 %v846, %v845
  %v909 = vpack.c.bf16 %v848, %v847
  %v910 = vpack.c.bf16 %v850, %v849
  %v911 = vpack.c.bf16 %v852, %v851
  %v912 = vpack.c.bf16 %v854, %v853
  %v913 = vpack.c.bf16 %v856, %v855
  %v914 = vpack.c.bf16 %v858, %v857
  %v915 = vpack.c.bf16 %v860, %v859
  %v916 = vpack.c.bf16 %v862, %v861
  %v917 = vpack.c.bf16 %v864, %v863
  %v918 = vpack.c.bf16 %v866, %v865
  %v919 = vpack.c.bf16 %v868, %v867
  %v920 = vpack.c.bf16 %v870, %v869
  %v921 = vpack.c.bf16 %v872, %v871
  %v922 = vpack.c.bf16 %v874, %v873
  %v923 = vpack.c.bf16 %v876, %v875
  %v924 = vpack.c.bf16 %v878, %v877
  %v925 = vpack.c.bf16 %v880, %v879
  %v926 = vpack.c.bf16 %v882, %v881
  %v927 = vpack.c.bf16 %v884, %v883
  %v928 = vpack.c.bf16 %v886, %v885
  %v929 = vpack.c.bf16 %v888, %v887
  %v930 = vpack.c.bf16 %v890, %v889
  %v931 = vpack.c.bf16 %v892, %v891
  %v932 = vpack.c.bf16 %v894, %v893
  %v933 = vpack.c.bf16 %v896, %v895
  %v934 = vpack.c.bf16 %v898, %v897
  %v935 = vpack.c.bf16 %v900, %v899
  %v936 = vpack.c.bf16 %v902, %v901
  %v937 = vpack.c.bf16 %v904, %v903
  %v938 = vpack.c.bf16 %v906, %v905
  %v971 = vunpack.c.l.b16 %v907
  %v972 = vunpack.c.h.b16 %v907
  %v973 = vunpack.c.l.b16 %v908
  %v974 = vunpack.c.h.b16 %v908
  %v975 = vunpack.c.l.b16 %v909
  %v976 = vunpack.c.h.b16 %v909
  %v977 = vunpack.c.l.b16 %v910
  %v978 = vunpack.c.h.b16 %v910
  %v979 = vunpack.c.l.b16 %v911
  %v980 = vunpack.c.h.b16 %v911
  %v981 = vunpack.c.l.b16 %v912
  %v982 = vunpack.c.h.b16 %v912
  %v983 = vunpack.c.l.b16 %v913
  %v984 = vunpack.c.h.b16 %v913
  %v985 = vunpack.c.l.b16 %v914
  %v986 = vunpack.c.h.b16 %v914
  %v987 = vunpack.c.l.b16 %v915
  %v988 = vunpack.c.h.b16 %v915
  %v989 = vunpack.c.l.b16 %v916
  %v990 = vunpack.c.h.b16 %v916
  %v991 = vunpack.c.l.b16 %v917
  %v992 = vunpack.c.h.b16 %v917
  %v993 = vunpack.c.l.b16 %v918
  %v994 = vunpack.c.h.b16 %v918
  %v995 = vunpack.c.l.b16 %v919
  %v996 = vunpack.c.h.b16 %v919
  %v997 = vunpack.c.l.b16 %v920
  %v998 = vunpack.c.h.b16 %v920
  %v999 = vunpack.c.l.b16 %v921
  %v1000 = vunpack.c.h.b16 %v921
  %v1001 = vunpack.c.l.b16 %v922
  %v1002 = vunpack.c.h.b16 %v922
  %v1003 = vunpack.c.l.b16 %v923
  %v1004 = vunpack.c.h.b16 %v923
  %v1005 = vunpack.c.l.b16 %v924
  %v1006 = vunpack.c.h.b16 %v924
  %v1007 = vunpack.c.l.b16 %v925
  %v1008 = vunpack.c.h.b16 %v925
  %v1009 = vunpack.c.l.b16 %v926
  %v1010 = vunpack.c.h.b16 %v926
  %v1011 = vunpack.c.l.b16 %v927
  %v1012 = vunpack.c.h.b16 %v927
  %v1013 = vunpack.c.l.b16 %v928
  %v1014 = vunpack.c.h.b16 %v928
  %v1015 = vunpack.c.l.b16 %v929
  %v1016 = vunpack.c.h.b16 %v929
  %v1017 = vunpack.c.l.b16 %v930
  %v1018 = vunpack.c.h.b16 %v930
  %v1019 = vunpack.c.l.b16 %v931
  %v1020 = vunpack.c.h.b16 %v931
  %v1021 = vunpack.c.l.b16 %v932
  %v1022 = vunpack.c.h.b16 %v932
  %v1023 = vunpack.c.l.b16 %v933
  %v1024 = vunpack.c.h.b16 %v933
  %v1025 = vunpack.c.l.b16 %v934
  %v1026 = vunpack.c.h.b16 %v934
  %v1027 = vunpack.c.l.b16 %v935
  %v1028 = vunpack.c.h.b16 %v935
  %v1029 = vunpack.c.l.b16 %v936
  %v1030 = vunpack.c.h.b16 %v936
  %v1031 = vunpack.c.l.b16 %v937
  %v1032 = vunpack.c.h.b16 %v937
  %v1033 = vunpack.c.l.b16 %v938
  %v1034 = vunpack.c.h.b16 %v938
  %v1035 = vpack.c.b16 %v971, %v971
  %v1036 = vpack.c.b16 %v972, %v972
  %v1037 = vpack.c.b16 %v973, %v973
  %v1038 = vpack.c.b16 %v974, %v974
  %v1039 = vpack.c.b16 %v975, %v975
  %v1040 = vpack.c.b16 %v976, %v976
  %v1041 = vpack.c.b16 %v977, %v977
  %v1042 = vpack.c.b16 %v978, %v978
  %v1043 = vpack.c.b16 %v979, %v979
  %v1044 = vpack.c.b16 %v980, %v980
  %v1045 = vpack.c.b16 %v981, %v981
  %v1046 = vpack.c.b16 %v982, %v982
  %v1047 = vpack.c.b16 %v983, %v983
  %v1048 = vpack.c.b16 %v984, %v984
  %v1049 = vpack.c.b16 %v985, %v985
  %v1050 = vpack.c.b16 %v986, %v986
  %v1051 = vpack.c.b16 %v987, %v987
  %v1052 = vpack.c.b16 %v988, %v988
  %v1053 = vpack.c.b16 %v989, %v989
  %v1054 = vpack.c.b16 %v990, %v990
  %v1055 = vpack.c.b16 %v991, %v991
  %v1056 = vpack.c.b16 %v992, %v992
  %v1057 = vpack.c.b16 %v993, %v993
  %v1058 = vpack.c.b16 %v994, %v994
  %v1059 = vpack.c.b16 %v995, %v995
  %v1060 = vpack.c.b16 %v996, %v996
  %v1061 = vpack.c.b16 %v997, %v997
  %v1062 = vpack.c.b16 %v998, %v998
  %v1063 = vpack.c.b16 %v999, %v999
  %v1064 = vpack.c.b16 %v1000, %v1000
  %v1065 = vpack.c.b16 %v1001, %v1001
  %v1066 = vpack.c.b16 %v1002, %v1002
  %v1067 = vpack.c.b16 %v1003, %v1003
  %v1068 = vpack.c.b16 %v1004, %v1004
  %v1069 = vpack.c.b16 %v1005, %v1005
  %v1070 = vpack.c.b16 %v1006, %v1006
  %v1071 = vpack.c.b16 %v1007, %v1007
  %v1072 = vpack.c.b16 %v1008, %v1008
  %v1073 = vpack.c.b16 %v1009, %v1009
  %v1074 = vpack.c.b16 %v1010, %v1010
  %v1075 = vpack.c.b16 %v1011, %v1011
  %v1076 = vpack.c.b16 %v1012, %v1012
  %v1077 = vpack.c.b16 %v1013, %v1013
  %v1078 = vpack.c.b16 %v1014, %v1014
  %v1079 = vpack.c.b16 %v1015, %v1015
  %v1080 = vpack.c.b16 %v1016, %v1016
  %v1081 = vpack.c.b16 %v1017, %v1017
  %v1082 = vpack.c.b16 %v1018, %v1018
  %v1083 = vpack.c.b16 %v1019, %v1019
  %v1084 = vpack.c.b16 %v1020, %v1020
  %v1085 = vpack.c.b16 %v1021, %v1021
  %v1086 = vpack.c.b16 %v1022, %v1022
  %v1087 = vpack.c.b16 %v1023, %v1023
  %v1088 = vpack.c.b16 %v1024, %v1024
  %v1089 = vpack.c.b16 %v1025, %v1025
  %v1090 = vpack.c.b16 %v1026, %v1026
  %v1091 = vpack.c.b16 %v1027, %v1027
  %v1092 = vpack.c.b16 %v1028, %v1028
  %v1093 = vpack.c.b16 %v1029, %v1029
  %v1094 = vpack.c.b16 %v1030, %v1030
  %v1095 = vpack.c.b16 %v1031, %v1031
  %v1096 = vpack.c.b16 %v1032, %v1032
  %v1097 = vpack.c.b16 %v1033, %v1033
  %v1098 = vpack.c.b16 %v1034, %v1034
  %vm1163 = vcmask 519168
  %1164 = vst.msk [vmem:[%s3] sm:$0xf] %vm1163, %v1035
  %1165 = vst.msk [vmem:[%s3 + $0x4] sm:$0xf] %vm1163, %v1036
  %1166 = vst.msk [vmem:[%s3 + $0x8] sm:$0xf] %vm1163, %v1037
  %1167 = vst.msk [vmem:[%s3 + $0xc] sm:$0xf] %vm1163, %v1038
  %1168 = vst.msk [vmem:[%s3 + $0x10] sm:$0xf] %vm1163, %v1039
  %1169 = vst.msk [vmem:[%s3 + $0x14] sm:$0xf] %vm1163, %v1040
  %1170 = vst.msk [vmem:[%s3 + $0x18] sm:$0xf] %vm1163, %v1041
  %1171 = vst.msk [vmem:[%s3 + $0x1c] sm:$0xf] %vm1163, %v1042
  %1172 = vst.msk [vmem:[%s3 + $0x20] sm:$0xf] %vm1163, %v1043
  %1173 = vst.msk [vmem:[%s3 + $0x24] sm:$0xf] %vm1163, %v1044
  %1174 = vst.msk [vmem:[%s3 + $0x28] sm:$0xf] %vm1163, %v1045
  %1175 = vst.msk [vmem:[%s3 + $0x2c] sm:$0xf] %vm1163, %v1046
  %1176 = vst.msk [vmem:[%s3 + $0x30] sm:$0xf] %vm1163, %v1047
  %1177 = vst.msk [vmem:[%s3 + $0x34] sm:$0xf] %vm1163, %v1048
  %1178 = vst.msk [vmem:[%s3 + $0x38] sm:$0xf] %vm1163, %v1049
  %1179 = vst.msk [vmem:[%s3 + $0x3c] sm:$0xf] %vm1163, %v1050
  %1180 = vst.msk [vmem:[%s3 + $0x40] sm:$0xf] %vm1163, %v1051
  %1181 = vst.msk [vmem:[%s3 + $0x44] sm:$0xf] %vm1163, %v1052
  %1182 = vst.msk [vmem:[%s3 + $0x48] sm:$0xf] %vm1163, %v1053
  %1183 = vst.msk [vmem:[%s3 + $0x4c] sm:$0xf] %vm1163, %v1054
  %1184 = vst.msk [vmem:[%s3 + $0x50] sm:$0xf] %vm1163, %v1055
  %1185 = vst.msk [vmem:[%s3 + $0x54] sm:$0xf] %vm1163, %v1056
  %1186 = vst.msk [vmem:[%s3 + $0x58] sm:$0xf] %vm1163, %v1057
  %1187 = vst.msk [vmem:[%s3 + $0x5c] sm:$0xf] %vm1163, %v1058
  %1188 = vst.msk [vmem:[%s3 + $0x60] sm:$0xf] %vm1163, %v1059
  %1189 = vst.msk [vmem:[%s3 + $0x64] sm:$0xf] %vm1163, %v1060
  %1190 = vst.msk [vmem:[%s3 + $0x68] sm:$0xf] %vm1163, %v1061
  %1191 = vst.msk [vmem:[%s3 + $0x6c] sm:$0xf] %vm1163, %v1062
  %1192 = vst.msk [vmem:[%s3 + $0x70] sm:$0xf] %vm1163, %v1063
  %1193 = vst.msk [vmem:[%s3 + $0x74] sm:$0xf] %vm1163, %v1064
  %1194 = vst.msk [vmem:[%s3 + $0x78] sm:$0xf] %vm1163, %v1065
  %1195 = vst.msk [vmem:[%s3 + $0x7c] sm:$0xf] %vm1163, %v1066
  %1196 = vst.msk [vmem:[%s3 + $0x80] sm:$0xf] %vm1163, %v1067
  %1197 = vst.msk [vmem:[%s3 + $0x84] sm:$0xf] %vm1163, %v1068
  %1198 = vst.msk [vmem:[%s3 + $0x88] sm:$0xf] %vm1163, %v1069
  %1199 = vst.msk [vmem:[%s3 + $0x8c] sm:$0xf] %vm1163, %v1070
  %1200 = vst.msk [vmem:[%s3 + $0x90] sm:$0xf] %vm1163, %v1071
  %1201 = vst.msk [vmem:[%s3 + $0x94] sm:$0xf] %vm1163, %v1072
  %1202 = vst.msk [vmem:[%s3 + $0x98] sm:$0xf] %vm1163, %v1073
  %1203 = vst.msk [vmem:[%s3 + $0x9c] sm:$0xf] %vm1163, %v1074
  %1204 = vst.msk [vmem:[%s3 + $0xa0] sm:$0xf] %vm1163, %v1075
  %1205 = vst.msk [vmem:[%s3 + $0xa4] sm:$0xf] %vm1163, %v1076
  %1206 = vst.msk [vmem:[%s3 + $0xa8] sm:$0xf] %vm1163, %v1077
  %1207 = vst.msk [vmem:[%s3 + $0xac] sm:$0xf] %vm1163, %v1078
  %1208 = vst.msk [vmem:[%s3 + $0xb0] sm:$0xf] %vm1163, %v1079
  %1209 = vst.msk [vmem:[%s3 + $0xb4] sm:$0xf] %vm1163, %v1080
  %1210 = vst.msk [vmem:[%s3 + $0xb8] sm:$0xf] %vm1163, %v1081
  %1211 = vst.msk [vmem:[%s3 + $0xbc] sm:$0xf] %vm1163, %v1082
  %1212 = vst.msk [vmem:[%s3 + $0xc0] sm:$0xf] %vm1163, %v1083
  %1213 = vst.msk [vmem:[%s3 + $0xc4] sm:$0xf] %vm1163, %v1084
  %1214 = vst.msk [vmem:[%s3 + $0xc8] sm:$0xf] %vm1163, %v1085
  %1215 = vst.msk [vmem:[%s3 + $0xcc] sm:$0xf] %vm1163, %v1086
  %1216 = vst.msk [vmem:[%s3 + $0xd0] sm:$0xf] %vm1163, %v1087
  %1217 = vst.msk [vmem:[%s3 + $0xd4] sm:$0xf] %vm1163, %v1088
  %1218 = vst.msk [vmem:[%s3 + $0xd8] sm:$0xf] %vm1163, %v1089
  %1219 = vst.msk [vmem:[%s3 + $0xdc] sm:$0xf] %vm1163, %v1090
  %1220 = vst.msk [vmem:[%s3 + $0xe0] sm:$0xf] %vm1163, %v1091
  %1221 = vst.msk [vmem:[%s3 + $0xe4] sm:$0xf] %vm1163, %v1092
  %1222 = vst.msk [vmem:[%s3 + $0xe8] sm:$0xf] %vm1163, %v1093
  %1223 = vst.msk [vmem:[%s3 + $0xec] sm:$0xf] %vm1163, %v1094
  %1224 = vst.msk [vmem:[%s3 + $0xf0] sm:$0xf] %vm1163, %v1095
  %1225 = vst.msk [vmem:[%s3 + $0xf4] sm:$0xf] %vm1163, %v1096
  %1226 = vst.msk [vmem:[%s3 + $0xf8] sm:$0xf] %vm1163, %v1097
  %1227 = vst.msk [vmem:[%s3 + $0xfc] sm:$0xf] %vm1163, %v1098
  // Predicated region
  $region14: #{image_encoder_forward.2} parent=0 // pred_check
    _
  $region15: #{image_encoder_forward.2} parent=0 // pred_check_branch
    %1229 = sbr.rel (0) target = $region17
  $region16: #{image_encoder_forward.2} parent=0 // pred_region
    _
  $region17: #{image_encoder_forward.2} parent=0 // pred_fallthru
    _
  // Predicated region
  $region18: #{image_encoder_forward.2} parent=0 // pred_check
    _
  $region19: #{image_encoder_forward.2} parent=0 // pred_check_branch
    %1231 = sbr.rel (0) target = $region21
  $region20: #{image_encoder_forward.2} parent=0 // pred_region
    _
  $region21: #{image_encoder_forward.2} parent=0 // pred_fallthru
    _

// kernel: image_encoder_forward.3
$region0: #{image_encoder_forward.3}
  #allocation0 [shape = 'u32[]', space=smem, size = 0x4, offset = 0x4, fixed_abs, tag = 'smem constant byte address 0x4 - core index']
  #allocation1 [shape = 'u32[144,128]{1,0:T(1,128)}', space=vmem, size = 0x12000, scoped, tag = 'internal scratch']
  #allocation2 [shape = 'bf16[128,64]{1,0:T(16,128)(2,1)}', space=vmem, size = 0x8000, scoped, tag = 'scratch operand']
  %s0 = inlined_call_operand.vmem [shape: bf16[2,1,152,64], index: 0, kind: input, shape index: {}]
  %s1 = inlined_call_operand.vmem [shape: bf16[576,64], index: 1, kind: input, shape index: {}]
  %s2 = inlined_call_operand.vmem [shape: f32[1,64], index: 2, kind: input, shape index: {}]
  %s3 = inlined_call_operand.vmem [shape: bf16[576,64], index: 3, kind: input, shape index: {}]
  %s4 = inlined_call_operand.vmem [shape: f32[1,64], index: 4, kind: input, shape index: {}]
  %s5 = inlined_call_operand.vmem [shape: bf16[2,1,96,64], index: 5, kind: output, shape index: {}]
  %s6 = sld [smem:[#allocation0]]
  $region57: #{image_encoder_forward.3} parent=0
    _
  %s8 = ssub.s32 1, %s6
  %s9 = scalar_select 0, %s8, %s6
  loop: start=0, step=1, limit=4
  $region2: #{image_encoder_forward.3} parent=0 // loop_pre_header
    _
  $region3: #{image_encoder_forward.3} parent=0 // loop_header
    %s11 = sphi 0, %s15
    %p12 = scmp.ge.s32.totalorder %s11, 4
    %s18 = sphi 0, %s30
    %s19 = sphi 0, %s26
    %s20 = sphi 0, %s18
    %s21 = sphi 0, %s19
    %s22 = sphi 0, %s20
    %s23 = sphi 0, %s21
    %s35 = sphi 0, %s37
    %s38 = sphi 0, %s35
    %s39 = sphi 0, %s38
    %s55 = sphi 0, %s39
    %s59 = sphi 0, %s59
    %s61 = sphi 0, %s59
    %s62 = sphi 0, %s61
    %s76 = sphi 0, %s62
    %s80 = sphi 0, %s80
    %s82 = sphi 0, %s80
    %s83 = sphi 0, %s82
    %s97 = sphi 0, %s83
    %s101 = sphi 0, %s101
    %s103 = sphi 0, %s101
    %s104 = sphi 0, %s103
    %s118 = sphi 0, %s104
    %s122 = sphi 0, %s122
    %s124 = sphi 0, %s122
    %s125 = sphi 0, %s124
    %s139 = sphi 0, %s125
    %s147 = sphi 0, %s149
    %s150 = sphi 0, %s147
    %s151 = sphi 0, %s150
    %s167 = sphi 0, %s151
  $region4: #{image_encoder_forward.3} parent=0 // loop_header_branch
    %14 = sbr.rel (%p12) target = $region8
  $region5: #{image_encoder_forward.3} parent=0 // loop_body
    %s16 = ssub.s32 %s11, 1
    %s17 = ssub.s32 %s11, 2
    %s24 = sadd.s32 1, %s19
    %p25 = scmp.ge.s32.totalorder %s24, 1
    %s26 = scalar_select %p25, 0, %s24
    %s27 = sadd.s32 1, %s18
    %s28 = scalar_select %p25, %s27, %s18
    %p29 = scmp.ge.s32.totalorder %s28, 2
    %s30 = scalar_select %p29, 0, %s28
    %s31 = ssub.s32 %s18, %s30
    %s32 = ssub.s32 %s19, %s26
    %s33 = sor.u32 %s31, %s32
    %p34 = scmp.eq.s32.totalorder %s33, 0
    %s36 = sadd.s32 %s35, 1
    %s37 = scalar_select %p34, %s35, %s36
    %p40 = pneg %p34
    %p41 = scmp.eq.s32.totalorder %s11, 1
    %p42 = por %p40, %p41
    %p43 = scmp.ne.s32.totalorder %s35, %s38
    %p44 = scmp.eq.s32.totalorder %s11, 0
    %p45 = por %p43, %p44
    %p46 = scmp.ne.s32.totalorder %s35, %s38
    %p47 = scmp.eq.s32.totalorder %s16, 1
    %p48 = por %p46, %p47
    %p49 = scmp.ne.s32.totalorder %s38, %s39
    %p50 = scmp.eq.s32.totalorder %s16, 0
    %p51 = por %p49, %p50
    %p52 = scmp.ne.s32.totalorder %s38, %s39
    %p53 = scmp.eq.s32.totalorder %s17, 1
    %p54 = por %p52, %p53
    %p56 = scmp.ne.s32.totalorder %s39, %s55
    %p57 = scmp.eq.s32.totalorder %s17, 0
    %p58 = por %p56, %p57
    %s60 = sadd.s32 %s59, 1
    %p63 = scmp.eq.s32.totalorder %s11, 1
    %p64 = scmp.ne.s32.totalorder %s59, %s61
    %p65 = scmp.eq.s32.totalorder %s11, 0
    %p66 = por %p64, %p65
    %p67 = scmp.ne.s32.totalorder %s59, %s61
    %p68 = scmp.eq.s32.totalorder %s16, 1
    %p69 = por %p67, %p68
    %p70 = scmp.ne.s32.totalorder %s61, %s62
    %p71 = scmp.eq.s32.totalorder %s16, 0
    %p72 = por %p70, %p71
    %p73 = scmp.ne.s32.totalorder %s61, %s62
    %p74 = scmp.eq.s32.totalorder %s17, 1
    %p75 = por %p73, %p74
    %p77 = scmp.ne.s32.totalorder %s62, %s76
    %p78 = scmp.eq.s32.totalorder %s17, 0
    %p79 = por %p77, %p78
    %s81 = sadd.s32 %s80, 1
    %p84 = scmp.eq.s32.totalorder %s11, 1
    %p85 = scmp.ne.s32.totalorder %s80, %s82
    %p86 = scmp.eq.s32.totalorder %s11, 0
    %p87 = por %p85, %p86
    %p88 = scmp.ne.s32.totalorder %s80, %s82
    %p89 = scmp.eq.s32.totalorder %s16, 1
    %p90 = por %p88, %p89
    %p91 = scmp.ne.s32.totalorder %s82, %s83
    %p92 = scmp.eq.s32.totalorder %s16, 0
    %p93 = por %p91, %p92
    %p94 = scmp.ne.s32.totalorder %s82, %s83
    %p95 = scmp.eq.s32.totalorder %s17, 1
    %p96 = por %p94, %p95
    %p98 = scmp.ne.s32.totalorder %s83, %s97
    %p99 = scmp.eq.s32.totalorder %s17, 0
    %p100 = por %p98, %p99
    %s102 = sadd.s32 %s101, 1
    %p105 = scmp.eq.s32.totalorder %s11, 1
    %p106 = scmp.ne.s32.totalorder %s101, %s103
    %p107 = scmp.eq.s32.totalorder %s11, 0
    %p108 = por %p106, %p107
    %p109 = scmp.ne.s32.totalorder %s101, %s103
    %p110 = scmp.eq.s32.totalorder %s16, 1
    %p111 = por %p109, %p110
    %p112 = scmp.ne.s32.totalorder %s103, %s104
    %p113 = scmp.eq.s32.totalorder %s16, 0
    %p114 = por %p112, %p113
    %p115 = scmp.ne.s32.totalorder %s103, %s104
    %p116 = scmp.eq.s32.totalorder %s17, 1
    %p117 = por %p115, %p116
    %p119 = scmp.ne.s32.totalorder %s104, %s118
    %p120 = scmp.eq.s32.totalorder %s17, 0
    %p121 = por %p119, %p120
    %s123 = sadd.s32 %s122, 1
    %p126 = scmp.eq.s32.totalorder %s11, 1
    %p127 = scmp.ne.s32.totalorder %s122, %s124
    %p128 = scmp.eq.s32.totalorder %s11, 0
    %p129 = por %p127, %p128
    %p130 = scmp.ne.s32.totalorder %s122, %s124
    %p131 = scmp.eq.s32.totalorder %s16, 1
    %p132 = por %p130, %p131
    %p133 = scmp.ne.s32.totalorder %s124, %s125
    %p134 = scmp.eq.s32.totalorder %s16, 0
    %p135 = por %p133, %p134
    %p136 = scmp.ne.s32.totalorder %s124, %s125
    %p137 = scmp.eq.s32.totalorder %s17, 1
    %p138 = por %p136, %p137
    %p140 = scmp.ne.s32.totalorder %s125, %s139
    %p141 = scmp.eq.s32.totalorder %s17, 0
    %p142 = por %p140, %p141
    %s143 = ssub.s32 %s18, %s30
    %s144 = ssub.s32 %s19, %s26
    %s145 = sor.u32 %s143, %s144
    %p146 = scmp.eq.s32.totalorder %s145, 0
    %s148 = sadd.s32 %s147, 1
    %s149 = scalar_select %p146, %s147, %s148
    %p152 = pneg %p146
    %p153 = scmp.eq.s32.totalorder %s11, 1
    %p154 = por %p152, %p153
    %p155 = scmp.ne.s32.totalorder %s147, %s150
    %p156 = scmp.eq.s32.totalorder %s11, 0
    %p157 = por %p155, %p156
    %p158 = scmp.ne.s32.totalorder %s147, %s150
    %p159 = scmp.eq.s32.totalorder %s16, 1
    %p160 = por %p158, %p159
    %p161 = scmp.ne.s32.totalorder %s150, %s151
    %p162 = scmp.eq.s32.totalorder %s16, 0
    %p163 = por %p161, %p162
    %p164 = scmp.ne.s32.totalorder %s150, %s151
    %p165 = scmp.eq.s32.totalorder %s17, 1
    %p166 = por %p164, %p165
    %p168 = scmp.ne.s32.totalorder %s151, %s167
    %p169 = scmp.eq.s32.totalorder %s17, 0
    %p170 = por %p168, %p169
    %p171 = scmp.le.s32.totalorder 1, %s11
    %p172 = scmp.lt.s32.totalorder %s11, 3
    %p173 = pnand %p171, %p172
    %p174 = pneg %p173
    // Predicated region
    $region9: #{image_encoder_forward.3} parent=5 // pred_check
      _
    $region10: #{image_encoder_forward.3} parent=5 // pred_check_branch
      %176 = sbr.rel (%p173) target = $region12
    $region11: #{image_encoder_forward.3} parent=5 // pred_region
      %s177 = ssub.s32 %s11, 1
      // Predicated region
      $region13: #{image_encoder_forward.3} parent=11 // pred_check
        %p178 = pneg %p72
      $region14: #{image_encoder_forward.3} parent=11 // pred_check_branch
        %180 = sbr.rel (%p178) target = $region16
      $region15: #{image_encoder_forward.3} parent=11 // pred_region
        _
      $region16: #{image_encoder_forward.3} parent=11 // pred_fallthru
        _
      // Predicated region
      $region17: #{image_encoder_forward.3} parent=11 // pred_check
        %p181 = pneg %p93
      $region18: #{image_encoder_forward.3} parent=11 // pred_check_branch
        %183 = sbr.rel (%p181) target = $region20
      $region19: #{image_encoder_forward.3} parent=11 // pred_region
        _
      $region20: #{image_encoder_forward.3} parent=11 // pred_fallthru
        _
      // Predicated region
      $region21: #{image_encoder_forward.3} parent=11 // pred_check
        %p184 = pneg %p114
      $region22: #{image_encoder_forward.3} parent=11 // pred_check_branch
        %186 = sbr.rel (%p184) target = $region24
      $region23: #{image_encoder_forward.3} parent=11 // pred_region
        _
      $region24: #{image_encoder_forward.3} parent=11 // pred_fallthru
        _
      // Predicated region
      $region25: #{image_encoder_forward.3} parent=11 // pred_check
        %p187 = pneg %p135
      $region26: #{image_encoder_forward.3} parent=11 // pred_check_branch
        %189 = sbr.rel (%p187) target = $region28
      $region27: #{image_encoder_forward.3} parent=11 // pred_region
        _
      $region28: #{image_encoder_forward.3} parent=11 // pred_fallthru
        _
    $region12: #{image_encoder_forward.3} parent=5 // pred_fallthru
      _
    %p190 = scmp.lt.s32.totalorder %s11, 2
    // Predicated region
    $region29: #{image_encoder_forward.3} parent=5 // pred_check
      %p191 = pneg %p190
    $region30: #{image_encoder_forward.3} parent=5 // pred_check_branch
      %193 = sbr.rel (%p191) target = $region32
    $region31: #{image_encoder_forward.3} parent=5 // pred_region
      // Predicated region
      $region33: #{image_encoder_forward.3} parent=31 // pred_check
        %p194 = pneg %p45
      $region34: #{image_encoder_forward.3} parent=31 // pred_check_branch
        %196 = sbr.rel (%p194) target = $region36
      $region35: #{image_encoder_forward.3} parent=31 // pred_region
        %p197 = scmp.lt.s32.totalorder %s18, 1
        %s198 = scalar_select %p197, %s18, 1
        %p199 = scmp.lt.s32.totalorder %s19, 0
        %s200 = scalar_select %p199, %s19, 0
        %s201 = smul.addr %s200, 19
        %s202 = smul.addr %s198, 19
        %s203 = sadd.s32 %s201, %s202
        %s204 = smul.addr %s203, 4
        %s205 = scalar_lea.vmem %s0, %s204
      $region36: #{image_encoder_forward.3} parent=31 // pred_fallthru
        _
    $region32: #{image_encoder_forward.3} parent=5 // pred_fallthru
      _
    %p206 = scmp.le.s32.totalorder 1, %s11
    %p207 = scmp.lt.s32.totalorder %s11, 3
    %p208 = pnand %p206, %p207
    %p209 = pneg %p208
    // Predicated region
    $region37: #{image_encoder_forward.3} parent=5 // pred_check
      _
    $region38: #{image_encoder_forward.3} parent=5 // pred_check_branch
      %211 = sbr.rel (%p208) target = $region40
    $region39: #{image_encoder_forward.3} parent=5 // pred_region
      %s212 = ssub.s32 %s11, 1
      %p213 = scmp.lt.s32.totalorder %s20, 1
      %s214 = scalar_select %p213, %s20, 1
      %p215 = scmp.lt.s32.totalorder %s21, 0
      %s216 = scalar_select %p215, %s21, 0
      %s217 = smul.addr %s216, 19
      %s218 = smul.addr %s214, 19
      %s219 = sadd.s32 %s217, %s218
      %s220 = smul.addr %s219, 4
      %s221 = scalar_lea.vmem %s0, %s220
      %p222 = pneg %p51
      %p223 = pneg %p48
      %p224 = pneg %p72
      %p225 = pneg %p69
      %p226 = pneg %p93
      %p227 = pneg %p90
      %p228 = pneg %p114
      %p229 = pneg %p111
      %p230 = pneg %p135
      %p231 = pneg %p132
      %p232 = pneg %p163
      %p233 = pneg %p160
      %p234 = scmp.lt.s32.totalorder %s20, 1
      %s235 = scalar_select %p234, %s20, 1
      %p236 = scmp.lt.s32.totalorder %s21, 0
      %s237 = scalar_select %p236, %s21, 0
      %s238 = smul.addr %s237, 12
      %s239 = smul.addr %s235, 12
      %s240 = sadd.s32 %s238, %s239
      %s241 = smul.addr %s240, 4
      %s242 = scalar_lea.vmem %s5, %s241
      %p243 = scmp.lt.s32.totalorder %s20, 1
      %s244 = scalar_select %p243, %s20, 1
      %p245 = scmp.lt.s32.totalorder %s21, 0
      %s246 = scalar_select %p245, %s21, 0
      %s247 = smul.addr %s246, 19
      %s248 = smul.addr %s244, 19
      %s249 = sadd.s32 %s247, %s248
      %s250 = smul.addr %s249, 4
      %s251 = scalar_lea.vmem %s0, %s250
      %p252 = scmp.lt.s32.totalorder %s20, 1
      %s253 = scalar_select %p252, %s20, 1
      %p254 = scmp.lt.s32.totalorder %s21, 0
      %s255 = scalar_select %p254, %s21, 0
      %s256 = smul.addr %s255, 12
      %s257 = smul.addr %s253, 12
      %s258 = sadd.s32 %s256, %s257
      %s259 = smul.addr %s258, 4
      %s260 = scalar_lea.vmem %s5, %s259
      %vm262 = vcmask 523268
      %263 = vst.msk [vmem:[#allocation2 + $0x38] sm:$0xf0] %vm262, 0
      %v264 = vld [vmem:[%s251] sm:$0xf]
      %v265 = vld [vmem:[%s251 + $0x4] sm:$0xf]
      %v266 = vld [vmem:[%s251 + $0x8] sm:$0xf]
      %v267 = vld [vmem:[%s251 + $0xc] sm:$0xf]
      %v268 = vld [vmem:[%s251 + $0x10] sm:$0xf]
      %v269 = vld [vmem:[%s251 + $0x14] sm:$0xf]
      %v270 = vld [vmem:[%s251 + $0x18] sm:$0xf]
      %v271 = vld [vmem:[%s251 + $0x1c] sm:$0xf]
      %v272 = vld [vmem:[%s251 + $0x20] sm:$0xf]
      %v273 = vld [vmem:[%s251 + $0x24] sm:$0xf]
      %v274 = vld [vmem:[%s251 + $0x28] sm:$0xf]
      %v275 = vld [vmem:[%s251 + $0x2c] sm:$0xf]
      %v276 = vld [vmem:[%s251 + $0x30] sm:$0xf]
      %v277 = vld [vmem:[%s251 + $0x34] sm:$0xf]
      %v278 = vld [vmem:[%s251 + $0x38] sm:$0xf]
      %v279 = vld [vmem:[%s251 + $0x3c] sm:$0x1]
      %v280 = vld [vmem:[%s251] sm:$0xe]
      %v281 = vld [vmem:[%s251 + $0x4] sm:$0xc]
      %v282 = vld [vmem:[%s251 + $0x3c] sm:$0xf]
      %v283 = vld [vmem:[%s251 + $0x40] sm:$0x3]
      %v284 = vld [vmem:[%s251 + $0x40] sm:$0x7]
      %v285 = vld [vmem:[%s251 + $0x4] sm:$0x8]
      %v286 = vld [vmem:[%s251 + $0x40] sm:$0xf]
      %v287 = vld [vmem:[%s251 + $0x44] sm:$0xf]
      %v288 = vld [vmem:[%s251 + $0x48] sm:$0x1]
      %v289 = vld [vmem:[%s251 + $0xc] sm:$0xe]
      %v305 = vunpack.c.l.b16 %v264
      %v306 = vunpack.c.l.b16 %v265
      %v307 = vunpack.c.l.b16 %v266
      %v308 = vunpack.c.l.b16 %v267
      %v309 = vunpack.c.l.b16 %v268
      %v310 = vunpack.c.l.b16 %v269
      %v311 = vunpack.c.l.b16 %v270
      %v312 = vunpack.c.l.b16 %v271
      %v313 = vunpack.c.l.b16 %v272
      %v314 = vunpack.c.l.b16 %v273
      %v315 = vunpack.c.l.b16 %v274
      %v316 = vunpack.c.l.b16 %v275
      %v317 = vunpack.c.l.b16 %v276
      %v318 = vunpack.c.l.b16 %v277
      %v319 = vunpack.c.l.b16 %v278
      %v320 = vpack.c.b16 %v306, %v305
      %v321 = vpack.c.b16 %v308, %v307
      %v322 = vpack.c.b16 %v310, %v309
      %v323 = vpack.c.b16 %v312, %v311
      %v324 = vpack.c.b16 %v314, %v313
      %v325 = vpack.c.b16 %v316, %v315
      %v326 = vpack.c.b16 %v318, %v317
      %v327 = vpack.c.b16 %v319, %v319
      %v329 = vunpack.c.l.b16 %v279
      %v330 = vpack.c.b16 %v329, %v319
      %vm331 = vsmask.f32 7424
      %v333 = vshrl.u32 %v320, 16
      %v335 = vshll.u32 %v320, 16
      %v337 = vrot.slane %v335, 1
      %v338 = vor.u32 %v333, %v337
      %v340 = vshll.u32 %v321, 16
      %v342 = vrot.slane %v340, 1
      %v343 = vsel %vm331, %v338, %v342
      %v344 = vshrl.u32 %v321, 16
      %v346 = vor.u32 %v344, %v342
      %v348 = vshll.u32 %v322, 16
      %v350 = vrot.slane %v348, 1
      %v351 = vsel %vm331, %v346, %v350
      %v352 = vshrl.u32 %v322, 16
      %v354 = vor.u32 %v352, %v350
      %v356 = vshll.u32 %v323, 16
      %v358 = vrot.slane %v356, 1
      %v359 = vsel %vm331, %v354, %v358
      %v360 = vshrl.u32 %v323, 16
      %v362 = vor.u32 %v360, %v358
      %v364 = vshll.u32 %v324, 16
      %v366 = vrot.slane %v364, 1
      %v367 = vsel %vm331, %v362, %v366
      %v368 = vshrl.u32 %v324, 16
      %v370 = vor.u32 %v368, %v366
      %v372 = vshll.u32 %v325, 16
      %v374 = vrot.slane %v372, 1
      %v375 = vsel %vm331, %v370, %v374
      %v376 = vshrl.u32 %v325, 16
      %v378 = vor.u32 %v376, %v374
      %v380 = vshll.u32 %v326, 16
      %v382 = vrot.slane %v380, 1
      %v383 = vsel %vm331, %v378, %v382
      %v384 = vshrl.u32 %v326, 16
      %v386 = vor.u32 %v384, %v382
      %v388 = vshll.u32 %v330, 16
      %v390 = vrot.slane %v388, 1
      %v391 = vsel %vm331, %v386, %v390
      %v392 = vshrl.u32 %v330, 16
      %v394 = vor.u32 %v392, %v390
      %395 = vrot.lane.b32.xlu0 %v343, 64
      %v396 = vpop.permute.xlu0 %395
      %397 = vrot.lane.b32.xlu0 %v351, 64
      %v398 = vpop.permute.xlu0 %397
      %399 = vrot.lane.b32.xlu0 %v359, 64
      %v400 = vpop.permute.xlu0 %399
      %401 = vrot.lane.b32.xlu0 %v367, 64
      %v402 = vpop.permute.xlu0 %401
      %403 = vrot.lane.b32.xlu0 %v375, 64
      %v404 = vpop.permute.xlu0 %403
      %405 = vrot.lane.b32.xlu0 %v383, 64
      %v406 = vpop.permute.xlu0 %405
      %407 = vrot.lane.b32.xlu0 %v391, 64
      %v408 = vpop.permute.xlu0 %407
      %409 = vrot.lane.b32.xlu0 %v394, 64
      %v410 = vpop.permute.xlu0 %409
      %v412 = vunpack.c.l.b16 %v280
      %v413 = vpack.c.b16 %v306, %v412
      %vm414 = vcmask 1046528
      %v415 = vrot.slane %v413, 1
      %v416 = vrot.slane %v321, 1
      %v417 = vsel %vm414, %v415, %v416
      %v418 = vrot.slane %v322, 1
      %v419 = vsel %vm414, %v416, %v418
      %v420 = vrot.slane %v323, 1
      %v421 = vsel %vm414, %v418, %v420
      %v422 = vrot.slane %v324, 1
      %v423 = vsel %vm414, %v420, %v422
      %v424 = vrot.slane %v325, 1
      %v425 = vsel %vm414, %v422, %v424
      %v426 = vrot.slane %v326, 1
      %v427 = vsel %vm414, %v424, %v426
      %v428 = vrot.slane %v330, 1
      %v429 = vsel %vm414, %v426, %v428
      %v433 = vunpack.c.l.b16 %v281
      %v434 = vunpack.c.l.b16 %v282
      %v435 = vunpack.c.l.b16 %v283
      %v436 = vpack.c.b16 %v307, %v433
      %v437 = vpack.c.b16 %v309, %v308
      %v438 = vpack.c.b16 %v311, %v310
      %v439 = vpack.c.b16 %v313, %v312
      %v440 = vpack.c.b16 %v315, %v314
      %v441 = vpack.c.b16 %v317, %v316
      %v442 = vpack.c.b16 %v319, %v318
      %v443 = vpack.c.b16 %v435, %v434
      %vm444 = vcmask 1045504
      %v445 = vrot.slane %v436, 2
      %v446 = vrot.slane %v437, 2
      %v447 = vsel %vm444, %v445, %v446
      %v448 = vrot.slane %v438, 2
      %v449 = vsel %vm444, %v446, %v448
      %v450 = vrot.slane %v439, 2
      %v451 = vsel %vm444, %v448, %v450
      %v452 = vrot.slane %v440, 2
      %v453 = vsel %vm444, %v450, %v452
      %v454 = vrot.slane %v441, 2
      %v455 = vsel %vm444, %v452, %v454
      %v456 = vrot.slane %v442, 2
      %v457 = vsel %vm444, %v454, %v456
      %v458 = vrot.slane %v443, 2
      %v459 = vsel %vm444, %v456, %v458
      %460 = vrot.lane.b32.xlu0 %v447, 64
      %v461 = vpop.permute.xlu0 %460
      %462 = vrot.lane.b32.xlu0 %v449, 64
      %v463 = vpop.permute.xlu0 %462
      %464 = vrot.lane.b32.xlu0 %v451, 64
      %v465 = vpop.permute.xlu0 %464
      %466 = vrot.lane.b32.xlu0 %v453, 64
      %v467 = vpop.permute.xlu0 %466
      %468 = vrot.lane.b32.xlu0 %v455, 64
      %v469 = vpop.permute.xlu0 %468
      %470 = vrot.lane.b32.xlu0 %v457, 64
      %v471 = vpop.permute.xlu0 %470
      %472 = vrot.lane.b32.xlu0 %v459, 64
      %v473 = vpop.permute.xlu0 %472
      %474 = vrot.lane.b32.xlu0 %v458, 64
      %v475 = vpop.permute.xlu0 %474
      %v477 = vunpack.c.l.b16 %v284
      %v478 = vpack.c.b16 %v477, %v434
      %vm479 = vsmask.f32 5376
      %v481 = vshrl.u32 %v436, 16
      %v483 = vrot.slane %v481, 2
      %v484 = vshll.u32 %v436, 16
      %v486 = vrot.slane %v484, 3
      %v487 = vor.u32 %v483, %v486
      %v489 = vshrl.u32 %v437, 16
      %v491 = vrot.slane %v489, 2
      %v492 = vshll.u32 %v437, 16
      %v494 = vrot.slane %v492, 3
      %v495 = vor.u32 %v491, %v494
      %v496 = vsel %vm479, %v487, %v495
      %v498 = vshrl.u32 %v438, 16
      %v500 = vrot.slane %v498, 2
      %v501 = vshll.u32 %v438, 16
      %v503 = vrot.slane %v501, 3
      %v504 = vor.u32 %v500, %v503
      %v505 = vsel %vm479, %v495, %v504
      %v507 = vshrl.u32 %v439, 16
      %v509 = vrot.slane %v507, 2
      %v510 = vshll.u32 %v439, 16
      %v512 = vrot.slane %v510, 3
      %v513 = vor.u32 %v509, %v512
      %v514 = vsel %vm479, %v504, %v513
      %v516 = vshrl.u32 %v440, 16
      %v518 = vrot.slane %v516, 2
      %v519 = vshll.u32 %v440, 16
      %v521 = vrot.slane %v519, 3
      %v522 = vor.u32 %v518, %v521
      %v523 = vsel %vm479, %v513, %v522
      %v525 = vshrl.u32 %v441, 16
      %v527 = vrot.slane %v525, 2
      %v528 = vshll.u32 %v441, 16
      %v530 = vrot.slane %v528, 3
      %v531 = vor.u32 %v527, %v530
      %v532 = vsel %vm479, %v522, %v531
      %v534 = vshrl.u32 %v442, 16
      %v536 = vrot.slane %v534, 2
      %v537 = vshll.u32 %v442, 16
      %v539 = vrot.slane %v537, 3
      %v540 = vor.u32 %v536, %v539
      %v541 = vsel %vm479, %v531, %v540
      %v543 = vshrl.u32 %v478, 16
      %v545 = vrot.slane %v543, 2
      %v546 = vshll.u32 %v478, 16
      %v548 = vrot.slane %v546, 3
      %v549 = vor.u32 %v545, %v548
      %v550 = vsel %vm479, %v540, %v549
      %v552 = vunpack.c.l.b16 %v285
      %v553 = vpack.c.b16 %v307, %v552
      %vm554 = vcmask 1044480
      %v555 = vrot.slane %v553, 3
      %v556 = vrot.slane %v437, 3
      %v557 = vsel %vm554, %v555, %v556
      %v558 = vrot.slane %v438, 3
      %v559 = vsel %vm554, %v556, %v558
      %v560 = vrot.slane %v439, 3
      %v561 = vsel %vm554, %v558, %v560
      %v562 = vrot.slane %v440, 3
      %v563 = vsel %vm554, %v560, %v562
      %v564 = vrot.slane %v441, 3
      %v565 = vsel %vm554, %v562, %v564
      %v566 = vrot.slane %v442, 3
      %v567 = vsel %vm554, %v564, %v566
      %v568 = vrot.slane %v478, 3
      %v569 = vsel %vm554, %v566, %v568
      %570 = vrot.lane.b32.xlu0 %v557, 64
      %v571 = vpop.permute.xlu0 %570
      %572 = vrot.lane.b32.xlu0 %v559, 64
      %v573 = vpop.permute.xlu0 %572
      %574 = vrot.lane.b32.xlu0 %v561, 64
      %v575 = vpop.permute.xlu0 %574
      %576 = vrot.lane.b32.xlu0 %v563, 64
      %v577 = vpop.permute.xlu0 %576
      %578 = vrot.lane.b32.xlu0 %v565, 64
      %v579 = vpop.permute.xlu0 %578
      %580 = vrot.lane.b32.xlu0 %v567, 64
      %v581 = vpop.permute.xlu0 %580
      %582 = vrot.lane.b32.xlu0 %v569, 64
      %v583 = vpop.permute.xlu0 %582
      %584 = vrot.lane.b32.xlu0 %v568, 64
      %v585 = vpop.permute.xlu0 %584
      %v588 = vunpack.c.l.b16 %v286
      %v589 = vunpack.c.l.b16 %v287
      %v590 = vpack.c.b16 %v588, %v434
      %v591 = vpack.c.b16 %v589, %v589
      %v593 = vunpack.c.l.b16 %v288
      %v594 = vpack.c.b16 %v593, %v589
      %v595 = vrot.slane %v492, 1
      %v596 = vor.u32 %v489, %v595
      %v597 = vrot.slane %v501, 1
      %v598 = vsel %vm331, %v596, %v597
      %v599 = vor.u32 %v498, %v597
      %v600 = vrot.slane %v510, 1
      %v601 = vsel %vm331, %v599, %v600
      %v602 = vor.u32 %v507, %v600
      %v603 = vrot.slane %v519, 1
      %v604 = vsel %vm331, %v602, %v603
      %v605 = vor.u32 %v516, %v603
      %v606 = vrot.slane %v528, 1
      %v607 = vsel %vm331, %v605, %v606
      %v608 = vor.u32 %v525, %v606
      %v609 = vrot.slane %v537, 1
      %v610 = vsel %vm331, %v608, %v609
      %v611 = vor.u32 %v534, %v609
      %v613 = vshll.u32 %v590, 16
      %v615 = vrot.slane %v613, 1
      %v616 = vsel %vm331, %v611, %v615
      %v617 = vshrl.u32 %v590, 16
      %v619 = vor.u32 %v617, %v615
      %v621 = vshll.u32 %v594, 16
      %v623 = vrot.slane %v621, 1
      %v624 = vsel %vm331, %v619, %v623
      %v625 = vshrl.u32 %v594, 16
      %v627 = vor.u32 %v625, %v623
      %628 = vrot.lane.b32.xlu0 %v598, 64
      %v629 = vpop.permute.xlu0 %628
      %630 = vrot.lane.b32.xlu0 %v601, 64
      %v631 = vpop.permute.xlu0 %630
      %632 = vrot.lane.b32.xlu0 %v604, 64
      %v633 = vpop.permute.xlu0 %632
      %634 = vrot.lane.b32.xlu0 %v607, 64
      %v635 = vpop.permute.xlu0 %634
      %636 = vrot.lane.b32.xlu0 %v610, 64
      %v637 = vpop.permute.xlu0 %636
      %638 = vrot.lane.b32.xlu0 %v616, 64
      %v639 = vpop.permute.xlu0 %638
      %640 = vrot.lane.b32.xlu0 %v624, 64
      %v641 = vpop.permute.xlu0 %640
      %642 = vrot.lane.b32.xlu0 %v627, 64
      %v643 = vpop.permute.xlu0 %642
      %v645 = vunpack.c.l.b16 %v289
      %v646 = vpack.c.b16 %v309, %v645
      %v647 = vrot.slane %v646, 1
      %v648 = vrot.slane %v438, 1
      %v649 = vsel %vm414, %v647, %v648
      %v650 = vrot.slane %v439, 1
      %v651 = vsel %vm414, %v648, %v650
      %v652 = vrot.slane %v440, 1
      %v653 = vsel %vm414, %v650, %v652
      %v654 = vrot.slane %v441, 1
      %v655 = vsel %vm414, %v652, %v654
      %v656 = vrot.slane %v442, 1
      %v657 = vsel %vm414, %v654, %v656
      %v658 = vrot.slane %v590, 1
      %v659 = vsel %vm414, %v656, %v658
      %v660 = vrot.slane %v594, 1
      %v661 = vsel %vm414, %v658, %v660
      %vm662 = vcmask 523264
      %v664 = vsel %vm662, %v320, %v396
      %v667 = vsel %vm662, %v321, %v398
      %v670 = vsel %vm662, %v322, %v400
      %v673 = vsel %vm662, %v323, %v402
      %v676 = vsel %vm662, %v324, %v404
      %v679 = vsel %vm662, %v325, %v406
      %v682 = vsel %vm662, %v326, %v408
      %v686 = vsel %vm662, %v327, %v410
      %v690 = vsel %vm662, %v417, %v461
      %v694 = vsel %vm662, %v419, %v463
      %v698 = vsel %vm662, %v421, %v465
      %v702 = vsel %vm662, %v423, %v467
      %v706 = vsel %vm662, %v425, %v469
      %v710 = vsel %vm662, %v427, %v471
      %v714 = vsel %vm662, %v429, %v473
      %v718 = vsel %vm662, %v428, %v475
      %v722 = vsel %vm662, %v496, %v571
      %v726 = vsel %vm662, %v505, %v573
      %v730 = vsel %vm662, %v514, %v575
      %v734 = vsel %vm662, %v523, %v577
      %v738 = vsel %vm662, %v532, %v579
      %v742 = vsel %vm662, %v541, %v581
      %v746 = vsel %vm662, %v550, %v583
      %v750 = vsel %vm662, %v549, %v585
      %v753 = vsel %vm662, %v437, %v629
      %v756 = vsel %vm662, %v438, %v631
      %v759 = vsel %vm662, %v439, %v633
      %v762 = vsel %vm662, %v440, %v635
      %v765 = vsel %vm662, %v441, %v637
      %v768 = vsel %vm662, %v442, %v639
      %v771 = vsel %vm662, %v590, %v641
      %v775 = vsel %vm662, %v591, %v643
      %v777 = vld [vmem:[%s1] sm:$0xf]
      %v778 = vld [vmem:[%s1 + $0x4] sm:$0xf]
      %v779 = vld [vmem:[%s1 + $0x8] sm:$0xf]
      %v780 = vld [vmem:[%s1 + $0xc] sm:$0xf]
      %v781 = vld [vmem:[%s1 + $0x10] sm:$0xf]
      %v782 = vld [vmem:[%s1 + $0x14] sm:$0xf]
      %v783 = vld [vmem:[%s1 + $0x18] sm:$0xf]
      %v784 = vld [vmem:[%s1 + $0x1c] sm:$0xf]
      %v785 = vld [vmem:[%s1 + $0x20] sm:$0xf]
      %v786 = vld [vmem:[%s1 + $0x24] sm:$0xf]
      %v787 = vld [vmem:[%s1 + $0x28] sm:$0xf]
      %v788 = vld [vmem:[%s1 + $0x2c] sm:$0xf]
      %v789 = vld [vmem:[%s1 + $0x30] sm:$0xf]
      %v790 = vld [vmem:[%s1 + $0x34] sm:$0xf]
      %v791 = vld [vmem:[%s1 + $0x38] sm:$0xf]
      %v792 = vld [vmem:[%s1 + $0x3c] sm:$0xf]
      %v793 = vld [vmem:[%s1 + $0x40] sm:$0xf]
      %v794 = vld [vmem:[%s1 + $0x44] sm:$0xf]
      %v795 = vld [vmem:[%s1 + $0x48] sm:$0xf]
      %v796 = vld [vmem:[%s1 + $0x4c] sm:$0xf]
      %v797 = vld [vmem:[%s1 + $0x50] sm:$0xf]
      %v798 = vld [vmem:[%s1 + $0x54] sm:$0xf]
      %v799 = vld [vmem:[%s1 + $0x58] sm:$0xf]
      %v800 = vld [vmem:[%s1 + $0x5c] sm:$0xf]
      %v801 = vld [vmem:[%s1 + $0x60] sm:$0xf]
      %v802 = vld [vmem:[%s1 + $0x64] sm:$0xf]
      %v803 = vld [vmem:[%s1 + $0x68] sm:$0xf]
      %v804 = vld [vmem:[%s1 + $0x6c] sm:$0xf]
      %v805 = vld [vmem:[%s1 + $0x70] sm:$0xf]
      %v806 = vld [vmem:[%s1 + $0x74] sm:$0xf]
      %v807 = vld [vmem:[%s1 + $0x78] sm:$0xf]
      %v808 = vld [vmem:[%s1 + $0x7c] sm:$0xf]
      %v809 = vld [vmem:[%s1 + $0x80] sm:$0xf]
      %v810 = vld [vmem:[%s1 + $0x84] sm:$0xf]
      %v811 = vld [vmem:[%s1 + $0x88] sm:$0xf]
      %v812 = vld [vmem:[%s1 + $0x8c] sm:$0xf]
      %v813 = vld [vmem:[%s1 + $0x90] sm:$0xf]
      %v814 = vld [vmem:[%s1 + $0x94] sm:$0xf]
      %v815 = vld [vmem:[%s1 + $0x98] sm:$0xf]
      %v816 = vld [vmem:[%s1 + $0x9c] sm:$0xf]
      %v817 = vld [vmem:[%s1 + $0xa0] sm:$0xf]
      %v818 = vld [vmem:[%s1 + $0xa4] sm:$0xf]
      %v819 = vld [vmem:[%s1 + $0xa8] sm:$0xf]
      %v820 = vld [vmem:[%s1 + $0xac] sm:$0xf]
      %v821 = vld [vmem:[%s1 + $0xb0] sm:$0xf]
      %v822 = vld [vmem:[%s1 + $0xb4] sm:$0xf]
      %v823 = vld [vmem:[%s1 + $0xb8] sm:$0xf]
      %v824 = vld [vmem:[%s1 + $0xbc] sm:$0xf]
      %v825 = vld [vmem:[%s1 + $0xc0] sm:$0xf]
      %v826 = vld [vmem:[%s1 + $0xc4] sm:$0xf]
      %v827 = vld [vmem:[%s1 + $0xc8] sm:$0xf]
      %v828 = vld [vmem:[%s1 + $0xcc] sm:$0xf]
      %v829 = vld [vmem:[%s1 + $0xd0] sm:$0xf]
      %v830 = vld [vmem:[%s1 + $0xd4] sm:$0xf]
      %v831 = vld [vmem:[%s1 + $0xd8] sm:$0xf]
      %v832 = vld [vmem:[%s1 + $0xdc] sm:$0xf]
      %v833 = vld [vmem:[%s1 + $0xe0] sm:$0xf]
      %v834 = vld [vmem:[%s1 + $0xe4] sm:$0xf]
      %v835 = vld [vmem:[%s1 + $0xe8] sm:$0xf]
      %v836 = vld [vmem:[%s1 + $0xec] sm:$0xf]
      %v837 = vld [vmem:[%s1 + $0xf0] sm:$0xf]
      %v838 = vld [vmem:[%s1 + $0xf4] sm:$0xf]
      %v839 = vld [vmem:[%s1 + $0xf8] sm:$0xf]
      %v840 = vld [vmem:[%s1 + $0xfc] sm:$0xf]
      %v841 = vld [vmem:[%s1 + $0x100] sm:$0xf]
      %v842 = vld [vmem:[%s1 + $0x104] sm:$0xf]
      %v843 = vld [vmem:[%s1 + $0x108] sm:$0xf]
      %v844 = vld [vmem:[%s1 + $0x10c] sm:$0xf]
      %v845 = vld [vmem:[%s1 + $0x110] sm:$0xf]
      %v846 = vld [vmem:[%s1 + $0x114] sm:$0xf]
      %v847 = vld [vmem:[%s1 + $0x118] sm:$0xf]
      %v848 = vld [vmem:[%s1 + $0x11c] sm:$0xf]
      %v849 = vld [vmem:[%s2] sm:$0x1]
      %v851 = vlaneseq
      %v852 = vshrl.u32 %v851, 7
      %v853 = vsub.s32 0, %v852
      %v854 = vrot.slane %v849, %v853
      %v928 = vunpack.c.l.b16 %v777
      %v929 = vunpack.c.l.b16 %v778
      %v930 = vunpack.c.l.b16 %v779
      %v931 = vunpack.c.l.b16 %v780
      %v932 = vunpack.c.l.b16 %v781
      %v933 = vunpack.c.l.b16 %v782
      %v934 = vunpack.c.l.b16 %v783
      %v935 = vunpack.c.l.b16 %v784
      %v936 = vunpack.c.l.b16 %v785
      %v937 = vunpack.c.l.b16 %v786
      %v938 = vunpack.c.l.b16 %v787
      %v939 = vunpack.c.l.b16 %v788
      %v940 = vunpack.c.l.b16 %v789
      %v941 = vunpack.c.l.b16 %v790
      %v942 = vunpack.c.l.b16 %v791
      %v943 = vunpack.c.l.b16 %v792
      %v944 = vunpack.c.l.b16 %v793
      %v945 = vunpack.c.l.b16 %v794
      %v946 = vunpack.c.l.b16 %v795
      %v947 = vunpack.c.l.b16 %v796
      %v948 = vunpack.c.l.b16 %v797
      %v949 = vunpack.c.l.b16 %v798
      %v950 = vunpack.c.l.b16 %v799
      %v951 = vunpack.c.l.b16 %v800
      %v952 = vunpack.c.l.b16 %v801
      %v953 = vunpack.c.l.b16 %v802
      %v954 = vunpack.c.l.b16 %v803
      %v955 = vunpack.c.l.b16 %v804
      %v956 = vunpack.c.l.b16 %v805
      %v957 = vunpack.c.l.b16 %v806
      %v958 = vunpack.c.l.b16 %v807
      %v959 = vunpack.c.l.b16 %v808
      %v960 = vunpack.c.l.b16 %v809
      %v961 = vunpack.c.l.b16 %v810
      %v962 = vunpack.c.l.b16 %v811
      %v963 = vunpack.c.l.b16 %v812
      %v964 = vunpack.c.l.b16 %v813
      %v965 = vunpack.c.l.b16 %v814
      %v966 = vunpack.c.l.b16 %v815
      %v967 = vunpack.c.l.b16 %v816
      %v968 = vunpack.c.l.b16 %v817
      %v969 = vunpack.c.l.b16 %v818
      %v970 = vunpack.c.l.b16 %v819
      %v971 = vunpack.c.l.b16 %v820
      %v972 = vunpack.c.l.b16 %v821
      %v973 = vunpack.c.l.b16 %v822
      %v974 = vunpack.c.l.b16 %v823
      %v975 = vunpack.c.l.b16 %v824
      %v976 = vunpack.c.l.b16 %v825
      %v977 = vunpack.c.l.b16 %v826
      %v978 = vunpack.c.l.b16 %v827
      %v979 = vunpack.c.l.b16 %v828
      %v980 = vunpack.c.l.b16 %v829
      %v981 = vunpack.c.l.b16 %v830
      %v982 = vunpack.c.l.b16 %v831
      %v983 = vunpack.c.l.b16 %v832
      %v984 = vunpack.c.l.b16 %v833
      %v985 = vunpack.c.l.b16 %v834
      %v986 = vunpack.c.l.b16 %v835
      %v987 = vunpack.c.l.b16 %v836
      %v988 = vunpack.c.l.b16 %v837
      %v989 = vunpack.c.l.b16 %v838
      %v990 = vunpack.c.l.b16 %v839
      %v991 = vunpack.c.l.b16 %v840
      %v992 = vunpack.c.l.b16 %v841
      %v993 = vunpack.c.l.b16 %v842
      %v994 = vunpack.c.l.b16 %v843
      %v995 = vunpack.c.l.b16 %v844
      %v996 = vunpack.c.l.b16 %v845
      %v997 = vunpack.c.l.b16 %v846
      %v998 = vunpack.c.l.b16 %v847
      %v999 = vunpack.c.l.b16 %v848
      %v1000 = vpack.c.b16 %v929, %v928
      %v1001 = vpack.c.b16 %v931, %v930
      %v1002 = vpack.c.b16 %v933, %v932
      %v1003 = vpack.c.b16 %v935, %v934
      %v1004 = vpack.c.b16 %v937, %v936
      %v1005 = vpack.c.b16 %v939, %v938
      %v1006 = vpack.c.b16 %v941, %v940
      %v1007 = vpack.c.b16 %v943, %v942
      %v1008 = vpack.c.b16 %v945, %v944
      %v1009 = vpack.c.b16 %v947, %v946
      %v1010 = vpack.c.b16 %v949, %v948
      %v1011 = vpack.c.b16 %v951, %v950
      %v1012 = vpack.c.b16 %v953, %v952
      %v1013 = vpack.c.b16 %v955, %v954
      %v1014 = vpack.c.b16 %v957, %v956
      %v1015 = vpack.c.b16 %v959, %v958
      %v1016 = vpack.c.b16 %v961, %v960
      %v1017 = vpack.c.b16 %v963, %v962
      %v1018 = vpack.c.b16 %v965, %v964
      %v1019 = vpack.c.b16 %v967, %v966
      %v1020 = vpack.c.b16 %v969, %v968
      %v1021 = vpack.c.b16 %v971, %v970
      %v1022 = vpack.c.b16 %v973, %v972
      %v1023 = vpack.c.b16 %v975, %v974
      %v1024 = vpack.c.b16 %v977, %v976
      %v1025 = vpack.c.b16 %v979, %v978
      %v1026 = vpack.c.b16 %v981, %v980
      %v1027 = vpack.c.b16 %v983, %v982
      %v1028 = vpack.c.b16 %v985, %v984
      %v1029 = vpack.c.b16 %v987, %v986
      %v1030 = vpack.c.b16 %v989, %v988
      %v1031 = vpack.c.b16 %v991, %v990
      %v1032 = vpack.c.b16 %v993, %v992
      %v1033 = vpack.c.b16 %v995, %v994
      %v1034 = vpack.c.b16 %v997, %v996
      %v1035 = vpack.c.b16 %v999, %v998
      %v1073 = vsel %vm662, %v649, 0
      %v1076 = vsel %vm662, %v651, 0
      %v1079 = vsel %vm662, %v653, 0
      %v1082 = vsel %vm662, %v655, 0
      %v1085 = vsel %vm662, %v657, 0
      %v1088 = vsel %vm662, %v659, 0
      %v1091 = vsel %vm662, %v661, 0
      %v1094 = vsel %vm662, %v660, 0
      %1096 = vmatprep.subr.bf16.mxu0 0
      %1097 = vmatpush1.bf16.msra.mxu0 %v1000
      %1098 = vmatprep.subr.bf16.mxu0 0
      %1099 = vmatpush1.bf16.msra.mxu0 %v1001
      %1100 = vmatprep.subr.bf16.mxu0 0
      %1101 = vmatpush1.bf16.msra.mxu0 %v1002
      %1102 = vmatprep.subr.bf16.mxu0 0
      %1103 = vmatpush1.bf16.msra.mxu0 %v1003
      %1104 = vmatprep.subr.bf16.mxu0 0
      %1105 = vmatpush1.bf16.msra.mxu0 %v1004
      %1106 = vmatprep.subr.bf16.mxu0 0
      %1107 = vmatpush1.bf16.msra.mxu0 %v1005
      %1108 = vmatprep.subr.bf16.mxu0 0
      %1109 = vmatpush1.bf16.msra.mxu0 %v1006
      %1110 = vmatprep.subr.bf16.mxu0 0
      %1111 = vmatpush1.bf16.msra.mxu0 %v1007
      %1112 = vmatprep.subr.bf16.mxu0 0
      %1113 = vmatpush1.bf16.msra.mxu0 %v1008
      %1114 = vmatprep.subr.bf16.mxu0 0
      %1115 = vmatpush1.bf16.msra.mxu0 %v1009
      %1116 = vmatprep.subr.bf16.mxu0 0
      %1117 = vmatpush1.bf16.msra.mxu0 %v1010
      %1118 = vmatprep.subr.bf16.mxu0 0
      %1119 = vmatpush1.bf16.msra.mxu0 %v1011
      %1120 = vmatprep.subr.bf16.mxu0 0
      %1121 = vmatpush1.bf16.msra.mxu0 %v1012
      %1122 = vmatprep.subr.bf16.mxu0 0
      %1123 = vmatpush1.bf16.msra.mxu0 %v1013
      %1124 = vmatprep.subr.bf16.mxu0 0
      %1125 = vmatpush1.bf16.msra.mxu0 %v1014
      %1126 = vmatprep.subr.bf16.mxu0 0
      %1127 = vmatpush1.bf16.msra.mxu0 %v1015
      %1128 = vmatprep.mubr.bf16.mxu0 %v690
      %1129 = vmatmul.mubr.bf16.gmra.mrb[0].mxu0 %v664
      %v1130 = vpop.f32.mrb[0].mxu0
      %v1131 = vadd.f32 %v854, %v1130
      %v1132 = vpop.f32.mrb[0].mxu0
      %v1133 = vpop.f32.mrb[0].mxu0
      %v1134 = vadd.f32 %v854, %v1133
      %v1135 = vpop.f32.mrb[0].mxu0
      %1136 = vmatprep.mubr.bf16.mxu0 %v694
      %1137 = vmatmul.mubr.bf16.gmra.mrb[0].mxu0 %v667
      %v1138 = vpop.f32.mrb[0].mxu0
      %v1139 = vadd.f32 %v854, %v1138
      %v1140 = vpop.f32.mrb[0].mxu0
      %v1141 = vpop.f32.mrb[0].mxu0
      %v1142 = vadd.f32 %v854, %v1141
      %v1143 = vpop.f32.mrb[0].mxu0
      %1144 = vmatprep.mubr.bf16.mxu0 %v698
      %1145 = vmatmul.mubr.bf16.gmra.mrb[0].mxu0 %v670
      %v1146 = vpop.f32.mrb[0].mxu0
      %v1147 = vadd.f32 %v854, %v1146
      %v1148 = vpop.f32.mrb[0].mxu0
      %v1149 = vpop.f32.mrb[0].mxu0
      %v1150 = vadd.f32 %v854, %v1149
      %v1151 = vpop.f32.mrb[0].mxu0
      %1152 = vmatprep.mubr.bf16.mxu0 %v702
      %1153 = vmatmul.mubr.bf16.gmra.mrb[0].mxu0 %v673
      %v1154 = vpop.f32.mrb[0].mxu0
      %v1155 = vadd.f32 %v854, %v1154
      %v1156 = vpop.f32.mrb[0].mxu0
      %v1157 = vpop.f32.mrb[0].mxu0
      %v1158 = vadd.f32 %v854, %v1157
      %v1159 = vpop.f32.mrb[0].mxu0
      %1160 = vmatprep.mubr.bf16.mxu0 %v706
      %1161 = vmatmul.mubr.bf16.gmra.mrb[0].mxu0 %v676
      %v1162 = vpop.f32.mrb[0].mxu0
      %v1163 = vadd.f32 %v854, %v1162
      %v1164 = vpop.f32.mrb[0].mxu0
      %v1165 = vpop.f32.mrb[0].mxu0
      %v1166 = vadd.f32 %v854, %v1165
      %v1167 = vpop.f32.mrb[0].mxu0
      %1168 = vmatprep.mubr.bf16.mxu0 %v710
      %1169 = vmatmul.mubr.bf16.gmra.mrb[0].mxu0 %v679
      %v1170 = vpop.f32.mrb[0].mxu0
      %v1171 = vadd.f32 %v854, %v1170
      %v1172 = vpop.f32.mrb[0].mxu0
      %v1173 = vpop.f32.mrb[0].mxu0
      %v1174 = vadd.f32 %v854, %v1173
      %v1175 = vpop.f32.mrb[0].mxu0
      %1176 = vmatprep.mubr.bf16.mxu0 %v714
      %1177 = vmatmul.mubr.bf16.gmra.mrb[0].mxu0 %v682
      %v1178 = vpop.f32.mrb[0].mxu0
      %v1179 = vadd.f32 %v854, %v1178
      %v1180 = vpop.f32.mrb[0].mxu0
      %v1181 = vpop.f32.mrb[0].mxu0
      %v1182 = vadd.f32 %v854, %v1181
      %v1183 = vpop.f32.mrb[0].mxu0
      %1184 = vmatprep.mubr.bf16.mxu0 %v718
      %1185 = vmatmul.mubr.bf16.gmra.mrb[0].mxu0 %v686
      %v1186 = vpop.f32.mrb[0].mxu0
      %v1187 = vadd.f32 %v854, %v1186
      %v1188 = vpop.f32.mrb[0].mxu0
      %v1189 = vpop.f32.mrb[0].mxu0
      %v1190 = vpop.f32.mrb[0].mxu0
      %1191 = vdwg.mxu0
      %1192 = vmatprep.subr.bf16.mxu0 0
      %1193 = vmatpush1.bf16.msra.mxu0 %v1016
      %1194 = vmatprep.subr.bf16.mxu0 0
      %1195 = vmatpush1.bf16.msra.mxu0 %v1017
      %1196 = vmatprep.subr.bf16.mxu0 0
      %1197 = vmatpush1.bf16.msra.mxu0 %v1018
      %1198 = vmatprep.subr.bf16.mxu0 0
      %1199 = vmatpush1.bf16.msra.mxu0 %v1019
      %1200 = vmatprep.subr.bf16.mxu0 0
      %1201 = vmatpush1.bf16.msra.mxu0 %v1020
      %1202 = vmatprep.subr.bf16.mxu0 0
      %1203 = vmatpush1.bf16.msra.mxu0 %v1021
      %1204 = vmatprep.subr.bf16.mxu0 0
      %1205 = vmatpush1.bf16.msra.mxu0 %v1022
      %1206 = vmatprep.subr.bf16.mxu0 0
      %1207 = vmatpush1.bf16.msra.mxu0 %v1023
      %1208 = vmatprep.subr.bf16.mxu0 0
      %1209 = vmatpush1.bf16.msra.mxu0 %v1024
      %1210 = vmatprep.subr.bf16.mxu0 0
      %1211 = vmatpush1.bf16.msra.mxu0 %v1025
      %1212 = vmatprep.subr.bf16.mxu0 0
      %1213 = vmatpush1.bf16.msra.mxu0 %v1026
      %1214 = vmatprep.subr.bf16.mxu0 0
      %1215 = vmatpush1.bf16.msra.mxu0 %v1027
      %1216 = vmatprep.subr.bf16.mxu0 0
      %1217 = vmatpush1.bf16.msra.mxu0 %v1028
      %1218 = vmatprep.subr.bf16.mxu0 0
      %1219 = vmatpush1.bf16.msra.mxu0 %v1029
      %1220 = vmatprep.subr.bf16.mxu0 0
      %1221 = vmatpush1.bf16.msra.mxu0 %v1030
      %1222 = vmatprep.subr.bf16.mxu0 0
      %1223 = vmatpush1.bf16.msra.mxu0 %v1031
      %1224 = vmatprep.mubr.bf16.mxu0 %v753
      %1225 = vmatmul.mubr.bf16.gmra.mrb[0].mxu0 %v722
      %v1226 = vpop.f32.mrb[0].mxu0
      %v1227 = vadd.f32 %v1131, %v1226
      %v1228 = vpop.f32.mrb[0].mxu0
      %v1229 = vpop.f32.mrb[0].mxu0
      %v1230 = vadd.f32 %v1134, %v1229
      %v1231 = vpop.f32.mrb[0].mxu0
      %1232 = vmatprep.mubr.bf16.mxu0 %v756
      %1233 = vmatmul.mubr.bf16.gmra.mrb[0].mxu0 %v726
      %v1234 = vpop.f32.mrb[0].mxu0
      %v1235 = vadd.f32 %v1139, %v1234
      %v1236 = vpop.f32.mrb[0].mxu0
      %v1237 = vpop.f32.mrb[0].mxu0
      %v1238 = vadd.f32 %v1142, %v1237
      %v1239 = vpop.f32.mrb[0].mxu0
      %1240 = vmatprep.mubr.bf16.mxu0 %v759
      %1241 = vmatmul.mubr.bf16.gmra.mrb[0].mxu0 %v730
      %v1242 = vpop.f32.mrb[0].mxu0
      %v1243 = vadd.f32 %v1147, %v1242
      %v1244 = vpop.f32.mrb[0].mxu0
      %v1245 = vpop.f32.mrb[0].mxu0
      %v1246 = vadd.f32 %v1150, %v1245
      %v1247 = vpop.f32.mrb[0].mxu0
      %1248 = vmatprep.mubr.bf16.mxu0 %v762
      %1249 = vmatmul.mubr.bf16.gmra.mrb[0].mxu0 %v734
      %v1250 = vpop.f32.mrb[0].mxu0
      %v1251 = vadd.f32 %v1155, %v1250
      %v1252 = vpop.f32.mrb[0].mxu0
      %v1253 = vpop.f32.mrb[0].mxu0
      %v1254 = vadd.f32 %v1158, %v1253
      %v1255 = vpop.f32.mrb[0].mxu0
      %1256 = vmatprep.mubr.bf16.mxu0 %v765
      %1257 = vmatmul.mubr.bf16.gmra.mrb[0].mxu0 %v738
      %v1258 = vpop.f32.mrb[0].mxu0
      %v1259 = vadd.f32 %v1163, %v1258
      %v1260 = vpop.f32.mrb[0].mxu0
      %v1261 = vpop.f32.mrb[0].mxu0
      %v1262 = vadd.f32 %v1166, %v1261
      %v1263 = vpop.f32.mrb[0].mxu0
      %1264 = vmatprep.mubr.bf16.mxu0 %v768
      %1265 = vmatmul.mubr.bf16.gmra.mrb[0].mxu0 %v742
      %v1266 = vpop.f32.mrb[0].mxu0
      %v1267 = vadd.f32 %v1171, %v1266
      %v1268 = vpop.f32.mrb[0].mxu0
      %v1269 = vpop.f32.mrb[0].mxu0
      %v1270 = vadd.f32 %v1174, %v1269
      %v1271 = vpop.f32.mrb[0].mxu0
      %1272 = vmatprep.mubr.bf16.mxu0 %v771
      %1273 = vmatmul.mubr.bf16.gmra.mrb[0].mxu0 %v746
      %v1274 = vpop.f32.mrb[0].mxu0
      %v1275 = vadd.f32 %v1179, %v1274
      %v1276 = vpop.f32.mrb[0].mxu0
      %v1277 = vpop.f32.mrb[0].mxu0
      %v1278 = vadd.f32 %v1182, %v1277
      %v1279 = vpop.f32.mrb[0].mxu0
      %1280 = vmatprep.mubr.bf16.mxu0 %v775
      %1281 = vmatmul.mubr.bf16.gmra.mrb[0].mxu0 %v750
      %v1282 = vpop.f32.mrb[0].mxu0
      %v1283 = vadd.f32 %v1187, %v1282
      %v1284 = vpop.f32.mrb[0].mxu0
      %v1285 = vpop.f32.mrb[0].mxu0
      %v1286 = vpop.f32.mrb[0].mxu0
      %1287 = vdwg.mxu0
      %1288 = vmatprep.subr.bf16.mxu0 0
      %1289 = vmatpush1.bf16.msra.mxu0 %v1032
      %1290 = vmatprep.subr.bf16.mxu0 0
      %1291 = vmatpush1.bf16.msra.mxu0 %v1033
      %1292 = vmatprep.subr.bf16.mxu0 0
      %1293 = vmatpush1.bf16.msra.mxu0 %v1034
      %1294 = vmatprep.subr.bf16.mxu0 0
      %1295 = vmatpush1.bf16.msra.mxu0 %v1035
      %1296 = vmatprep.subr.bf16.mxu0 0
      %1297 = vmatpush1.bf16.msra.mxu0 0
      %1298 = vmatprep.subr.bf16.mxu0 0
      %1299 = vmatpush1.bf16.msra.mxu0 0
      %1300 = vmatprep.subr.bf16.mxu0 0
      %1301 = vmatpush1.bf16.msra.mxu0 0
      %1302 = vmatprep.subr.bf16.mxu0 0
      %1303 = vmatpush1.bf16.msra.mxu0 0
      %1304 = vmatprep.subr.bf16.mxu0 0
      %1305 = vmatpush1.bf16.msra.mxu0 0
      %1306 = vmatprep.subr.bf16.mxu0 0
      %1307 = vmatpush1.bf16.msra.mxu0 0
      %1308 = vmatprep.subr.bf16.mxu0 0
      %1309 = vmatpush1.bf16.msra.mxu0 0
      %1310 = vmatprep.subr.bf16.mxu0 0
      %1311 = vmatpush1.bf16.msra.mxu0 0
      %1312 = vmatprep.subr.bf16.mxu0 0
      %1313 = vmatpush1.bf16.msra.mxu0 0
      %1314 = vmatprep.subr.bf16.mxu0 0
      %1315 = vmatpush1.bf16.msra.mxu0 0
      %1316 = vmatprep.subr.bf16.mxu0 0
      %1317 = vmatpush1.bf16.msra.mxu0 0
      %1318 = vmatprep.subr.bf16.mxu0 0
      %1319 = vmatpush1.bf16.msra.mxu0 0
      %1320 = vmatprep.mubr.bf16.mxu0 0
      %1321 = vmatmul.mubr.bf16.gmra.mrb[0].mxu0 %v1073
      %v1322 = vpop.f32.mrb[0].mxu0
      %v1323 = vadd.f32 %v1227, %v1322
      %v1324 = vpop.f32.mrb[0].mxu0
      %v1325 = vpop.f32.mrb[0].mxu0
      %v1326 = vadd.f32 %v1230, %v1325
      %v1327 = vpop.f32.mrb[0].mxu0
      %1328 = vmatprep.mubr.bf16.mxu0 0
      %1329 = vmatmul.mubr.bf16.gmra.mrb[0].mxu0 %v1076
      %v1330 = vpop.f32.mrb[0].mxu0
      %v1331 = vadd.f32 %v1235, %v1330
      %v1332 = vpop.f32.mrb[0].mxu0
      %v1333 = vpop.f32.mrb[0].mxu0
      %v1334 = vadd.f32 %v1238, %v1333
      %v1335 = vpop.f32.mrb[0].mxu0
      %1336 = vmatprep.mubr.bf16.mxu0 0
      %1337 = vmatmul.mubr.bf16.gmra.mrb[0].mxu0 %v1079
      %v1338 = vpop.f32.mrb[0].mxu0
      %v1339 = vadd.f32 %v1243, %v1338
      %v1340 = vpop.f32.mrb[0].mxu0
      %v1341 = vpop.f32.mrb[0].mxu0
      %v1342 = vadd.f32 %v1246, %v1341
      %v1343 = vpop.f32.mrb[0].mxu0
      %1344 = vmatprep.mubr.bf16.mxu0 0
      %1345 = vmatmul.mubr.bf16.gmra.mrb[0].mxu0 %v1082
      %v1346 = vpop.f32.mrb[0].mxu0
      %v1347 = vadd.f32 %v1251, %v1346
      %v1348 = vpop.f32.mrb[0].mxu0
      %v1349 = vpop.f32.mrb[0].mxu0
      %v1350 = vadd.f32 %v1254, %v1349
      %v1351 = vpop.f32.mrb[0].mxu0
      %1352 = vmatprep.mubr.bf16.mxu0 0
      %1353 = vmatmul.mubr.bf16.gmra.mrb[0].mxu0 %v1085
      %v1354 = vpop.f32.mrb[0].mxu0
      %v1355 = vadd.f32 %v1259, %v1354
      %v1356 = vpop.f32.mrb[0].mxu0
      %v1357 = vpop.f32.mrb[0].mxu0
      %v1358 = vadd.f32 %v1262, %v1357
      %v1359 = vpop.f32.mrb[0].mxu0
      %1360 = vmatprep.mubr.bf16.mxu0 0
      %1361 = vmatmul.mubr.bf16.gmra.mrb[0].mxu0 %v1088
      %v1362 = vpop.f32.mrb[0].mxu0
      %v1363 = vadd.f32 %v1267, %v1362
      %v1364 = vpop.f32.mrb[0].mxu0
      %v1365 = vpop.f32.mrb[0].mxu0
      %v1366 = vadd.f32 %v1270, %v1365
      %v1367 = vpop.f32.mrb[0].mxu0
      %1368 = vmatprep.mubr.bf16.mxu0 0
      %1369 = vmatmul.mubr.bf16.gmra.mrb[0].mxu0 %v1091
      %v1370 = vpop.f32.mrb[0].mxu0
      %v1371 = vadd.f32 %v1275, %v1370
      %v1372 = vpop.f32.mrb[0].mxu0
      %v1373 = vpop.f32.mrb[0].mxu0
      %v1374 = vadd.f32 %v1278, %v1373
      %v1375 = vpop.f32.mrb[0].mxu0
      %1376 = vmatprep.mubr.bf16.mxu0 0
      %1377 = vmatmul.mubr.bf16.gmra.mrb[0].mxu0 %v1094
      %v1378 = vpop.f32.mrb[0].mxu0
      %v1379 = vadd.f32 %v1283, %v1378
      %v1380 = vpop.f32.mrb[0].mxu0
      %v1381 = vpop.f32.mrb[0].mxu0
      %v1382 = vpop.f32.mrb[0].mxu0
      %1383 = vdwg.mxu0
      %v1384 = vmax.f32 %v1323, 0.0
      %v1385 = vmax.f32 %v1326, 0.0
      %v1386 = vmax.f32 %v1331, 0.0
      %v1387 = vmax.f32 %v1334, 0.0
      %v1388 = vmax.f32 %v1339, 0.0
      %v1389 = vmax.f32 %v1342, 0.0
      %v1390 = vmax.f32 %v1347, 0.0
      %v1391 = vmax.f32 %v1350, 0.0
      %v1392 = vmax.f32 %v1355, 0.0
      %v1393 = vmax.f32 %v1358, 0.0
      %v1394 = vmax.f32 %v1363, 0.0
      %v1395 = vmax.f32 %v1366, 0.0
      %v1396 = vmax.f32 %v1371, 0.0
      %v1397 = vmax.f32 %v1374, 0.0
      %v1398 = vmax.f32 %v1379, 0.0
      %v1399 = vpack.c.bf16 %v1385, %v1384
      %v1400 = vpack.c.bf16 %v1387, %v1386
      %v1401 = vpack.c.bf16 %v1389, %v1388
      %v1402 = vpack.c.bf16 %v1391, %v1390
      %v1403 = vpack.c.bf16 %v1393, %v1392
      %v1404 = vpack.c.bf16 %v1395, %v1394
      %v1405 = vpack.c.bf16 %v1397, %v1396
      %v1406 = vpack.c.bf16 %v1398, %v1398
      %1407 = vst.msk [vmem:[#allocation2] sm:$0xff] %vm662, %v1399
      %1408 = vst.msk [vmem:[#allocation2 + $0x8] sm:$0xff] %vm662, %v1400
      %1409 = vst.msk [vmem:[#allocation2 + $0x10] sm:$0xff] %vm662, %v1401
      %1410 = vst.msk [vmem:[#allocation2 + $0x18] sm:$0xff] %vm662, %v1402
      %1411 = vst.msk [vmem:[#allocation2 + $0x20] sm:$0xff] %vm662, %v1403
      %1412 = vst.msk [vmem:[#allocation2 + $0x28] sm:$0xff] %vm662, %v1404
      %1413 = vst.msk [vmem:[#allocation2 + $0x30] sm:$0xff] %vm662, %v1405
      %vm1414 = vcmask 519168
      %1415 = vst.msk [vmem:[#allocation2 + $0x38] sm:$0xf] %vm1414, %v1406
      %vm1416 = vcmask 516096
      %vm1417 = vsmask.f32 256
      %vm1418 = vmand %vm1416, %vm1417
      %v1419 = vld [vmem:[#allocation2] sm:$0x1]
      %v1420 = vsel %vm1418, 0, %v1419
      %1421 = vst [vmem:[#allocation2] sm:$0x1] %v1420
      %vm1422 = vcmask 522244
      %vm1423 = vsmask.f32 6418
      %vm1424 = vmand %vm1422, %vm1423
      %v1425 = vld [vmem:[#allocation2] sm:$0x70]
      %v1426 = vsel %vm1424, 0, %v1425
      %1427 = vst [vmem:[#allocation2] sm:$0x70] %v1426
      %vm1428 = vcmask 520194
      %vm1429 = vsmask.f32 4362
      %vm1430 = vmand %vm1428, %vm1429
      %v1431 = vld [vmem:[#allocation2 + $0x8] sm:$0x1c]
      %v1432 = vsel %vm1430, 0, %v1431
      %1433 = vst [vmem:[#allocation2 + $0x8] sm:$0x1c] %v1432
      %vm1434 = vcmask 518144
      %vm1435 = vsmask.f32 2306
      %vm1436 = vmand %vm1434, %vm1435
      %v1437 = vld [vmem:[#allocation2 + $0x10] sm:$0x7]
      %v1438 = vsel %vm1436, 0, %v1437
      %1439 = vst [vmem:[#allocation2 + $0x10] sm:$0x7] %v1438
      %vm1440 = vcmask 523270
      %vm1441 = vsmask.f32 7962
      %vm1442 = vmand %vm1440, %vm1441
      %v1443 = vld [vmem:[#allocation2 + $0x10] sm:$0xc0]
      %v1444 = vsel %vm1442, 0, %v1443
      %1445 = vst [vmem:[#allocation2 + $0x10] sm:$0xc0] %v1444
      %v1446 = vld [vmem:[#allocation2 + $0x18] sm:$0x1]
      %v1447 = vsel %vm1418, 0, %v1446
      %1448 = vst [vmem:[#allocation2 + $0x18] sm:$0x1] %v1447
      %v1449 = vld [vmem:[#allocation2 + $0x18] sm:$0x70]
      %v1450 = vsel %vm1424, 0, %v1449
      %1451 = vst [vmem:[#allocation2 + $0x18] sm:$0x70] %v1450
      %v1452 = vld [vmem:[#allocation2 + $0x20] sm:$0x1c]
      %v1453 = vsel %vm1430, 0, %v1452
      %1454 = vst [vmem:[#allocation2 + $0x20] sm:$0x1c] %v1453
      %v1455 = vld [vmem:[#allocation2 + $0x28] sm:$0x7]
      %v1456 = vsel %vm1436, 0, %v1455
      %1457 = vst [vmem:[#allocation2 + $0x28] sm:$0x7] %v1456
      %v1458 = vld [vmem:[#allocation2 + $0x28] sm:$0xc0]
      %v1459 = vsel %vm1442, 0, %v1458
      %1460 = vst [vmem:[#allocation2 + $0x28] sm:$0xc0] %v1459
      %v1461 = vld [vmem:[#allocation2 + $0x30] sm:$0x1]
      %v1462 = vsel %vm1418, 0, %v1461
      %1463 = vst [vmem:[#allocation2 + $0x30] sm:$0x1] %v1462
      %v1464 = vld [vmem:[#allocation2 + $0x30] sm:$0x70]
      %v1465 = vsel %vm1424, 0, %v1464
      %1466 = vst [vmem:[#allocation2 + $0x30] sm:$0x70] %v1465
      %v1467 = vld [vmem:[#allocation2 + $0x38] sm:$0x1c]
      %v1468 = vsel %vm1430, 0, %v1467
      %1469 = vst [vmem:[#allocation2 + $0x38] sm:$0x1c] %v1468
      %p1470 = scmp.eq.s32.totalorder %s21, 0
      // Predicated region
      $region41: #{image_encoder_forward.3} parent=39 // pred_check
        %p1471 = pneg %p1470
      $region42: #{image_encoder_forward.3} parent=39 // pred_check_branch
        %1473 = sbr.rel (%p1471) target = $region44
      $region43: #{image_encoder_forward.3} parent=39 // pred_region
        %vm1474 = vcmask 521216
        %1475 = vst.msk [vmem:[#allocation2] sm:$0x3f] %vm1474, 0
        %vm1476 = vcmask 523270
        %1477 = vst.msk [vmem:[#allocation2 + $0x30] sm:$0xc0] %vm1476, 0
        %1478 = vst.msk [vmem:[#allocation2 + $0x38] sm:$0xf] %vm1414, 0
      $region44: #{image_encoder_forward.3} parent=39 // pred_fallthru
        _
      %v1479 = vld [vmem:[#allocation2] sm:$0xff]
      %v1480 = vld [vmem:[#allocation2 + $0x8] sm:$0xff]
      %v1481 = vld [vmem:[#allocation2 + $0x10] sm:$0xff]
      %v1482 = vld [vmem:[#allocation2 + $0x18] sm:$0xff]
      %v1483 = vld [vmem:[#allocation2 + $0x20] sm:$0xff]
      %v1484 = vld [vmem:[#allocation2 + $0x28] sm:$0xff]
      %v1485 = vld [vmem:[#allocation2 + $0x30] sm:$0x1]
      %v1486 = vld [vmem:[#allocation2] sm:$0xfe]
      %v1487 = vld [vmem:[#allocation2] sm:$0xc0]
      %v1488 = vld [vmem:[#allocation2 + $0x30] sm:$0x3f]
      %v1489 = vld [vmem:[#allocation2 + $0x30] sm:$0x7f]
      %v1490 = vld [vmem:[#allocation2] sm:$0x80]
      %v1491 = vld [vmem:[#allocation2 + $0x8] sm:$0xf0]
      %v1492 = vld [vmem:[#allocation2 + $0x30] sm:$0xff]
      %v1493 = vld [vmem:[#allocation2 + $0x38] sm:$0xf]
      %v1494 = vld [vmem:[#allocation2 + $0x38] sm:$0x1f]
      %v1495 = vld [vmem:[#allocation2 + $0x8] sm:$0xe0]
      %v1497 = vshrl.u32 %v1479, 16
      %v1499 = vshll.u32 %v1479, 16
      %v1501 = vrot.slane %v1499, 1
      %v1502 = vor.u32 %v1497, %v1501
      %v1504 = vshll.u32 %v1480, 16
      %v1506 = vrot.slane %v1504, 1
      %v1507 = vsel %vm331, %v1502, %v1506
      %v1508 = vshrl.u32 %v1480, 16
      %v1510 = vor.u32 %v1508, %v1506
      %v1512 = vshll.u32 %v1481, 16
      %v1514 = vrot.slane %v1512, 1
      %v1515 = vsel %vm331, %v1510, %v1514
      %v1516 = vshrl.u32 %v1481, 16
      %v1518 = vor.u32 %v1516, %v1514
      %v1520 = vshll.u32 %v1482, 16
      %v1522 = vrot.slane %v1520, 1
      %v1523 = vsel %vm331, %v1518, %v1522
      %v1524 = vshrl.u32 %v1482, 16
      %v1526 = vor.u32 %v1524, %v1522
      %v1528 = vshll.u32 %v1483, 16
      %v1530 = vrot.slane %v1528, 1
      %v1531 = vsel %vm331, %v1526, %v1530
      %v1532 = vshrl.u32 %v1483, 16
      %v1534 = vor.u32 %v1532, %v1530
      %v1536 = vshll.u32 %v1484, 16
      %v1538 = vrot.slane %v1536, 1
      %v1539 = vsel %vm331, %v1534, %v1538
      %v1540 = vshrl.u32 %v1484, 16
      %v1542 = vor.u32 %v1540, %v1538
      %v1544 = vshll.u32 %v1485, 16
      %v1546 = vrot.slane %v1544, 1
      %v1547 = vsel %vm331, %v1542, %v1546
      %1548 = vrot.lane.b32.xlu0 %v1507, 64
      %v1549 = vpop.permute.xlu0 %1548
      %1550 = vrot.lane.b32.xlu0 %v1515, 64
      %v1551 = vpop.permute.xlu0 %1550
      %1552 = vrot.lane.b32.xlu0 %v1523, 64
      %v1553 = vpop.permute.xlu0 %1552
      %1554 = vrot.lane.b32.xlu0 %v1531, 64
      %v1555 = vpop.permute.xlu0 %1554
      %1556 = vrot.lane.b32.xlu0 %v1539, 64
      %v1557 = vpop.permute.xlu0 %1556
      %1558 = vrot.lane.b32.xlu0 %v1547, 64
      %v1559 = vpop.permute.xlu0 %1558
      %v1567 = vrot.slane %v1486, 1
      %v1568 = vrot.slane %v1480, 1
      %v1569 = vsel %vm414, %v1567, %v1568
      %v1570 = vrot.slane %v1481, 1
      %v1571 = vsel %vm414, %v1568, %v1570
      %v1572 = vrot.slane %v1482, 1
      %v1573 = vsel %vm414, %v1570, %v1572
      %v1574 = vrot.slane %v1483, 1
      %v1575 = vsel %vm414, %v1572, %v1574
      %v1576 = vrot.slane %v1484, 1
      %v1577 = vsel %vm414, %v1574, %v1576
      %v1578 = vrot.slane %v1485, 1
      %v1579 = vsel %vm414, %v1576, %v1578
      %vm1582 = vcmask 1041408
      %v1583 = vrot.slane %v1487, 6
      %v1584 = vrot.slane %v1480, 6
      %v1585 = vsel %vm1582, %v1583, %v1584
      %v1586 = vrot.slane %v1481, 6
      %v1587 = vsel %vm1582, %v1584, %v1586
      %v1588 = vrot.slane %v1482, 6
      %v1589 = vsel %vm1582, %v1586, %v1588
      %v1590 = vrot.slane %v1483, 6
      %v1591 = vsel %vm1582, %v1588, %v1590
      %v1592 = vrot.slane %v1484, 6
      %v1593 = vsel %vm1582, %v1590, %v1592
      %v1594 = vrot.slane %v1488, 6
      %v1595 = vsel %vm1582, %v1592, %v1594
      %1596 = vrot.lane.b32.xlu0 %v1585, 64
      %v1597 = vpop.permute.xlu0 %1596
      %1598 = vrot.lane.b32.xlu0 %v1587, 64
      %v1599 = vpop.permute.xlu0 %1598
      %1600 = vrot.lane.b32.xlu0 %v1589, 64
      %v1601 = vpop.permute.xlu0 %1600
      %1602 = vrot.lane.b32.xlu0 %v1591, 64
      %v1603 = vpop.permute.xlu0 %1602
      %1604 = vrot.lane.b32.xlu0 %v1593, 64
      %v1605 = vpop.permute.xlu0 %1604
      %1606 = vrot.lane.b32.xlu0 %v1595, 64
      %v1607 = vpop.permute.xlu0 %1606
      %vm1608 = vsmask.f32 1280
      %v1610 = vshrl.u32 %v1487, 16
      %v1612 = vrot.slane %v1610, 6
      %v1613 = vshll.u32 %v1487, 16
      %v1615 = vrot.slane %v1613, 7
      %v1616 = vor.u32 %v1612, %v1615
      %v1617 = vrot.slane %v1508, 6
      %v1618 = vrot.slane %v1504, 7
      %v1619 = vor.u32 %v1617, %v1618
      %v1620 = vsel %vm1608, %v1616, %v1619
      %v1621 = vrot.slane %v1516, 6
      %v1622 = vrot.slane %v1512, 7
      %v1623 = vor.u32 %v1621, %v1622
      %v1624 = vsel %vm1608, %v1619, %v1623
      %v1625 = vrot.slane %v1524, 6
      %v1626 = vrot.slane %v1520, 7
      %v1627 = vor.u32 %v1625, %v1626
      %v1628 = vsel %vm1608, %v1623, %v1627
      %v1629 = vrot.slane %v1532, 6
      %v1630 = vrot.slane %v1528, 7
      %v1631 = vor.u32 %v1629, %v1630
      %v1632 = vsel %vm1608, %v1627, %v1631
      %v1633 = vrot.slane %v1540, 6
      %v1634 = vrot.slane %v1536, 7
      %v1635 = vor.u32 %v1633, %v1634
      %v1636 = vsel %vm1608, %v1631, %v1635
      %v1638 = vshrl.u32 %v1489, 16
      %v1640 = vrot.slane %v1638, 6
      %v1641 = vshll.u32 %v1489, 16
      %v1643 = vrot.slane %v1641, 7
      %v1644 = vor.u32 %v1640, %v1643
      %v1645 = vsel %vm1608, %v1635, %v1644
      %vm1648 = vcmask 1040384
      %v1649 = vrot.slane %v1490, 7
      %v1650 = vrot.slane %v1480, 7
      %v1651 = vsel %vm1648, %v1649, %v1650
      %v1652 = vrot.slane %v1481, 7
      %v1653 = vsel %vm1648, %v1650, %v1652
      %v1654 = vrot.slane %v1482, 7
      %v1655 = vsel %vm1648, %v1652, %v1654
      %v1656 = vrot.slane %v1483, 7
      %v1657 = vsel %vm1648, %v1654, %v1656
      %v1658 = vrot.slane %v1484, 7
      %v1659 = vsel %vm1648, %v1656, %v1658
      %v1660 = vrot.slane %v1489, 7
      %v1661 = vsel %vm1648, %v1658, %v1660
      %1662 = vrot.lane.b32.xlu0 %v1651, 64
      %v1663 = vpop.permute.xlu0 %1662
      %1664 = vrot.lane.b32.xlu0 %v1653, 64
      %v1665 = vpop.permute.xlu0 %1664
      %1666 = vrot.lane.b32.xlu0 %v1655, 64
      %v1667 = vpop.permute.xlu0 %1666
      %1668 = vrot.lane.b32.xlu0 %v1657, 64
      %v1669 = vpop.permute.xlu0 %1668
      %1670 = vrot.lane.b32.xlu0 %v1659, 64
      %v1671 = vpop.permute.xlu0 %1670
      %1672 = vrot.lane.b32.xlu0 %v1661, 64
      %v1673 = vpop.permute.xlu0 %1672
      %vm1677 = vcmask 1043456
      %v1678 = vrot.slane %v1491, 4
      %v1679 = vrot.slane %v1481, 4
      %v1680 = vsel %vm1677, %v1678, %v1679
      %v1681 = vrot.slane %v1482, 4
      %v1682 = vsel %vm1677, %v1679, %v1681
      %v1683 = vrot.slane %v1483, 4
      %v1684 = vsel %vm1677, %v1681, %v1683
      %v1685 = vrot.slane %v1484, 4
      %v1686 = vsel %vm1677, %v1683, %v1685
      %v1687 = vrot.slane %v1492, 4
      %v1688 = vsel %vm1677, %v1685, %v1687
      %v1689 = vrot.slane %v1493, 4
      %v1690 = vsel %vm1677, %v1687, %v1689
      %vm1691 = vsmask.f32 3328
      %v1693 = vshrl.u32 %v1491, 16
      %v1695 = vrot.slane %v1693, 4
      %v1696 = vshll.u32 %v1491, 16
      %v1698 = vrot.slane %v1696, 5
      %v1699 = vor.u32 %v1695, %v1698
      %v1700 = vrot.slane %v1516, 4
      %v1701 = vrot.slane %v1512, 5
      %v1702 = vor.u32 %v1700, %v1701
      %v1703 = vsel %vm1691, %v1699, %v1702
      %v1704 = vrot.slane %v1524, 4
      %v1705 = vrot.slane %v1520, 5
      %v1706 = vor.u32 %v1704, %v1705
      %v1707 = vsel %vm1691, %v1702, %v1706
      %v1708 = vrot.slane %v1532, 4
      %v1709 = vrot.slane %v1528, 5
      %v1710 = vor.u32 %v1708, %v1709
      %v1711 = vsel %vm1691, %v1706, %v1710
      %v1712 = vrot.slane %v1540, 4
      %v1713 = vrot.slane %v1536, 5
      %v1714 = vor.u32 %v1712, %v1713
      %v1715 = vsel %vm1691, %v1710, %v1714
      %v1717 = vshrl.u32 %v1492, 16
      %v1719 = vrot.slane %v1717, 4
      %v1720 = vshll.u32 %v1492, 16
      %v1722 = vrot.slane %v1720, 5
      %v1723 = vor.u32 %v1719, %v1722
      %v1724 = vsel %vm1691, %v1714, %v1723
      %v1726 = vshrl.u32 %v1494, 16
      %v1728 = vrot.slane %v1726, 4
      %v1729 = vshll.u32 %v1494, 16
      %v1731 = vrot.slane %v1729, 5
      %v1732 = vor.u32 %v1728, %v1731
      %v1733 = vsel %vm1691, %v1723, %v1732
      %1734 = vrot.lane.b32.xlu0 %v1703, 64
      %v1735 = vpop.permute.xlu0 %1734
      %1736 = vrot.lane.b32.xlu0 %v1707, 64
      %v1737 = vpop.permute.xlu0 %1736
      %1738 = vrot.lane.b32.xlu0 %v1711, 64
      %v1739 = vpop.permute.xlu0 %1738
      %1740 = vrot.lane.b32.xlu0 %v1715, 64
      %v1741 = vpop.permute.xlu0 %1740
      %1742 = vrot.lane.b32.xlu0 %v1724, 64
      %v1743 = vpop.permute.xlu0 %1742
      %1744 = vrot.lane.b32.xlu0 %v1733, 64
      %v1745 = vpop.permute.xlu0 %1744
      %vm1748 = vcmask 1042432
      %v1749 = vrot.slane %v1495, 5
      %v1750 = vrot.slane %v1481, 5
      %v1751 = vsel %vm1748, %v1749, %v1750
      %v1752 = vrot.slane %v1482, 5
      %v1753 = vsel %vm1748, %v1750, %v1752
      %v1754 = vrot.slane %v1483, 5
      %v1755 = vsel %vm1748, %v1752, %v1754
      %v1756 = vrot.slane %v1484, 5
      %v1757 = vsel %vm1748, %v1754, %v1756
      %v1758 = vrot.slane %v1492, 5
      %v1759 = vsel %vm1748, %v1756, %v1758
      %v1760 = vrot.slane %v1494, 5
      %v1761 = vsel %vm1748, %v1758, %v1760
      %v1763 = vsel %vm662, %v1479, %v1549
      %v1766 = vsel %vm662, %v1480, %v1551
      %v1769 = vsel %vm662, %v1481, %v1553
      %v1772 = vsel %vm662, %v1482, %v1555
      %v1775 = vsel %vm662, %v1483, %v1557
      %v1778 = vsel %vm662, %v1484, %v1559
      %v1782 = vsel %vm662, %v1569, %v1597
      %v1786 = vsel %vm662, %v1571, %v1599
      %v1790 = vsel %vm662, %v1573, %v1601
      %v1794 = vsel %vm662, %v1575, %v1603
      %v1798 = vsel %vm662, %v1577, %v1605
      %v1802 = vsel %vm662, %v1579, %v1607
      %v1806 = vsel %vm662, %v1620, %v1663
      %v1810 = vsel %vm662, %v1624, %v1665
      %v1814 = vsel %vm662, %v1628, %v1667
      %v1818 = vsel %vm662, %v1632, %v1669
      %v1822 = vsel %vm662, %v1636, %v1671
      %v1826 = vsel %vm662, %v1645, %v1673
      %v1830 = vsel %vm662, %v1680, %v1735
      %v1834 = vsel %vm662, %v1682, %v1737
      %v1838 = vsel %vm662, %v1684, %v1739
      %v1842 = vsel %vm662, %v1686, %v1741
      %v1846 = vsel %vm662, %v1688, %v1743
      %v1850 = vsel %vm662, %v1690, %v1745
      %v1852 = vld [vmem:[%s3] sm:$0xf]
      %v1853 = vld [vmem:[%s3 + $0x4] sm:$0xf]
      %v1854 = vld [vmem:[%s3 + $0x8] sm:$0xf]
      %v1855 = vld [vmem:[%s3 + $0xc] sm:$0xf]
      %v1856 = vld [vmem:[%s3 + $0x10] sm:$0xf]
      %v1857 = vld [vmem:[%s3 + $0x14] sm:$0xf]
      %v1858 = vld [vmem:[%s3 + $0x18] sm:$0xf]
      %v1859 = vld [vmem:[%s3 + $0x1c] sm:$0xf]
      %v1860 = vld [vmem:[%s3 + $0x20] sm:$0xf]
      %v1861 = vld [vmem:[%s3 + $0x24] sm:$0xf]
      %v1862 = vld [vmem:[%s3 + $0x28] sm:$0xf]
      %v1863 = vld [vmem:[%s3 + $0x2c] sm:$0xf]
      %v1864 = vld [vmem:[%s3 + $0x30] sm:$0xf]
      %v1865 = vld [vmem:[%s3 + $0x34] sm:$0xf]
      %v1866 = vld [vmem:[%s3 + $0x38] sm:$0xf]
      %v1867 = vld [vmem:[%s3 + $0x3c] sm:$0xf]
      %v1868 = vld [vmem:[%s3 + $0x40] sm:$0xf]
      %v1869 = vld [vmem:[%s3 + $0x44] sm:$0xf]
      %v1870 = vld [vmem:[%s3 + $0x48] sm:$0xf]
      %v1871 = vld [vmem:[%s3 + $0x4c] sm:$0xf]
      %v1872 = vld [vmem:[%s3 + $0x50] sm:$0xf]
      %v1873 = vld [vmem:[%s3 + $0x54] sm:$0xf]
      %v1874 = vld [vmem:[%s3 + $0x58] sm:$0xf]
      %v1875 = vld [vmem:[%s3 + $0x5c] sm:$0xf]
      %v1876 = vld [vmem:[%s3 + $0x60] sm:$0xf]
      %v1877 = vld [vmem:[%s3 + $0x64] sm:$0xf]
      %v1878 = vld [vmem:[%s3 + $0x68] sm:$0xf]
      %v1879 = vld [vmem:[%s3 + $0x6c] sm:$0xf]
      %v1880 = vld [vmem:[%s3 + $0x70] sm:$0xf]
      %v1881 = vld [vmem:[%s3 + $0x74] sm:$0xf]
      %v1882 = vld [vmem:[%s3 + $0x78] sm:$0xf]
      %v1883 = vld [vmem:[%s3 + $0x7c] sm:$0xf]
      %v1884 = vld [vmem:[%s3 + $0x80] sm:$0xf]
      %v1885 = vld [vmem:[%s3 + $0x84] sm:$0xf]
      %v1886 = vld [vmem:[%s3 + $0x88] sm:$0xf]
      %v1887 = vld [vmem:[%s3 + $0x8c] sm:$0xf]
      %v1888 = vld [vmem:[%s3 + $0x90] sm:$0xf]
      %v1889 = vld [vmem:[%s3 + $0x94] sm:$0xf]
      %v1890 = vld [vmem:[%s3 + $0x98] sm:$0xf]
      %v1891 = vld [vmem:[%s3 + $0x9c] sm:$0xf]
      %v1892 = vld [vmem:[%s3 + $0xa0] sm:$0xf]
      %v1893 = vld [vmem:[%s3 + $0xa4] sm:$0xf]
      %v1894 = vld [vmem:[%s3 + $0xa8] sm:$0xf]
      %v1895 = vld [vmem:[%s3 + $0xac] sm:$0xf]
      %v1896 = vld [vmem:[%s3 + $0xb0] sm:$0xf]
      %v1897 = vld [vmem:[%s3 + $0xb4] sm:$0xf]
      %v1898 = vld [vmem:[%s3 + $0xb8] sm:$0xf]
      %v1899 = vld [vmem:[%s3 + $0xbc] sm:$0xf]
      %v1900 = vld [vmem:[%s3 + $0xc0] sm:$0xf]
      %v1901 = vld [vmem:[%s3 + $0xc4] sm:$0xf]
      %v1902 = vld [vmem:[%s3 + $0xc8] sm:$0xf]
      %v1903 = vld [vmem:[%s3 + $0xcc] sm:$0xf]
      %v1904 = vld [vmem:[%s3 + $0xd0] sm:$0xf]
      %v1905 = vld [vmem:[%s3 + $0xd4] sm:$0xf]
      %v1906 = vld [vmem:[%s3 + $0xd8] sm:$0xf]
      %v1907 = vld [vmem:[%s3 + $0xdc] sm:$0xf]
      %v1908 = vld [vmem:[%s3 + $0xe0] sm:$0xf]
      %v1909 = vld [vmem:[%s3 + $0xe4] sm:$0xf]
      %v1910 = vld [vmem:[%s3 + $0xe8] sm:$0xf]
      %v1911 = vld [vmem:[%s3 + $0xec] sm:$0xf]
      %v1912 = vld [vmem:[%s3 + $0xf0] sm:$0xf]
      %v1913 = vld [vmem:[%s3 + $0xf4] sm:$0xf]
      %v1914 = vld [vmem:[%s3 + $0xf8] sm:$0xf]
      %v1915 = vld [vmem:[%s3 + $0xfc] sm:$0xf]
      %v1916 = vld [vmem:[%s3 + $0x100] sm:$0xf]
      %v1917 = vld [vmem:[%s3 + $0x104] sm:$0xf]
      %v1918 = vld [vmem:[%s3 + $0x108] sm:$0xf]
      %v1919 = vld [vmem:[%s3 + $0x10c] sm:$0xf]
      %v1920 = vld [vmem:[%s3 + $0x110] sm:$0xf]
      %v1921 = vld [vmem:[%s3 + $0x114] sm:$0xf]
      %v1922 = vld [vmem:[%s3 + $0x118] sm:$0xf]
      %v1923 = vld [vmem:[%s3 + $0x11c] sm:$0xf]
      %v1924 = vld [vmem:[%s251 + $0xc] sm:$0xe]
      %v1925 = vld [vmem:[%s251 + $0x10] sm:$0xf]
      %v1926 = vld [vmem:[%s251 + $0x14] sm:$0xf]
      %v1927 = vld [vmem:[%s251 + $0x18] sm:$0xf]
      %v1928 = vld [vmem:[%s251 + $0x1c] sm:$0xf]
      %v1929 = vld [vmem:[%s251 + $0x20] sm:$0xf]
      %v1930 = vld [vmem:[%s251 + $0x24] sm:$0xf]
      %v1931 = vld [vmem:[%s251 + $0x28] sm:$0xf]
      %v1932 = vld [vmem:[%s251 + $0x2c] sm:$0xf]
      %v1933 = vld [vmem:[%s251 + $0x30] sm:$0xf]
      %v1934 = vld [vmem:[%s251 + $0x34] sm:$0xf]
      %v1935 = vld [vmem:[%s251 + $0x38] sm:$0xf]
      %v1936 = vld [vmem:[%s251 + $0x3c] sm:$0x1]
      %v1937 = vunpack.c.l.bf16 %v1924
      %v1938 = vunpack.c.l.bf16 %v1925
      %v1939 = vunpack.c.l.bf16 %v1926
      %v1940 = vunpack.c.l.bf16 %v1927
      %v1941 = vunpack.c.l.bf16 %v1928
      %v1942 = vunpack.c.l.bf16 %v1929
      %v1943 = vunpack.c.l.bf16 %v1930
      %v1944 = vunpack.c.l.bf16 %v1931
      %v1945 = vunpack.c.l.bf16 %v1932
      %v1946 = vunpack.c.l.bf16 %v1933
      %v1947 = vunpack.c.l.bf16 %v1934
      %v1948 = vunpack.c.l.bf16 %v1935
      %v1949 = vunpack.c.l.bf16 %v1936
      %v1950 = vld [vmem:[%s4] sm:$0x1]
      %v1952 = vlaneseq
      %v1953 = vshrl.u32 %v1952, 7
      %v1954 = vsub.s32 0, %v1953
      %v1955 = vrot.slane %v1950, %v1954
      %v2029 = vunpack.c.l.b16 %v1852
      %v2030 = vunpack.c.l.b16 %v1853
      %v2031 = vunpack.c.l.b16 %v1854
      %v2032 = vunpack.c.l.b16 %v1855
      %v2033 = vunpack.c.l.b16 %v1856
      %v2034 = vunpack.c.l.b16 %v1857
      %v2035 = vunpack.c.l.b16 %v1858
      %v2036 = vunpack.c.l.b16 %v1859
      %v2037 = vunpack.c.l.b16 %v1860
      %v2038 = vunpack.c.l.b16 %v1861
      %v2039 = vunpack.c.l.b16 %v1862
      %v2040 = vunpack.c.l.b16 %v1863
      %v2041 = vunpack.c.l.b16 %v1864
      %v2042 = vunpack.c.l.b16 %v1865
      %v2043 = vunpack.c.l.b16 %v1866
      %v2044 = vunpack.c.l.b16 %v1867
      %v2045 = vunpack.c.l.b16 %v1868
      %v2046 = vunpack.c.l.b16 %v1869
      %v2047 = vunpack.c.l.b16 %v1870
      %v2048 = vunpack.c.l.b16 %v1871
      %v2049 = vunpack.c.l.b16 %v1872
      %v2050 = vunpack.c.l.b16 %v1873
      %v2051 = vunpack.c.l.b16 %v1874
      %v2052 = vunpack.c.l.b16 %v1875
      %v2053 = vunpack.c.l.b16 %v1876
      %v2054 = vunpack.c.l.b16 %v1877
      %v2055 = vunpack.c.l.b16 %v1878
      %v2056 = vunpack.c.l.b16 %v1879
      %v2057 = vunpack.c.l.b16 %v1880
      %v2058 = vunpack.c.l.b16 %v1881
      %v2059 = vunpack.c.l.b16 %v1882
      %v2060 = vunpack.c.l.b16 %v1883
      %v2061 = vunpack.c.l.b16 %v1884
      %v2062 = vunpack.c.l.b16 %v1885
      %v2063 = vunpack.c.l.b16 %v1886
      %v2064 = vunpack.c.l.b16 %v1887
      %v2065 = vunpack.c.l.b16 %v1888
      %v2066 = vunpack.c.l.b16 %v1889
      %v2067 = vunpack.c.l.b16 %v1890
      %v2068 = vunpack.c.l.b16 %v1891
      %v2069 = vunpack.c.l.b16 %v1892
      %v2070 = vunpack.c.l.b16 %v1893
      %v2071 = vunpack.c.l.b16 %v1894
      %v2072 = vunpack.c.l.b16 %v1895
      %v2073 = vunpack.c.l.b16 %v1896
      %v2074 = vunpack.c.l.b16 %v1897
      %v2075 = vunpack.c.l.b16 %v1898
      %v2076 = vunpack.c.l.b16 %v1899
      %v2077 = vunpack.c.l.b16 %v1900
      %v2078 = vunpack.c.l.b16 %v1901
      %v2079 = vunpack.c.l.b16 %v1902
      %v2080 = vunpack.c.l.b16 %v1903
      %v2081 = vunpack.c.l.b16 %v1904
      %v2082 = vunpack.c.l.b16 %v1905
      %v2083 = vunpack.c.l.b16 %v1906
      %v2084 = vunpack.c.l.b16 %v1907
      %v2085 = vunpack.c.l.b16 %v1908
      %v2086 = vunpack.c.l.b16 %v1909
      %v2087 = vunpack.c.l.b16 %v1910
      %v2088 = vunpack.c.l.b16 %v1911
      %v2089 = vunpack.c.l.b16 %v1912
      %v2090 = vunpack.c.l.b16 %v1913
      %v2091 = vunpack.c.l.b16 %v1914
      %v2092 = vunpack.c.l.b16 %v1915
      %v2093 = vunpack.c.l.b16 %v1916
      %v2094 = vunpack.c.l.b16 %v1917
      %v2095 = vunpack.c.l.b16 %v1918
      %v2096 = vunpack.c.l.b16 %v1919
      %v2097 = vunpack.c.l.b16 %v1920
      %v2098 = vunpack.c.l.b16 %v1921
      %v2099 = vunpack.c.l.b16 %v1922
      %v2100 = vunpack.c.l.b16 %v1923
      %v2101 = vpack.c.b16 %v2030, %v2029
      %v2102 = vpack.c.b16 %v2032, %v2031
      %v2103 = vpack.c.b16 %v2034, %v2033
      %v2104 = vpack.c.b16 %v2036, %v2035
      %v2105 = vpack.c.b16 %v2038, %v2037
      %v2106 = vpack.c.b16 %v2040, %v2039
      %v2107 = vpack.c.b16 %v2042, %v2041
      %v2108 = vpack.c.b16 %v2044, %v2043
      %v2109 = vpack.c.b16 %v2046, %v2045
      %v2110 = vpack.c.b16 %v2048, %v2047
      %v2111 = vpack.c.b16 %v2050, %v2049
      %v2112 = vpack.c.b16 %v2052, %v2051
      %v2113 = vpack.c.b16 %v2054, %v2053
      %v2114 = vpack.c.b16 %v2056, %v2055
      %v2115 = vpack.c.b16 %v2058, %v2057
      %v2116 = vpack.c.b16 %v2060, %v2059
      %v2117 = vpack.c.b16 %v2062, %v2061
      %v2118 = vpack.c.b16 %v2064, %v2063
      %v2119 = vpack.c.b16 %v2066, %v2065
      %v2120 = vpack.c.b16 %v2068, %v2067
      %v2121 = vpack.c.b16 %v2070, %v2069
      %v2122 = vpack.c.b16 %v2072, %v2071
      %v2123 = vpack.c.b16 %v2074, %v2073
      %v2124 = vpack.c.b16 %v2076, %v2075
      %v2125 = vpack.c.b16 %v2078, %v2077
      %v2126 = vpack.c.b16 %v2080, %v2079
      %v2127 = vpack.c.b16 %v2082, %v2081
      %v2128 = vpack.c.b16 %v2084, %v2083
      %v2129 = vpack.c.b16 %v2086, %v2085
      %v2130 = vpack.c.b16 %v2088, %v2087
      %v2131 = vpack.c.b16 %v2090, %v2089
      %v2132 = vpack.c.b16 %v2092, %v2091
      %v2133 = vpack.c.b16 %v2094, %v2093
      %v2134 = vpack.c.b16 %v2096, %v2095
      %v2135 = vpack.c.b16 %v2098, %v2097
      %v2136 = vpack.c.b16 %v2100, %v2099
      %v2174 = vsel %vm662, %v1751, 0
      %v2177 = vsel %vm662, %v1753, 0
      %v2180 = vsel %vm662, %v1755, 0
      %v2183 = vsel %vm662, %v1757, 0
      %v2186 = vsel %vm662, %v1759, 0
      %v2189 = vsel %vm662, %v1761, 0
      %2191 = vmatprep.subr.bf16.mxu0 0
      %2192 = vmatpush1.bf16.msra.mxu0 %v2101
      %2193 = vmatprep.subr.bf16.mxu0 0
      %2194 = vmatpush1.bf16.msra.mxu0 %v2102
      %2195 = vmatprep.subr.bf16.mxu0 0
      %2196 = vmatpush1.bf16.msra.mxu0 %v2103
      %2197 = vmatprep.subr.bf16.mxu0 0
      %2198 = vmatpush1.bf16.msra.mxu0 %v2104
      %2199 = vmatprep.subr.bf16.mxu0 0
      %2200 = vmatpush1.bf16.msra.mxu0 %v2105
      %2201 = vmatprep.subr.bf16.mxu0 0
      %2202 = vmatpush1.bf16.msra.mxu0 %v2106
      %2203 = vmatprep.subr.bf16.mxu0 0
      %2204 = vmatpush1.bf16.msra.mxu0 %v2107
      %2205 = vmatprep.subr.bf16.mxu0 0
      %2206 = vmatpush1.bf16.msra.mxu0 %v2108
      %2207 = vmatprep.subr.bf16.mxu0 0
      %2208 = vmatpush1.bf16.msra.mxu0 %v2109
      %2209 = vmatprep.subr.bf16.mxu0 0
      %2210 = vmatpush1.bf16.msra.mxu0 %v2110
      %2211 = vmatprep.subr.bf16.mxu0 0
      %2212 = vmatpush1.bf16.msra.mxu0 %v2111
      %2213 = vmatprep.subr.bf16.mxu0 0
      %2214 = vmatpush1.bf16.msra.mxu0 %v2112
      %2215 = vmatprep.subr.bf16.mxu0 0
      %2216 = vmatpush1.bf16.msra.mxu0 %v2113
      %2217 = vmatprep.subr.bf16.mxu0 0
      %2218 = vmatpush1.bf16.msra.mxu0 %v2114
      %2219 = vmatprep.subr.bf16.mxu0 0
      %2220 = vmatpush1.bf16.msra.mxu0 %v2115
      %2221 = vmatprep.subr.bf16.mxu0 0
      %2222 = vmatpush1.bf16.msra.mxu0 %v2116
      %2223 = vmatprep.mubr.bf16.mxu0 %v1782
      %2224 = vmatmul.mubr.bf16.gmra.mrb[0].mxu0 %v1763
      %v2225 = vpop.f32.mrb[0].mxu0
      %v2226 = vadd.f32 %v1955, %v2225
      %v2227 = vpop.f32.mrb[0].mxu0
      %v2228 = vpop.f32.mrb[0].mxu0
      %v2229 = vadd.f32 %v1955, %v2228
      %v2230 = vpop.f32.mrb[0].mxu0
      %2231 = vmatprep.mubr.bf16.mxu0 %v1786
      %2232 = vmatmul.mubr.bf16.gmra.mrb[0].mxu0 %v1766
      %v2233 = vpop.f32.mrb[0].mxu0
      %v2234 = vadd.f32 %v1955, %v2233
      %v2235 = vpop.f32.mrb[0].mxu0
      %v2236 = vpop.f32.mrb[0].mxu0
      %v2237 = vadd.f32 %v1955, %v2236
      %v2238 = vpop.f32.mrb[0].mxu0
      %2239 = vmatprep.mubr.bf16.mxu0 %v1790
      %2240 = vmatmul.mubr.bf16.gmra.mrb[0].mxu0 %v1769
      %v2241 = vpop.f32.mrb[0].mxu0
      %v2242 = vadd.f32 %v1955, %v2241
      %v2243 = vpop.f32.mrb[0].mxu0
      %v2244 = vpop.f32.mrb[0].mxu0
      %v2245 = vadd.f32 %v1955, %v2244
      %v2246 = vpop.f32.mrb[0].mxu0
      %2247 = vmatprep.mubr.bf16.mxu0 %v1794
      %2248 = vmatmul.mubr.bf16.gmra.mrb[0].mxu0 %v1772
      %v2249 = vpop.f32.mrb[0].mxu0
      %v2250 = vadd.f32 %v1955, %v2249
      %v2251 = vpop.f32.mrb[0].mxu0
      %v2252 = vpop.f32.mrb[0].mxu0
      %v2253 = vadd.f32 %v1955, %v2252
      %v2254 = vpop.f32.mrb[0].mxu0
      %2255 = vmatprep.mubr.bf16.mxu0 %v1798
      %2256 = vmatmul.mubr.bf16.gmra.mrb[0].mxu0 %v1775
      %v2257 = vpop.f32.mrb[0].mxu0
      %v2258 = vadd.f32 %v1955, %v2257
      %v2259 = vpop.f32.mrb[0].mxu0
      %v2260 = vpop.f32.mrb[0].mxu0
      %v2261 = vadd.f32 %v1955, %v2260
      %v2262 = vpop.f32.mrb[0].mxu0
      %2263 = vmatprep.mubr.bf16.mxu0 %v1802
      %2264 = vmatmul.mubr.bf16.gmra.mrb[0].mxu0 %v1778
      %v2265 = vpop.f32.mrb[0].mxu0
      %v2266 = vadd.f32 %v1955, %v2265
      %v2267 = vpop.f32.mrb[0].mxu0
      %v2268 = vpop.f32.mrb[0].mxu0
      %v2269 = vadd.f32 %v1955, %v2268
      %v2270 = vpop.f32.mrb[0].mxu0
      %2271 = vdwg.mxu0
      %2272 = vmatprep.subr.bf16.mxu0 0
      %2273 = vmatpush1.bf16.msra.mxu0 %v2117
      %2274 = vmatprep.subr.bf16.mxu0 0
      %2275 = vmatpush1.bf16.msra.mxu0 %v2118
      %2276 = vmatprep.subr.bf16.mxu0 0
      %2277 = vmatpush1.bf16.msra.mxu0 %v2119
      %2278 = vmatprep.subr.bf16.mxu0 0
      %2279 = vmatpush1.bf16.msra.mxu0 %v2120
      %2280 = vmatprep.subr.bf16.mxu0 0
      %2281 = vmatpush1.bf16.msra.mxu0 %v2121
      %2282 = vmatprep.subr.bf16.mxu0 0
      %2283 = vmatpush1.bf16.msra.mxu0 %v2122
      %2284 = vmatprep.subr.bf16.mxu0 0
      %2285 = vmatpush1.bf16.msra.mxu0 %v2123
      %2286 = vmatprep.subr.bf16.mxu0 0
      %2287 = vmatpush1.bf16.msra.mxu0 %v2124
      %2288 = vmatprep.subr.bf16.mxu0 0
      %2289 = vmatpush1.bf16.msra.mxu0 %v2125
      %2290 = vmatprep.subr.bf16.mxu0 0
      %2291 = vmatpush1.bf16.msra.mxu0 %v2126
      %2292 = vmatprep.subr.bf16.mxu0 0
      %2293 = vmatpush1.bf16.msra.mxu0 %v2127
      %2294 = vmatprep.subr.bf16.mxu0 0
      %2295 = vmatpush1.bf16.msra.mxu0 %v2128
      %2296 = vmatprep.subr.bf16.mxu0 0
      %2297 = vmatpush1.bf16.msra.mxu0 %v2129
      %2298 = vmatprep.subr.bf16.mxu0 0
      %2299 = vmatpush1.bf16.msra.mxu0 %v2130
      %2300 = vmatprep.subr.bf16.mxu0 0
      %2301 = vmatpush1.bf16.msra.mxu0 %v2131
      %2302 = vmatprep.subr.bf16.mxu0 0
      %2303 = vmatpush1.bf16.msra.mxu0 %v2132
      %2304 = vmatprep.mubr.bf16.mxu0 %v1830
      %2305 = vmatmul.mubr.bf16.gmra.mrb[0].mxu0 %v1806
      %v2306 = vpop.f32.mrb[0].mxu0
      %v2307 = vadd.f32 %v2226, %v2306
      %v2308 = vpop.f32.mrb[0].mxu0
      %v2309 = vpop.f32.mrb[0].mxu0
      %v2310 = vadd.f32 %v2229, %v2309
      %v2311 = vpop.f32.mrb[0].mxu0
      %2312 = vmatprep.mubr.bf16.mxu0 %v1834
      %2313 = vmatmul.mubr.bf16.gmra.mrb[0].mxu0 %v1810
      %v2314 = vpop.f32.mrb[0].mxu0
      %v2315 = vadd.f32 %v2234, %v2314
      %v2316 = vpop.f32.mrb[0].mxu0
      %v2317 = vpop.f32.mrb[0].mxu0
      %v2318 = vadd.f32 %v2237, %v2317
      %v2319 = vpop.f32.mrb[0].mxu0
      %2320 = vmatprep.mubr.bf16.mxu0 %v1838
      %2321 = vmatmul.mubr.bf16.gmra.mrb[0].mxu0 %v1814
      %v2322 = vpop.f32.mrb[0].mxu0
      %v2323 = vadd.f32 %v2242, %v2322
      %v2324 = vpop.f32.mrb[0].mxu0
      %v2325 = vpop.f32.mrb[0].mxu0
      %v2326 = vadd.f32 %v2245, %v2325
      %v2327 = vpop.f32.mrb[0].mxu0
      %2328 = vmatprep.mubr.bf16.mxu0 %v1842
      %2329 = vmatmul.mubr.bf16.gmra.mrb[0].mxu0 %v1818
      %v2330 = vpop.f32.mrb[0].mxu0
      %v2331 = vadd.f32 %v2250, %v2330
      %v2332 = vpop.f32.mrb[0].mxu0
      %v2333 = vpop.f32.mrb[0].mxu0
      %v2334 = vadd.f32 %v2253, %v2333
      %v2335 = vpop.f32.mrb[0].mxu0
      %2336 = vmatprep.mubr.bf16.mxu0 %v1846
      %2337 = vmatmul.mubr.bf16.gmra.mrb[0].mxu0 %v1822
      %v2338 = vpop.f32.mrb[0].mxu0
      %v2339 = vadd.f32 %v2258, %v2338
      %v2340 = vpop.f32.mrb[0].mxu0
      %v2341 = vpop.f32.mrb[0].mxu0
      %v2342 = vadd.f32 %v2261, %v2341
      %v2343 = vpop.f32.mrb[0].mxu0
      %2344 = vmatprep.mubr.bf16.mxu0 %v1850
      %2345 = vmatmul.mubr.bf16.gmra.mrb[0].mxu0 %v1826
      %v2346 = vpop.f32.mrb[0].mxu0
      %v2347 = vadd.f32 %v2266, %v2346
      %v2348 = vpop.f32.mrb[0].mxu0
      %v2349 = vpop.f32.mrb[0].mxu0
      %v2350 = vadd.f32 %v2269, %v2349
      %v2351 = vpop.f32.mrb[0].mxu0
      %2352 = vdwg.mxu0
      %2353 = vmatprep.subr.bf16.mxu0 0
      %2354 = vmatpush1.bf16.msra.mxu0 %v2133
      %2355 = vmatprep.subr.bf16.mxu0 0
      %2356 = vmatpush1.bf16.msra.mxu0 %v2134
      %2357 = vmatprep.subr.bf16.mxu0 0
      %2358 = vmatpush1.bf16.msra.mxu0 %v2135
      %2359 = vmatprep.subr.bf16.mxu0 0
      %2360 = vmatpush1.bf16.msra.mxu0 %v2136
      %2361 = vmatprep.subr.bf16.mxu0 0
      %2362 = vmatpush1.bf16.msra.mxu0 0
      %2363 = vmatprep.subr.bf16.mxu0 0
      %2364 = vmatpush1.bf16.msra.mxu0 0
      %2365 = vmatprep.subr.bf16.mxu0 0
      %2366 = vmatpush1.bf16.msra.mxu0 0
      %2367 = vmatprep.subr.bf16.mxu0 0
      %2368 = vmatpush1.bf16.msra.mxu0 0
      %2369 = vmatprep.subr.bf16.mxu0 0
      %2370 = vmatpush1.bf16.msra.mxu0 0
      %2371 = vmatprep.subr.bf16.mxu0 0
      %2372 = vmatpush1.bf16.msra.mxu0 0
      %2373 = vmatprep.subr.bf16.mxu0 0
      %2374 = vmatpush1.bf16.msra.mxu0 0
      %2375 = vmatprep.subr.bf16.mxu0 0
      %2376 = vmatpush1.bf16.msra.mxu0 0
      %2377 = vmatprep.subr.bf16.mxu0 0
      %2378 = vmatpush1.bf16.msra.mxu0 0
      %2379 = vmatprep.subr.bf16.mxu0 0
      %2380 = vmatpush1.bf16.msra.mxu0 0
      %2381 = vmatprep.subr.bf16.mxu0 0
      %2382 = vmatpush1.bf16.msra.mxu0 0
      %2383 = vmatprep.subr.bf16.mxu0 0
      %2384 = vmatpush1.bf16.msra.mxu0 0
      %2385 = vmatprep.mubr.bf16.mxu0 0
      %2386 = vmatmul.mubr.bf16.gmra.mrb[0].mxu0 %v2174
      %v2387 = vpop.f32.mrb[0].mxu0
      %v2388 = vadd.f32 %v2307, %v2387
      %v2389 = vpop.f32.mrb[0].mxu0
      %v2390 = vpop.f32.mrb[0].mxu0
      %v2391 = vadd.f32 %v2310, %v2390
      %v2392 = vpop.f32.mrb[0].mxu0
      %2393 = vmatprep.mubr.bf16.mxu0 0
      %2394 = vmatmul.mubr.bf16.gmra.mrb[0].mxu0 %v2177
      %v2395 = vpop.f32.mrb[0].mxu0
      %v2396 = vadd.f32 %v2315, %v2395
      %v2397 = vpop.f32.mrb[0].mxu0
      %v2398 = vpop.f32.mrb[0].mxu0
      %v2399 = vadd.f32 %v2318, %v2398
      %v2400 = vpop.f32.mrb[0].mxu0
      %2401 = vmatprep.mubr.bf16.mxu0 0
      %2402 = vmatmul.mubr.bf16.gmra.mrb[0].mxu0 %v2180
      %v2403 = vpop.f32.mrb[0].mxu0
      %v2404 = vadd.f32 %v2323, %v2403
      %v2405 = vpop.f32.mrb[0].mxu0
      %v2406 = vpop.f32.mrb[0].mxu0
      %v2407 = vadd.f32 %v2326, %v2406
      %v2408 = vpop.f32.mrb[0].mxu0
      %2409 = vmatprep.mubr.bf16.mxu0 0
      %2410 = vmatmul.mubr.bf16.gmra.mrb[0].mxu0 %v2183
      %v2411 = vpop.f32.mrb[0].mxu0
      %v2412 = vadd.f32 %v2331, %v2411
      %v2413 = vpop.f32.mrb[0].mxu0
      %v2414 = vpop.f32.mrb[0].mxu0
      %v2415 = vadd.f32 %v2334, %v2414
      %v2416 = vpop.f32.mrb[0].mxu0
      %2417 = vmatprep.mubr.bf16.mxu0 0
      %2418 = vmatmul.mubr.bf16.gmra.mrb[0].mxu0 %v2186
      %v2419 = vpop.f32.mrb[0].mxu0
      %v2420 = vadd.f32 %v2339, %v2419
      %v2421 = vpop.f32.mrb[0].mxu0
      %v2422 = vpop.f32.mrb[0].mxu0
      %v2423 = vadd.f32 %v2342, %v2422
      %v2424 = vpop.f32.mrb[0].mxu0
      %2425 = vmatprep.mubr.bf16.mxu0 0
      %2426 = vmatmul.mubr.bf16.gmra.mrb[0].mxu0 %v2189
      %v2427 = vpop.f32.mrb[0].mxu0
      %v2428 = vadd.f32 %v2347, %v2427
      %v2429 = vpop.f32.mrb[0].mxu0
      %v2430 = vpop.f32.mrb[0].mxu0
      %v2431 = vadd.f32 %v2350, %v2430
      %v2432 = vpop.f32.mrb[0].mxu0
      %2433 = vdwg.mxu0
      %vm2447 = vcmask 1045504
      %v2448 = vrot.slane %v1937, 2
      %v2449 = vrot.slane %v1938, 2
      %v2450 = vsel %vm2447, %v2448, %v2449
      %v2451 = vrot.slane %v1939, 2
      %v2452 = vsel %vm2447, %v2449, %v2451
      %v2453 = vrot.slane %v1940, 2
      %v2454 = vsel %vm2447, %v2451, %v2453
      %v2455 = vrot.slane %v1941, 2
      %v2456 = vsel %vm2447, %v2453, %v2455
      %v2457 = vrot.slane %v1942, 2
      %v2458 = vsel %vm2447, %v2455, %v2457
      %v2459 = vrot.slane %v1943, 2
      %v2460 = vsel %vm2447, %v2457, %v2459
      %v2461 = vrot.slane %v1944, 2
      %v2462 = vsel %vm2447, %v2459, %v2461
      %v2463 = vrot.slane %v1945, 2
      %v2464 = vsel %vm2447, %v2461, %v2463
      %v2465 = vrot.slane %v1946, 2
      %v2466 = vsel %vm2447, %v2463, %v2465
      %v2467 = vrot.slane %v1947, 2
      %v2468 = vsel %vm2447, %v2465, %v2467
      %v2469 = vrot.slane %v1948, 2
      %v2470 = vsel %vm2447, %v2467, %v2469
      %v2471 = vrot.slane %v1949, 2
      %v2472 = vsel %vm2447, %v2469, %v2471
      %v2485 = vadd.f32 %v2388, %v2450
      %v2486 = vadd.f32 %v2391, %v2452
      %v2487 = vadd.f32 %v2396, %v2454
      %v2488 = vadd.f32 %v2399, %v2456
      %v2489 = vadd.f32 %v2404, %v2458
      %v2490 = vadd.f32 %v2407, %v2460
      %v2491 = vadd.f32 %v2412, %v2462
      %v2492 = vadd.f32 %v2415, %v2464
      %v2493 = vadd.f32 %v2420, %v2466
      %v2494 = vadd.f32 %v2423, %v2468
      %v2495 = vadd.f32 %v2428, %v2470
      %v2496 = vadd.f32 %v2431, %v2472
      %v2497 = vmax.f32 %v2485, 0.0
      %v2498 = vmax.f32 %v2486, 0.0
      %v2499 = vmax.f32 %v2487, 0.0
      %v2500 = vmax.f32 %v2488, 0.0
      %v2501 = vmax.f32 %v2489, 0.0
      %v2502 = vmax.f32 %v2490, 0.0
      %v2503 = vmax.f32 %v2491, 0.0
      %v2504 = vmax.f32 %v2492, 0.0
      %v2505 = vmax.f32 %v2493, 0.0
      %v2506 = vmax.f32 %v2494, 0.0
      %v2507 = vmax.f32 %v2495, 0.0
      %v2508 = vmax.f32 %v2496, 0.0
      %v2509 = vpack.c.bf16 %v2498, %v2497
      %v2510 = vpack.c.bf16 %v2500, %v2499
      %v2511 = vpack.c.bf16 %v2502, %v2501
      %v2512 = vpack.c.bf16 %v2504, %v2503
      %v2513 = vpack.c.bf16 %v2506, %v2505
      %v2514 = vpack.c.bf16 %v2508, %v2507
      %v2521 = vunpack.c.l.b16 %v2509
      %v2522 = vunpack.c.h.b16 %v2509
      %v2523 = vunpack.c.l.b16 %v2510
      %v2524 = vunpack.c.h.b16 %v2510
      %v2525 = vunpack.c.l.b16 %v2511
      %v2526 = vunpack.c.h.b16 %v2511
      %v2527 = vunpack.c.l.b16 %v2512
      %v2528 = vunpack.c.h.b16 %v2512
      %v2529 = vunpack.c.l.b16 %v2513
      %v2530 = vunpack.c.h.b16 %v2513
      %v2531 = vunpack.c.l.b16 %v2514
      %v2532 = vunpack.c.h.b16 %v2514
      %v2533 = vpack.c.b16 %v2521, %v2521
      %v2534 = vpack.c.b16 %v2522, %v2522
      %v2535 = vpack.c.b16 %v2523, %v2523
      %v2536 = vpack.c.b16 %v2524, %v2524
      %v2537 = vpack.c.b16 %v2525, %v2525
      %v2538 = vpack.c.b16 %v2526, %v2526
      %v2539 = vpack.c.b16 %v2527, %v2527
      %v2540 = vpack.c.b16 %v2528, %v2528
      %v2541 = vpack.c.b16 %v2529, %v2529
      %v2542 = vpack.c.b16 %v2530, %v2530
      %v2543 = vpack.c.b16 %v2531, %v2531
      %v2544 = vpack.c.b16 %v2532, %v2532
      %2557 = vst.msk [vmem:[%s260] sm:$0xf] %vm1414, %v2533
      %2558 = vst.msk [vmem:[%s260 + $0x4] sm:$0xf] %vm1414, %v2534
      %2559 = vst.msk [vmem:[%s260 + $0x8] sm:$0xf] %vm1414, %v2535
      %2560 = vst.msk [vmem:[%s260 + $0xc] sm:$0xf] %vm1414, %v2536
      %2561 = vst.msk [vmem:[%s260 + $0x10] sm:$0xf] %vm1414, %v2537
      %2562 = vst.msk [vmem:[%s260 + $0x14] sm:$0xf] %vm1414, %v2538
      %2563 = vst.msk [vmem:[%s260 + $0x18] sm:$0xf] %vm1414, %v2539
      %2564 = vst.msk [vmem:[%s260 + $0x1c] sm:$0xf] %vm1414, %v2540
      %2565 = vst.msk [vmem:[%s260 + $0x20] sm:$0xf] %vm1414, %v2541
      %2566 = vst.msk [vmem:[%s260 + $0x24] sm:$0xf] %vm1414, %v2542
      %2567 = vst.msk [vmem:[%s260 + $0x28] sm:$0xf] %vm1414, %v2543
      %2568 = vst.msk [vmem:[%s260 + $0x2c] sm:$0xf] %vm1414, %v2544
      %p2569 = scmp.lt.s32.totalorder %s20, 1
      %s2570 = scalar_select %p2569, %s20, 1
      %p2571 = scmp.lt.s32.totalorder %s21, 0
      %s2572 = scalar_select %p2571, %s21, 0
      %s2573 = smul.addr %s2572, 12
      %s2574 = smul.addr %s2570, 12
      %s2575 = sadd.s32 %s2573, %s2574
      %s2576 = smul.addr %s2575, 4
      %s2577 = scalar_lea.vmem %s5, %s2576
      // Predicated region
      $region45: #{image_encoder_forward.3} parent=39 // pred_check
        %p2578 = pneg %p160
      $region46: #{image_encoder_forward.3} parent=39 // pred_check_branch
        %2580 = sbr.rel (%p2578) target = $region48
      $region47: #{image_encoder_forward.3} parent=39 // pred_region
        _
      $region48: #{image_encoder_forward.3} parent=39 // pred_fallthru
        _
    $region40: #{image_encoder_forward.3} parent=5 // pred_fallthru
      _
    %p2581 = scmp.le.s32.totalorder 2, %s11
    // Predicated region
    $region49: #{image_encoder_forward.3} parent=5 // pred_check
      %p2582 = pneg %p2581
    $region50: #{image_encoder_forward.3} parent=5 // pred_check_branch
      %2584 = sbr.rel (%p2582) target = $region52
    $region51: #{image_encoder_forward.3} parent=5 // pred_region
      %s2585 = ssub.s32 %s11, 2
      // Predicated region
      $region53: #{image_encoder_forward.3} parent=51 // pred_check
        %p2586 = pneg %p166
      $region54: #{image_encoder_forward.3} parent=51 // pred_check_branch
        %2588 = sbr.rel (%p2586) target = $region56
      $region55: #{image_encoder_forward.3} parent=51 // pred_region
        %p2589 = scmp.lt.s32.totalorder %s22, 1
        %s2590 = scalar_select %p2589, %s22, 1
        %p2591 = scmp.lt.s32.totalorder %s23, 0
        %s2592 = scalar_select %p2591, %s23, 0
        %s2593 = smul.addr %s2592, 12
        %s2594 = smul.addr %s2590, 12
        %s2595 = sadd.s32 %s2593, %s2594
        %s2596 = smul.addr %s2595, 4
        %s2597 = scalar_lea.vmem %s5, %s2596
      $region56: #{image_encoder_forward.3} parent=51 // pred_fallthru
        _
    $region52: #{image_encoder_forward.3} parent=5 // pred_fallthru
      _
  $region6: #{image_encoder_forward.3} parent=0 // loop_footer
    %s15 = sadd.s32 1, %s11
  $region7: #{image_encoder_forward.3} parent=0 // loop_footer_branch
    %10 = sbr.rel target = $region3
  $region8: #{image_encoder_forward.3} parent=0 // loop_exit
    _

</llo_original>
